<compile_context>
chip_gen: v6e
topology: v6e:2x2x1
jax: 0.10.0
libtpu: 0.0.40
codegen_flags: <defaults>
</compile_context>

<pallas_src>
import functools

import jax
import jax.numpy as jnp
from jax.experimental import pallas as pl
from jax.experimental.pallas import tpu as pltpu

N_EMBD = 384
NUM_HEADS = 6
HEAD_SIZE = N_EMBD // NUM_HEADS   # 64
NEG_BIG = -1e30                   # finite mask value (bf16 shares f32 exponent range)


def _mha_fused_kernel(x_ref, wqkv_ref, wproj_ref, b_ref, o_ref, ctx_ref, *,
                      num_heads, head_size, approx_recip):
    # x_ref:     (1, T, C)        current batch element, already in compute dtype
    # wqkv_ref:  (C, 3*NH*H)      fused, pre-transposed QKV weights (Q cols pre-scaled)
    # wproj_ref: (NH*H, C_out)    pre-transposed projection weights
    # b_ref:     (1, C_out)       projection bias (f32)
    # o_ref:     (1, T, C_out)    output
    # ctx_ref:   (T, NH*H)        VMEM scratch: concatenated per-head contexts
    T = x_ref.shape[1]
    cdt = wqkv_ref.dtype                      # MXU input dtype (bf16 fast path)
    nhh = num_heads * head_size

    # Fused QKV projection: one lane-dense (T, C) @ (C, 3*NH*H), f32 accumulation.
    qkv = jnp.dot(x_ref[0], wqkv_ref[...],
                  preferred_element_type=jnp.float32)                  # (T, 3*NH*H)

    # Causal additive mask, hoisted out of the head loop (no per-iter broadcast).
    row = jax.lax.broadcasted_iota(jnp.int32, (T, T), 0)
    col = jax.lax.broadcasted_iota(jnp.int32, (T, T), 1)
    mask_bias = jnp.where(row >= col, 0.0, NEG_BIG).astype(jnp.float32)  # (T, T)

    for h in range(num_heads):                # static unroll, NH = 6
        lo = h * head_size
        # 1/sqrt(H) already folded into the Q weight columns in the wrapper.
        q = qkv[:, lo:lo + head_size].astype(cdt)                        # (T, H)
        k = qkv[:, nhh + lo:nhh + lo + head_size].astype(cdt)            # (T, H)
        v = qkv[:, 2 * nhh + lo:2 * nhh + lo + head_size].astype(cdt)    # (T, H)

        # q @ k^T without materializing a transpose: contract last dims.
        s = jax.lax.dot_general(q, k, (((1,), (1,)), ((), ())),
                                preferred_element_type=jnp.float32)      # (T, T)
        s = s + mask_bias

        # Numerically stable softmax with deferred normalization.
        # exp runs in the compute dtype (bf16 EUP on v6e/v7x); sum stays f32.
        m = jnp.max(s, axis=-1, keepdims=True)                           # (T, 1) f32
        p = jnp.exp((s - m).astype(cdt))                                 # (T, T) cdt
        denom = jnp.sum(p.astype(jnp.float32), axis=-1, keepdims=True)   # (T, 1) f32

        o = jnp.dot(p, v, preferred_element_type=jnp.float32)            # (T, H) f32
        o = o * pl.reciprocal(denom, approx=approx_recip)

        # Stash this head's context; the projection is fused after the loop.
        ctx_ref[:, lo:lo + head_size] = o.astype(cdt)

    # Single K = NH*H = 384 output projection (full MXU depth) + bias.
    out = jnp.dot(ctx_ref[...], wproj_ref[...],
                  preferred_element_type=jnp.float32) + b_ref[...]
    o_ref[0] = out.astype(o_ref.dtype)


def multi_head_attention(x, wq, wk, wv, w_proj, b_proj, *,
                         compute_dtype=jnp.bfloat16):
    """x: (B, T, C); wq/wk/wv: (NH, H, C); w_proj: (C, C); b_proj: (C,).

    compute_dtype: MXU input dtype. bf16 is the fast path on v5e/v6e/v7x
    (accumulation is always f32); f32 is kept for tight validation only.
    """
    B, T, C = x.shape
    NH, H, _ = wq.shape
    NHH = NH * H
    scale = jnp.float32(H) ** jnp.float32(-0.5)   # 1/8 for H=64: exact power of 2

    # One-time weight layout plumbing (would live at model-load time):
    #  - fold 1/sqrt(H) into the Q weights,
    #  - fuse all heads' q/k/v weights into one matrix,
    #  - pre-transpose to (in, out) so the kernel never transposes on the MXU path.
    w_qkv = jnp.concatenate(
        [(wq * scale).reshape(NHH, C), wk.reshape(NHH, C), wv.reshape(NHH, C)],
        axis=0).T.astype(compute_dtype)                  # (C, 3*NH*H)
    w_proj_t = w_proj.T.astype(compute_dtype)            # (NH*H, C_out)
    bias = b_proj.reshape(1, C).astype(jnp.float32)
    x_c = x.astype(compute_dtype)                        # halve per-step input DMA

    kernel = functools.partial(
        _mha_fused_kernel, num_heads=NH, head_size=H,
        approx_recip=(compute_dtype != jnp.float32))

    out = pl.pallas_call(
        kernel,
        out_shape=jax.ShapeDtypeStruct((B, T, C), x.dtype),
        grid=(B,),
        in_specs=[
            pl.BlockSpec((1, T, C), lambda b: (b, 0, 0)),
            # Constant block index across the grid -> weights fetched once,
            # stay resident in VMEM; only x / out stream per batch element.
            pl.BlockSpec((C, 3 * NHH), lambda b: (0, 0)),
            pl.BlockSpec((NHH, C), lambda b: (0, 0)),
            pl.BlockSpec((1, C), lambda b: (0, 0)),
        ],
        out_specs=pl.BlockSpec((1, T, C), lambda b: (b, 0, 0)),
        scratch_shapes=[pltpu.VMEM((T, NHH), compute_dtype)],
        compiler_params=pltpu.CompilerParams(
            dimension_semantics=("parallel",),   # shard batch over v7x's 2 TCs
        ),
    )(x_c, w_qkv, w_proj_t, bias)
    return out


def _reference(x, wq, wk, wv, w_proj, b_proj):
    """Pure-JAX reference matching the PyTorch forward (dropout = identity)."""
    B, T, C = x.shape
    NH, H, _ = wq.shape
    outs = []
    for h in range(NH):
        q = x @ wq[h].T
        k = x @ wk[h].T
        v = x @ wv[h].T
        wei = (q @ jnp.swapaxes(k, -2, -1)) * (H ** -0.5)
        mask = jnp.tril(jnp.ones((T, T), dtype=bool))
        wei = jnp.where(mask, wei, float("-inf"))
        wei = jax.nn.softmax(wei, axis=-1)
        outs.append(wei @ v)
    cat = jnp.concatenate(outs, axis=-1)
    return cat @ w_proj.T + b_proj


def _make_inputs(key, B, T, C, NH, H):
    kx, kq, kk, kv, kp, kb = jax.random.split(key, 6)
    scale_in = 1.0 / (C ** 0.5)
    x = jax.random.normal(kx, (B, T, C), dtype=jnp.float32)
    wq = jax.random.normal(kq, (NH, H, C), dtype=jnp.float32) * scale_in
    wk = jax.random.normal(kk, (NH, H, C), dtype=jnp.float32) * scale_in
    wv = jax.random.normal(kv, (NH, H, C), dtype=jnp.float32) * scale_in
    w_proj = jax.random.normal(kp, (C, C), dtype=jnp.float32) * scale_in
    b_proj = jax.random.normal(kb, (C,), dtype=jnp.float32) * 0.01
    return x, wq, wk, wv, w_proj, b_proj


if __name__ == "__main__":
    C, NH, H = N_EMBD, NUM_HEADS, HEAD_SIZE
    key = jax.random.PRNGKey(0)
    k_small, k_big = jax.random.split(key, 2)

    # --- small-shape check (B=2, T=8) ---
    B, T = 2, 8
    inputs = _make_inputs(k_small, B, T, C, NH, H)
    ref = _reference(*inputs)

    # f32 MXU path: tight check against the pure-JAX reference.
    out_f32 = jax.block_until_ready(
        multi_head_attention(*inputs, compute_dtype=jnp.float32))
    assert out_f32.shape == (B, T, C), out_f32.shape
    err = float(jnp.max(jnp.abs(out_f32 - ref)))
    assert jnp.allclose(out_f32, ref, atol=1e-4, rtol=1e-4), err

    # bf16 MXU fast path: f32 accumulation, bf16-level tolerance.
    out_bf16 = jax.block_until_ready(
        multi_head_attention(*inputs, compute_dtype=jnp.bfloat16))
    err = float(jnp.max(jnp.abs(out_bf16 - ref)))
    assert jnp.allclose(out_bf16, ref, atol=1e-1, rtol=1e-1), err

    # --- full block_size check (B=2, T=256): the shape that stresses
    # (8,128)/(16,128) tiling, VMEM residency, and bf16 tolerance. ---
    B, T = 2, 256
    inputs_big = _make_inputs(k_big, B, T, C, NH, H)
    ref_big = _reference(*inputs_big)

    out_f32_big = jax.block_until_ready(
        multi_head_attention(*inputs_big, compute_dtype=jnp.float32))
    err = float(jnp.max(jnp.abs(out_f32_big - ref_big)))
    assert jnp.allclose(out_f32_big, ref_big, atol=1e-3, rtol=1e-3), err

    out_bf16_big = jax.block_until_ready(
        multi_head_attention(*inputs_big, compute_dtype=jnp.bfloat16))
    err = float(jnp.max(jnp.abs(out_bf16_big - ref_big)))
    assert jnp.allclose(out_bf16_big, ref_big, atol=1e-1, rtol=1e-1), err

    print("KERNEL_OK")
</pallas_src>

<mosaic_0001>
module attributes {stable_mosaic.version = 11 : i64} {
  func.func @_mha_fused_kernel(%arg0: i32, %arg1: memref<1x8x384xf32, #tpu.memory_space<vmem>>, %arg2: memref<384x1152xf32, #tpu.memory_space<vmem>>, %arg3: memref<384x384xf32, #tpu.memory_space<vmem>>, %arg4: memref<1x384xf32, #tpu.memory_space<vmem>>, %arg5: memref<1x8x384xf32, #tpu.memory_space<vmem>>, %arg6: memref<8x384xf32, #tpu.memory_space<vmem>>) attributes {dimension_semantics = [#tpu.dimension_semantics<parallel>], iteration_bounds = array<i64: 2>, scalar_prefetch = 0 : i64, scratch_operands = 1 : i64, tpu.core_type = #tpu.core_type<tc>, window_params = [{transform_indices = @transform_0, window_bounds = array<i64: 1, 8, 384>}, {pipeline_mode = #tpu.pipeline_mode<synchronous>, transform_indices = @transform_1, window_bounds = array<i64: 384, 1152>}, {pipeline_mode = #tpu.pipeline_mode<synchronous>, transform_indices = @transform_2, window_bounds = array<i64: 384, 384>}, {pipeline_mode = #tpu.pipeline_mode<synchronous>, transform_indices = @transform_3, window_bounds = array<i64: 1, 384>}, {transform_indices = @transform_4, window_bounds = array<i64: 1, 8, 384>}]} {
    %c0 = arith.constant 0 : index
    %c0_0 = arith.constant 0 : index
    %c0_1 = arith.constant 0 : index
    %0 = vector.load %arg1[%c0, %c0_0, %c0_1] : memref<1x8x384xf32, #tpu.memory_space<vmem>>, vector<1x8x384xf32>
    %1 = vector.shape_cast %0 : vector<1x8x384xf32> to vector<8x384xf32>
    %c0_2 = arith.constant 0 : index
    %c0_3 = arith.constant 0 : index
    %2 = vector.load %arg2[%c0_2, %c0_3] : memref<384x1152xf32, #tpu.memory_space<vmem>>, vector<384x1152xf32>
    %cst = arith.constant dense<0.000000e+00> : vector<8x1152xf32>
    %3 = tpu.matmul %1, %2, %cst {dimension_numbers = #tpu.dot_dimension_numbers<[1], [0], [0], [1], [0, 0, 1, 1], [], []>} : vector<8x384xf32>, vector<384x1152xf32>, vector<8x1152xf32> -> vector<8x1152xf32>
    %4 = tpu.iota {dimensions = array<i32: 0>} : vector<8x8xi32>
    %5 = tpu.iota {dimensions = array<i32: 1>} : vector<8x8xi32>
    %6 = arith.cmpi sge, %4, %5 : vector<8x8xi32>
    %cst_4 = arith.constant 0.000000e+00 : f32
    %cst_5 = arith.constant -1.000000e+30 : f32
    %7 = vector.broadcast %cst_4 : f32 to vector<8x8xf32>
    %8 = vector.broadcast %cst_5 : f32 to vector<8x8xf32>
    %9 = arith.select %6, %7, %8 : vector<8x8xi1>, vector<8x8xf32>
    %10 = vector.extract_strided_slice %3 {offsets = [0, 0], sizes = [8, 64], strides = [1, 1]} : vector<8x1152xf32> to vector<8x64xf32>
    %11 = vector.extract_strided_slice %3 {offsets = [0, 384], sizes = [8, 64], strides = [1, 1]} : vector<8x1152xf32> to vector<8x64xf32>
    %12 = vector.extract_strided_slice %3 {offsets = [0, 768], sizes = [8, 64], strides = [1, 1]} : vector<8x1152xf32> to vector<8x64xf32>
    %cst_6 = arith.constant dense<0.000000e+00> : vector<8x8xf32>
    %13 = tpu.matmul %10, %11, %cst_6 {dimension_numbers = #tpu.dot_dimension_numbers<[1], [1], [0], [0], [0, 0, 1, 0], [], []>} : vector<8x64xf32>, vector<8x64xf32>, vector<8x8xf32> -> vector<8x8xf32>
    %14 = arith.addf %13, %9 : vector<8x8xf32>
    %cst_7 = arith.constant dense<0xFF800000> : vector<8xf32>
    %15 = vector.multi_reduction <maximumf>, %14, %cst_7 [1] : vector<8x8xf32> to vector<8xf32>
    %16 = vector.shape_cast %15 : vector<8xf32> to vector<8x1xf32>
    %17 = vector.broadcast %16 : vector<8x1xf32> to vector<8x8xf32>
    %18 = arith.subf %14, %17 : vector<8x8xf32>
    %19 = math.exp %18 : vector<8x8xf32>
    %cst_8 = arith.constant dense<0.000000e+00> : vector<8xf32>
    %20 = vector.multi_reduction <add>, %19, %cst_8 [1] : vector<8x8xf32> to vector<8xf32>
    %21 = vector.shape_cast %20 : vector<8xf32> to vector<8x1xf32>
    %cst_9 = arith.constant dense<0.000000e+00> : vector<8x64xf32>
    %22 = tpu.matmul %19, %12, %cst_9 {dimension_numbers = #tpu.dot_dimension_numbers<[1], [0], [0], [1], [0, 0, 1, 1], [], []>} : vector<8x8xf32>, vector<8x64xf32>, vector<8x64xf32> -> vector<8x64xf32>
    %23 = tpu.reciprocal %21 : vector<8x1xf32> -> vector<8x1xf32>
    %24 = vector.broadcast %23 : vector<8x1xf32> to vector<8x64xf32>
    %25 = arith.mulf %22, %24 : vector<8x64xf32>
    %c0_10 = arith.constant 0 : index
    %c0_11 = arith.constant 0 : index
    %26 = vector.load %arg6[%c0_10, %c0_11] : memref<8x384xf32, #tpu.memory_space<vmem>>, vector<8x64xf32>
    tpu.vector_store %arg6[%c0_10, %c0_11], %25 {strides = array<i32>} : memref<8x384xf32, #tpu.memory_space<vmem>>, vector<8x64xf32>,
    %27 = vector.extract_strided_slice %3 {offsets = [0, 64], sizes = [8, 64], strides = [1, 1]} : vector<8x1152xf32> to vector<8x64xf32>
    %28 = vector.extract_strided_slice %3 {offsets = [0, 448], sizes = [8, 64], strides = [1, 1]} : vector<8x1152xf32> to vector<8x64xf32>
    %29 = vector.extract_strided_slice %3 {offsets = [0, 832], sizes = [8, 64], strides = [1, 1]} : vector<8x1152xf32> to vector<8x64xf32>
    %cst_12 = arith.constant dense<0.000000e+00> : vector<8x8xf32>
    %30 = tpu.matmul %27, %28, %cst_12 {dimension_numbers = #tpu.dot_dimension_numbers<[1], [1], [0], [0], [0, 0, 1, 0], [], []>} : vector<8x64xf32>, vector<8x64xf32>, vector<8x8xf32> -> vector<8x8xf32>
    %31 = arith.addf %30, %9 : vector<8x8xf32>
    %cst_13 = arith.constant dense<0xFF800000> : vector<8xf32>
    %32 = vector.multi_reduction <maximumf>, %31, %cst_13 [1] : vector<8x8xf32> to vector<8xf32>
    %33 = vector.shape_cast %32 : vector<8xf32> to vector<8x1xf32>
    %34 = vector.broadcast %33 : vector<8x1xf32> to vector<8x8xf32>
    %35 = arith.subf %31, %34 : vector<8x8xf32>
    %36 = math.exp %35 : vector<8x8xf32>
    %cst_14 = arith.constant dense<0.000000e+00> : vector<8xf32>
    %37 = vector.multi_reduction <add>, %36, %cst_14 [1] : vector<8x8xf32> to vector<8xf32>
    %38 = vector.shape_cast %37 : vector<8xf32> to vector<8x1xf32>
    %cst_15 = arith.constant dense<0.000000e+00> : vector<8x64xf32>
    %39 = tpu.matmul %36, %29, %cst_15 {dimension_numbers = #tpu.dot_dimension_numbers<[1], [0], [0], [1], [0, 0, 1, 1], [], []>} : vector<8x8xf32>, vector<8x64xf32>, vector<8x64xf32> -> vector<8x64xf32>
    %40 = tpu.reciprocal %38 : vector<8x1xf32> -> vector<8x1xf32>
    %41 = vector.broadcast %40 : vector<8x1xf32> to vector<8x64xf32>
    %42 = arith.mulf %39, %41 : vector<8x64xf32>
    %c0_16 = arith.constant 0 : index
    %c64 = arith.constant 64 : index
    %43 = vector.load %arg6[%c0_16, %c64] : memref<8x384xf32, #tpu.memory_space<vmem>>, vector<8x64xf32>
    tpu.vector_store %arg6[%c0_16, %c64], %42 {strides = array<i32>} : memref<8x384xf32, #tpu.memory_space<vmem>>, vector<8x64xf32>,
    %44 = vector.extract_strided_slice %3 {offsets = [0, 128], sizes = [8, 64], strides = [1, 1]} : vector<8x1152xf32> to vector<8x64xf32>
    %45 = vector.extract_strided_slice %3 {offsets = [0, 512], sizes = [8, 64], strides = [1, 1]} : vector<8x1152xf32> to vector<8x64xf32>
    %46 = vector.extract_strided_slice %3 {offsets = [0, 896], sizes = [8, 64], strides = [1, 1]} : vector<8x1152xf32> to vector<8x64xf32>
    %cst_17 = arith.constant dense<0.000000e+00> : vector<8x8xf32>
    %47 = tpu.matmul %44, %45, %cst_17 {dimension_numbers = #tpu.dot_dimension_numbers<[1], [1], [0], [0], [0, 0, 1, 0], [], []>} : vector<8x64xf32>, vector<8x64xf32>, vector<8x8xf32> -> vector<8x8xf32>
    %48 = arith.addf %47, %9 : vector<8x8xf32>
    %cst_18 = arith.constant dense<0xFF800000> : vector<8xf32>
    %49 = vector.multi_reduction <maximumf>, %48, %cst_18 [1] : vector<8x8xf32> to vector<8xf32>
    %50 = vector.shape_cast %49 : vector<8xf32> to vector<8x1xf32>
    %51 = vector.broadcast %50 : vector<8x1xf32> to vector<8x8xf32>
    %52 = arith.subf %48, %51 : vector<8x8xf32>
    %53 = math.exp %52 : vector<8x8xf32>
    %cst_19 = arith.constant dense<0.000000e+00> : vector<8xf32>
    %54 = vector.multi_reduction <add>, %53, %cst_19 [1] : vector<8x8xf32> to vector<8xf32>
    %55 = vector.shape_cast %54 : vector<8xf32> to vector<8x1xf32>
    %cst_20 = arith.constant dense<0.000000e+00> : vector<8x64xf32>
    %56 = tpu.matmul %53, %46, %cst_20 {dimension_numbers = #tpu.dot_dimension_numbers<[1], [0], [0], [1], [0, 0, 1, 1], [], []>} : vector<8x8xf32>, vector<8x64xf32>, vector<8x64xf32> -> vector<8x64xf32>
    %57 = tpu.reciprocal %55 : vector<8x1xf32> -> vector<8x1xf32>
    %58 = vector.broadcast %57 : vector<8x1xf32> to vector<8x64xf32>
    %59 = arith.mulf %56, %58 : vector<8x64xf32>
    %c0_21 = arith.constant 0 : index
    %c128 = arith.constant 128 : index
    %60 = vector.load %arg6[%c0_21, %c128] : memref<8x384xf32, #tpu.memory_space<vmem>>, vector<8x64xf32>
    tpu.vector_store %arg6[%c0_21, %c128], %59 {strides = array<i32>} : memref<8x384xf32, #tpu.memory_space<vmem>>, vector<8x64xf32>,
    %61 = vector.extract_strided_slice %3 {offsets = [0, 192], sizes = [8, 64], strides = [1, 1]} : vector<8x1152xf32> to vector<8x64xf32>
    %62 = vector.extract_strided_slice %3 {offsets = [0, 576], sizes = [8, 64], strides = [1, 1]} : vector<8x1152xf32> to vector<8x64xf32>
    %63 = vector.extract_strided_slice %3 {offsets = [0, 960], sizes = [8, 64], strides = [1, 1]} : vector<8x1152xf32> to vector<8x64xf32>
    %cst_22 = arith.constant dense<0.000000e+00> : vector<8x8xf32>
    %64 = tpu.matmul %61, %62, %cst_22 {dimension_numbers = #tpu.dot_dimension_numbers<[1], [1], [0], [0], [0, 0, 1, 0], [], []>} : vector<8x64xf32>, vector<8x64xf32>, vector<8x8xf32> -> vector<8x8xf32>
    %65 = arith.addf %64, %9 : vector<8x8xf32>
    %cst_23 = arith.constant dense<0xFF800000> : vector<8xf32>
    %66 = vector.multi_reduction <maximumf>, %65, %cst_23 [1] : vector<8x8xf32> to vector<8xf32>
    %67 = vector.shape_cast %66 : vector<8xf32> to vector<8x1xf32>
    %68 = vector.broadcast %67 : vector<8x1xf32> to vector<8x8xf32>
    %69 = arith.subf %65, %68 : vector<8x8xf32>
    %70 = math.exp %69 : vector<8x8xf32>
    %cst_24 = arith.constant dense<0.000000e+00> : vector<8xf32>
    %71 = vector.multi_reduction <add>, %70, %cst_24 [1] : vector<8x8xf32> to vector<8xf32>
    %72 = vector.shape_cast %71 : vector<8xf32> to vector<8x1xf32>
    %cst_25 = arith.constant dense<0.000000e+00> : vector<8x64xf32>
    %73 = tpu.matmul %70, %63, %cst_25 {dimension_numbers = #tpu.dot_dimension_numbers<[1], [0], [0], [1], [0, 0, 1, 1], [], []>} : vector<8x8xf32>, vector<8x64xf32>, vector<8x64xf32> -> vector<8x64xf32>
    %74 = tpu.reciprocal %72 : vector<8x1xf32> -> vector<8x1xf32>
    %75 = vector.broadcast %74 : vector<8x1xf32> to vector<8x64xf32>
    %76 = arith.mulf %73, %75 : vector<8x64xf32>
    %c0_26 = arith.constant 0 : index
    %c192 = arith.constant 192 : index
    %77 = vector.load %arg6[%c0_26, %c192] : memref<8x384xf32, #tpu.memory_space<vmem>>, vector<8x64xf32>
    tpu.vector_store %arg6[%c0_26, %c192], %76 {strides = array<i32>} : memref<8x384xf32, #tpu.memory_space<vmem>>, vector<8x64xf32>,
    %78 = vector.extract_strided_slice %3 {offsets = [0, 256], sizes = [8, 64], strides = [1, 1]} : vector<8x1152xf32> to vector<8x64xf32>
    %79 = vector.extract_strided_slice %3 {offsets = [0, 640], sizes = [8, 64], strides = [1, 1]} : vector<8x1152xf32> to vector<8x64xf32>
    %80 = vector.extract_strided_slice %3 {offsets = [0, 1024], sizes = [8, 64], strides = [1, 1]} : vector<8x1152xf32> to vector<8x64xf32>
    %cst_27 = arith.constant dense<0.000000e+00> : vector<8x8xf32>
    %81 = tpu.matmul %78, %79, %cst_27 {dimension_numbers = #tpu.dot_dimension_numbers<[1], [1], [0], [0], [0, 0, 1, 0], [], []>} : vector<8x64xf32>, vector<8x64xf32>, vector<8x8xf32> -> vector<8x8xf32>
    %82 = arith.addf %81, %9 : vector<8x8xf32>
    %cst_28 = arith.constant dense<0xFF800000> : vector<8xf32>
    %83 = vector.multi_reduction <maximumf>, %82, %cst_28 [1] : vector<8x8xf32> to vector<8xf32>
    %84 = vector.shape_cast %83 : vector<8xf32> to vector<8x1xf32>
    %85 = vector.broadcast %84 : vector<8x1xf32> to vector<8x8xf32>
    %86 = arith.subf %82, %85 : vector<8x8xf32>
    %87 = math.exp %86 : vector<8x8xf32>
    %cst_29 = arith.constant dense<0.000000e+00> : vector<8xf32>
    %88 = vector.multi_reduction <add>, %87, %cst_29 [1] : vector<8x8xf32> to vector<8xf32>
    %89 = vector.shape_cast %88 : vector<8xf32> to vector<8x1xf32>
    %cst_30 = arith.constant dense<0.000000e+00> : vector<8x64xf32>
    %90 = tpu.matmul %87, %80, %cst_30 {dimension_numbers = #tpu.dot_dimension_numbers<[1], [0], [0], [1], [0, 0, 1, 1], [], []>} : vector<8x8xf32>, vector<8x64xf32>, vector<8x64xf32> -> vector<8x64xf32>
    %91 = tpu.reciprocal %89 : vector<8x1xf32> -> vector<8x1xf32>
    %92 = vector.broadcast %91 : vector<8x1xf32> to vector<8x64xf32>
    %93 = arith.mulf %90, %92 : vector<8x64xf32>
    %c0_31 = arith.constant 0 : index
    %c256 = arith.constant 256 : index
    %94 = vector.load %arg6[%c0_31, %c256] : memref<8x384xf32, #tpu.memory_space<vmem>>, vector<8x64xf32>
    tpu.vector_store %arg6[%c0_31, %c256], %93 {strides = array<i32>} : memref<8x384xf32, #tpu.memory_space<vmem>>, vector<8x64xf32>,
    %95 = vector.extract_strided_slice %3 {offsets = [0, 320], sizes = [8, 64], strides = [1, 1]} : vector<8x1152xf32> to vector<8x64xf32>
    %96 = vector.extract_strided_slice %3 {offsets = [0, 704], sizes = [8, 64], strides = [1, 1]} : vector<8x1152xf32> to vector<8x64xf32>
    %97 = vector.extract_strided_slice %3 {offsets = [0, 1088], sizes = [8, 64], strides = [1, 1]} : vector<8x1152xf32> to vector<8x64xf32>
    %cst_32 = arith.constant dense<0.000000e+00> : vector<8x8xf32>
    %98 = tpu.matmul %95, %96, %cst_32 {dimension_numbers = #tpu.dot_dimension_numbers<[1], [1], [0], [0], [0, 0, 1, 0], [], []>} : vector<8x64xf32>, vector<8x64xf32>, vector<8x8xf32> -> vector<8x8xf32>
    %99 = arith.addf %98, %9 : vector<8x8xf32>
    %cst_33 = arith.constant dense<0xFF800000> : vector<8xf32>
    %100 = vector.multi_reduction <maximumf>, %99, %cst_33 [1] : vector<8x8xf32> to vector<8xf32>
    %101 = vector.shape_cast %100 : vector<8xf32> to vector<8x1xf32>
    %102 = vector.broadcast %101 : vector<8x1xf32> to vector<8x8xf32>
    %103 = arith.subf %99, %102 : vector<8x8xf32>
    %104 = math.exp %103 : vector<8x8xf32>
    %cst_34 = arith.constant dense<0.000000e+00> : vector<8xf32>
    %105 = vector.multi_reduction <add>, %104, %cst_34 [1] : vector<8x8xf32> to vector<8xf32>
    %106 = vector.shape_cast %105 : vector<8xf32> to vector<8x1xf32>
    %cst_35 = arith.constant dense<0.000000e+00> : vector<8x64xf32>
    %107 = tpu.matmul %104, %97, %cst_35 {dimension_numbers = #tpu.dot_dimension_numbers<[1], [0], [0], [1], [0, 0, 1, 1], [], []>} : vector<8x8xf32>, vector<8x64xf32>, vector<8x64xf32> -> vector<8x64xf32>
    %108 = tpu.reciprocal %106 : vector<8x1xf32> -> vector<8x1xf32>
    %109 = vector.broadcast %108 : vector<8x1xf32> to vector<8x64xf32>
    %110 = arith.mulf %107, %109 : vector<8x64xf32>
    %c0_36 = arith.constant 0 : index
    %c320 = arith.constant 320 : index
    %111 = vector.load %arg6[%c0_36, %c320] : memref<8x384xf32, #tpu.memory_space<vmem>>, vector<8x64xf32>
    tpu.vector_store %arg6[%c0_36, %c320], %110 {strides = array<i32>} : memref<8x384xf32, #tpu.memory_space<vmem>>, vector<8x64xf32>,
    %c0_37 = arith.constant 0 : index
    %c0_38 = arith.constant 0 : index
    %112 = vector.load %arg6[%c0_37, %c0_38] : memref<8x384xf32, #tpu.memory_space<vmem>>, vector<8x384xf32>
    %c0_39 = arith.constant 0 : index
    %c0_40 = arith.constant 0 : index
    %113 = vector.load %arg3[%c0_39, %c0_40] : memref<384x384xf32, #tpu.memory_space<vmem>>, vector<384x384xf32>
    %cst_41 = arith.constant dense<0.000000e+00> : vector<8x384xf32>
    %114 = tpu.matmul %112, %113, %cst_41 {dimension_numbers = #tpu.dot_dimension_numbers<[1], [0], [0], [1], [0, 0, 1, 1], [], []>} : vector<8x384xf32>, vector<384x384xf32>, vector<8x384xf32> -> vector<8x384xf32>
    %c0_42 = arith.constant 0 : index
    %c0_43 = arith.constant 0 : index
    %115 = vector.load %arg4[%c0_42, %c0_43] : memref<1x384xf32, #tpu.memory_space<vmem>>, vector<1x384xf32>
    %116 = vector.broadcast %115 : vector<1x384xf32> to vector<8x384xf32>
    %117 = arith.addf %114, %116 : vector<8x384xf32>
    %c0_44 = arith.constant 0 : index
    %c0_45 = arith.constant 0 : index
    %c0_46 = arith.constant 0 : index
    %118 = vector.load %arg5[%c0_44, %c0_45, %c0_46] : memref<1x8x384xf32, #tpu.memory_space<vmem>>, vector<1x8x384xf32>
    %119 = vector.shape_cast %118 : vector<1x8x384xf32> to vector<8x384xf32>
    %120 = vector.shape_cast %117 : vector<8x384xf32> to vector<1x8x384xf32>
    tpu.vector_store %arg5[%c0_44, %c0_45, %c0_46], %120 {strides = array<i32>} : memref<1x8x384xf32, #tpu.memory_space<vmem>>, vector<1x8x384xf32>,
    return
  }
  func.func @transform_0(%arg0: i32) -> (i32, i32, i32) {
    %c0_i32 = arith.constant 0 : i32
    %c0_i32_0 = arith.constant 0 : i32
    %c0_i32_1 = arith.constant 0 : i32
    return %arg0, %c0_i32, %c0_i32_0 : i32, i32, i32
  }
  func.func @transform_1(%arg0: i32) -> (i32, i32) {
    %c0_i32 = arith.constant 0 : i32
    %c0_i32_0 = arith.constant 0 : i32
    %c0_i32_1 = arith.constant 0 : i32
    return %c0_i32, %c0_i32_0 : i32, i32
  }
  func.func @transform_2(%arg0: i32) -> (i32, i32) {
    %c0_i32 = arith.constant 0 : i32
    %c0_i32_0 = arith.constant 0 : i32
    %c0_i32_1 = arith.constant 0 : i32
    return %c0_i32, %c0_i32_0 : i32, i32
  }
  func.func @transform_3(%arg0: i32) -> (i32, i32) {
    %c0_i32 = arith.constant 0 : i32
    %c0_i32_0 = arith.constant 0 : i32
    %c0_i32_1 = arith.constant 0 : i32
    return %c0_i32, %c0_i32_0 : i32, i32
  }
  func.func @transform_4(%arg0: i32) -> (i32, i32, i32) {
    %c0_i32 = arith.constant 0 : i32
    %c0_i32_0 = arith.constant 0 : i32
    %c0_i32_1 = arith.constant 0 : i32
    return %arg0, %c0_i32, %c0_i32_0 : i32, i32, i32
  }
}

</mosaic_0001>

<llo_original>
// kernel: tpu_custom_call.1
$region0: #{tpu_custom_call.1}
  #allocation0 [shape = 'u32[]', space=smem, size = 0x4, offset = 0x4, fixed_abs, tag = 'smem constant byte address 0x4 - core index']
  #allocation1 [shape = 'u32[144,128]{1,0:T(1,128)}', space=vmem, size = 0x12000, scoped, tag = 'internal scratch']
  #allocation2 [shape = 'f32[8,384]{1,0:T(8,128)}', space=vmem, size = 0x3000, scoped, tag = 'scratch operand']
  %s0 = inlined_call_operand.hbm [shape: f32[2,8,384], index: 0, kind: input, shape index: {}]
  %s1 = inlined_call_operand.hbm [shape: f32[384,1152], index: 1, kind: input, shape index: {}]
  %s2 = inlined_call_operand.hbm [shape: f32[384,384], index: 2, kind: input, shape index: {}]
  %s3 = inlined_call_operand.hbm [shape: f32[1,384], index: 3, kind: input, shape index: {}]
  %s4 = inlined_call_operand.hbm [shape: f32[2,8,384], index: 4, kind: output, shape index: {}]
  %s5 = sld [smem:[#allocation0]]
  $region65: #{tpu_custom_call.1} parent=0
    _
  %s7 = ssub.s32 1, %s5
  %s8 = scalar_select 0, %s7, %s5
  $region1: #{tpu_custom_call.1} parent=0
    #allocation3 [shape = 'u8[24576]{0}', space=vmem, size = 0x6000, scoped, tag = 'input window, operand 0']
    #allocation4 [shape = 's32[2]{0}', space=sflag, size = 0x8, scoped, tag = 'scoped memory for tpu_custom_call.1']
    #allocation5 [shape = 's32[2]{0}', space=sflag, size = 0x8, scoped, tag = 'scoped memory for tpu_custom_call.1']
    #allocation6 [shape = 'u8[1769472]{0}', space=vmem, size = 0x1b0000, scoped, tag = 'input window, operand 1, single buffered']
    #allocation7 [shape = 's32[1]{0}', space=sflag, size = 0x4, scoped, tag = 'scoped memory for tpu_custom_call.1']
    #allocation8 [shape = 'u8[589824]{0}', space=vmem, size = 0x90000, scoped, tag = 'input window, operand 2, single buffered']
    #allocation9 [shape = 'u8[1536]{0}', space=vmem, size = 0x800, scoped, tag = 'input window, operand 3, single buffered']
    #allocation10 [shape = 's32[1]{0}', space=sflag, size = 0x4, scoped, tag = 'scoped memory for tpu_custom_call.1']
    #allocation11 [shape = 'u8[24576]{0}', space=vmem, size = 0x6000, scoped, tag = 'output window, operand 0']
    %9 = vsyncpa [#allocation4], 0
    %s10 = scalar_lea.sflag [#allocation4], 1
    %11 = vsyncpa %s10, 0
    %12 = vsyncpa [#allocation7], 0
    %13 = vsyncpa [#allocation10], 0
    %14 = vsyncpa [#allocation5], 0
    %s15 = scalar_lea.sflag [#allocation5], 1
    %16 = vsyncpa %s15, 0
    loop: start=0, step=1, limit=4
    $region2: #{tpu_custom_call.1} parent=1 // loop_pre_header
      _
    $region3: #{tpu_custom_call.1} parent=1 // loop_header
      %s18 = sphi 0, %s22
      %p19 = scmp.ge.s32.totalorder %s18, 4
      %s28 = sphi 0, %s30
      %s31 = sphi 0, %s28
      %s32 = sphi 0, %s31
      %s48 = sphi 0, %s32
      %s52 = sphi 0, %s52
      %s54 = sphi 0, %s52
      %s55 = sphi 0, %s54
      %s69 = sphi 0, %s55
      %s73 = sphi 0, %s73
      %s75 = sphi 0, %s73
      %s76 = sphi 0, %s75
      %s90 = sphi 0, %s76
      %s94 = sphi 0, %s94
      %s96 = sphi 0, %s94
      %s97 = sphi 0, %s96
      %s111 = sphi 0, %s97
      %s117 = sphi 0, %s119
      %s120 = sphi 0, %s117
      %s121 = sphi 0, %s120
      %s137 = sphi 0, %s121
    $region4: #{tpu_custom_call.1} parent=1 // loop_header_branch
      %21 = sbr.rel (%p19) target = $region8
    $region5: #{tpu_custom_call.1} parent=1 // loop_body
      %s23 = ssub.s32 %s18, 1
      %s24 = ssub.s32 %s18, 2
      %s25 = sadd.s32 %s18, 1
      %s26 = ssub.s32 %s18, %s25
      %p27 = scmp.eq.s32.totalorder %s26, 0
      %s29 = sadd.s32 %s28, 1
      %s30 = scalar_select %p27, %s28, %s29
      %p33 = pneg %p27
      %p34 = scmp.eq.s32.totalorder %s18, 1
      %p35 = por %p33, %p34
      %p36 = scmp.ne.s32.totalorder %s28, %s31
      %p37 = scmp.eq.s32.totalorder %s18, 0
      %p38 = por %p36, %p37
      %p39 = scmp.ne.s32.totalorder %s28, %s31
      %p40 = scmp.eq.s32.totalorder %s23, 1
      %p41 = por %p39, %p40
      %p42 = scmp.ne.s32.totalorder %s31, %s32
      %p43 = scmp.eq.s32.totalorder %s23, 0
      %p44 = por %p42, %p43
      %p45 = scmp.ne.s32.totalorder %s31, %s32
      %p46 = scmp.eq.s32.totalorder %s24, 1
      %p47 = por %p45, %p46
      %p49 = scmp.ne.s32.totalorder %s32, %s48
      %p50 = scmp.eq.s32.totalorder %s24, 0
      %p51 = por %p49, %p50
      %s53 = sadd.s32 %s52, 1
      %p56 = scmp.eq.s32.totalorder %s18, 1
      %p57 = scmp.ne.s32.totalorder %s52, %s54
      %p58 = scmp.eq.s32.totalorder %s18, 0
      %p59 = por %p57, %p58
      %p60 = scmp.ne.s32.totalorder %s52, %s54
      %p61 = scmp.eq.s32.totalorder %s23, 1
      %p62 = por %p60, %p61
      %p63 = scmp.ne.s32.totalorder %s54, %s55
      %p64 = scmp.eq.s32.totalorder %s23, 0
      %p65 = por %p63, %p64
      %p66 = scmp.ne.s32.totalorder %s54, %s55
      %p67 = scmp.eq.s32.totalorder %s24, 1
      %p68 = por %p66, %p67
      %p70 = scmp.ne.s32.totalorder %s55, %s69
      %p71 = scmp.eq.s32.totalorder %s24, 0
      %p72 = por %p70, %p71
      %s74 = sadd.s32 %s73, 1
      %p77 = scmp.eq.s32.totalorder %s18, 1
      %p78 = scmp.ne.s32.totalorder %s73, %s75
      %p79 = scmp.eq.s32.totalorder %s18, 0
      %p80 = por %p78, %p79
      %p81 = scmp.ne.s32.totalorder %s73, %s75
      %p82 = scmp.eq.s32.totalorder %s23, 1
      %p83 = por %p81, %p82
      %p84 = scmp.ne.s32.totalorder %s75, %s76
      %p85 = scmp.eq.s32.totalorder %s23, 0
      %p86 = por %p84, %p85
      %p87 = scmp.ne.s32.totalorder %s75, %s76
      %p88 = scmp.eq.s32.totalorder %s24, 1
      %p89 = por %p87, %p88
      %p91 = scmp.ne.s32.totalorder %s76, %s90
      %p92 = scmp.eq.s32.totalorder %s24, 0
      %p93 = por %p91, %p92
      %s95 = sadd.s32 %s94, 1
      %p98 = scmp.eq.s32.totalorder %s18, 1
      %p99 = scmp.ne.s32.totalorder %s94, %s96
      %p100 = scmp.eq.s32.totalorder %s18, 0
      %p101 = por %p99, %p100
      %p102 = scmp.ne.s32.totalorder %s94, %s96
      %p103 = scmp.eq.s32.totalorder %s23, 1
      %p104 = por %p102, %p103
      %p105 = scmp.ne.s32.totalorder %s96, %s97
      %p106 = scmp.eq.s32.totalorder %s23, 0
      %p107 = por %p105, %p106
      %p108 = scmp.ne.s32.totalorder %s96, %s97
      %p109 = scmp.eq.s32.totalorder %s24, 1
      %p110 = por %p108, %p109
      %p112 = scmp.ne.s32.totalorder %s97, %s111
      %p113 = scmp.eq.s32.totalorder %s24, 0
      %p114 = por %p112, %p113
      %s115 = ssub.s32 %s18, %s25
      %p116 = scmp.eq.s32.totalorder %s115, 0
      %s118 = sadd.s32 %s117, 1
      %s119 = scalar_select %p116, %s117, %s118
      %p122 = pneg %p116
      %p123 = scmp.eq.s32.totalorder %s18, 1
      %p124 = por %p122, %p123
      %p125 = scmp.ne.s32.totalorder %s117, %s120
      %p126 = scmp.eq.s32.totalorder %s18, 0
      %p127 = por %p125, %p126
      %p128 = scmp.ne.s32.totalorder %s117, %s120
      %p129 = scmp.eq.s32.totalorder %s23, 1
      %p130 = por %p128, %p129
      %p131 = scmp.ne.s32.totalorder %s120, %s121
      %p132 = scmp.eq.s32.totalorder %s23, 0
      %p133 = por %p131, %p132
      %p134 = scmp.ne.s32.totalorder %s120, %s121
      %p135 = scmp.eq.s32.totalorder %s24, 1
      %p136 = por %p134, %p135
      %p138 = scmp.ne.s32.totalorder %s121, %s137
      %p139 = scmp.eq.s32.totalorder %s24, 0
      %p140 = por %p138, %p139
      %p141 = scmp.le.s32.totalorder 1, %s18
      %p142 = scmp.lt.s32.totalorder %s18, 3
      %p143 = pnand %p141, %p142
      %p144 = pneg %p143
      // Predicated region
      $region9: #{tpu_custom_call.1} parent=5 // pred_check
        _
      $region10: #{tpu_custom_call.1} parent=5 // pred_check_branch
        %146 = sbr.rel (%p143) target = $region12
      $region11: #{tpu_custom_call.1} parent=5 // pred_region
        %s147 = ssub.s32 %s18, 1
        // Predicated region
        $region13: #{tpu_custom_call.1} parent=11 // pred_check
          %p148 = pneg %p65
        $region14: #{tpu_custom_call.1} parent=11 // pred_check_branch
          %150 = sbr.rel (%p148) target = $region16
        $region15: #{tpu_custom_call.1} parent=11 // pred_region
          %s152 = ssub.s32 55296, 55296
          %153 = vsyncadd [#allocation7], %s152
          %s154 = sshll.u32 [#allocation6], 4
          %s155 = int_to_ptr.vmem [resolvable:$true] %s154
          %160 = dma.hbm_to_vmem [thread:$0]  %s1, 55296, %s155, [#allocation7], 1152, 1152, 72
        $region16: #{tpu_custom_call.1} parent=11 // pred_fallthru
          _
        // Predicated region
        $region17: #{tpu_custom_call.1} parent=11 // pred_check
          %p161 = pneg %p86
        $region18: #{tpu_custom_call.1} parent=11 // pred_check_branch
          %163 = sbr.rel (%p161) target = $region20
        $region19: #{tpu_custom_call.1} parent=11 // pred_region
          %s165 = ssub.s32 18432, 18432
          %166 = vsyncadd [#allocation7], %s165
          %s167 = sshll.u32 [#allocation8], 4
          %s168 = int_to_ptr.vmem [resolvable:$true] %s167
          %173 = dma.hbm_to_vmem [thread:$0]  %s2, 18432, %s168, [#allocation7], 384, 384, 24
        $region20: #{tpu_custom_call.1} parent=11 // pred_fallthru
          _
        // Predicated region
        $region21: #{tpu_custom_call.1} parent=11 // pred_check
          %p174 = pneg %p107
        $region22: #{tpu_custom_call.1} parent=11 // pred_check_branch
          %176 = sbr.rel (%p174) target = $region24
        $region23: #{tpu_custom_call.1} parent=11 // pred_region
          %s178 = ssub.s32 48, 48
          %179 = vsyncadd [#allocation10], %s178
          %s181 = sshll.u32 [#allocation9], 4
          %s182 = int_to_ptr.vmem [resolvable:$true] %s181
          %184 = dma.hbm_to_vmem [thread:$0]  %s3, 48, %s182, [#allocation10]
        $region24: #{tpu_custom_call.1} parent=11 // pred_fallthru
          _
      $region12: #{tpu_custom_call.1} parent=5 // pred_fallthru
        _
      %p185 = scmp.lt.s32.totalorder %s18, 2
      // Predicated region
      $region25: #{tpu_custom_call.1} parent=5 // pred_check
        %p186 = pneg %p185
      $region26: #{tpu_custom_call.1} parent=5 // pred_check_branch
        %188 = sbr.rel (%p186) target = $region28
      $region27: #{tpu_custom_call.1} parent=5 // pred_region
        // Predicated region
        $region29: #{tpu_custom_call.1} parent=27 // pred_check
          %p189 = pneg %p38
        $region30: #{tpu_custom_call.1} parent=27 // pred_check_branch
          %191 = sbr.rel (%p189) target = $region32
        $region31: #{tpu_custom_call.1} parent=27 // pred_region
          %s192 = sand.u32 %s28, 1
          %s193 = scalar_lea.sflag [#allocation4], %s192
          %s194 = sand.u32 %s28, 1
          %s195 = smul.addr %s194, 24
          %s196 = scalar_lea.vmem [#allocation3], %s195
          %s198 = ssub.s32 384, 384
          %199 = vsyncadd %s193, %s198
          %s200 = smul.addr %s18, 3
          %s201 = smul.addr %s200, 128
          %s202 = scalar_lea.hbm %s0, %s201
          %s204 = sshll.u32 %s196, 4
          %s205 = int_to_ptr.vmem [resolvable:$true] %s204
          %207 = dma.hbm_to_vmem [thread:$0]  %s202, 384, %s205, %s193
        $region32: #{tpu_custom_call.1} parent=27 // pred_fallthru
          _
      $region28: #{tpu_custom_call.1} parent=5 // pred_fallthru
        _
      %p208 = scmp.le.s32.totalorder 1, %s18
      %p209 = scmp.lt.s32.totalorder %s18, 3
      %p210 = pnand %p208, %p209
      %p211 = pneg %p210
      // Predicated region
      $region33: #{tpu_custom_call.1} parent=5 // pred_check
        _
      $region34: #{tpu_custom_call.1} parent=5 // pred_check_branch
        %213 = sbr.rel (%p210) target = $region36
      $region35: #{tpu_custom_call.1} parent=5 // pred_region
        %s214 = ssub.s32 %s18, 1
        %s215 = sand.u32 %s31, 1
        %s216 = scalar_lea.sflag [#allocation4], %s215
        %s217 = sand.u32 %s31, 1
        %s218 = smul.addr %s217, 24
        %s219 = scalar_lea.vmem [#allocation3], %s218
        // Predicated region
        $region37: #{tpu_custom_call.1} parent=35 // pred_check
          %p220 = pneg %p44
        $region38: #{tpu_custom_call.1} parent=35 // pred_check_branch
          %222 = sbr.rel (%p220) target = $region40
        $region39: #{tpu_custom_call.1} parent=35 // pred_region
          %223 = dma.done %s216, 384
        $region40: #{tpu_custom_call.1} parent=35 // pred_fallthru
          _
        // Predicated region
        $region41: #{tpu_custom_call.1} parent=35 // pred_check
          %p224 = pneg %p65
        $region42: #{tpu_custom_call.1} parent=35 // pred_check_branch
          %226 = sbr.rel (%p224) target = $region44
        $region43: #{tpu_custom_call.1} parent=35 // pred_region
          %227 = dma.done [#allocation7], 55296
        $region44: #{tpu_custom_call.1} parent=35 // pred_fallthru
          _
        // Predicated region
        $region45: #{tpu_custom_call.1} parent=35 // pred_check
          %p228 = pneg %p86
        $region46: #{tpu_custom_call.1} parent=35 // pred_check_branch
          %230 = sbr.rel (%p228) target = $region48
        $region47: #{tpu_custom_call.1} parent=35 // pred_region
          %231 = dma.done [#allocation7], 18432
        $region48: #{tpu_custom_call.1} parent=35 // pred_fallthru
          _
        // Predicated region
        $region49: #{tpu_custom_call.1} parent=35 // pred_check
          %p232 = pneg %p107
        $region50: #{tpu_custom_call.1} parent=35 // pred_check_branch
          %234 = sbr.rel (%p232) target = $region52
        $region51: #{tpu_custom_call.1} parent=35 // pred_region
          %235 = dma.done [#allocation10], 48
        $region52: #{tpu_custom_call.1} parent=35 // pred_fallthru
          _
        %s236 = sand.u32 %s31, 1
        %s237 = scalar_lea.sflag [#allocation4], %s236
        %s238 = sand.u32 %s31, 1
        %s239 = smul.addr %s238, 24
        %s240 = scalar_lea.vmem [#allocation3], %s239
        %p241 = pneg %p44
        %p242 = pneg %p41
        %p243 = pneg %p65
        %p244 = pneg %p62
        %p245 = pneg %p86
        %p246 = pneg %p83
        %p247 = pneg %p107
        %p248 = pneg %p104
        %p249 = pneg %p133
        %p250 = pneg %p130
        %s251 = sand.u32 %s120, 1
        %s252 = scalar_lea.sflag [#allocation5], %s251
        %s253 = sand.u32 %s120, 1
        %s254 = smul.addr %s253, 24
        %s255 = scalar_lea.vmem [#allocation11], %s254
        %v256 = vld [vmem:[%s219] sm:$0xff]
        %v257 = vld [vmem:[%s219 + $0x8] sm:$0xff]
        %v258 = vld [vmem:[%s219 + $0x10] sm:$0xff]
        %v259 = vld [vmem:[#allocation6] sm:$0xff]
        %v260 = vld [vmem:[#allocation6 + $0x8] sm:$0xff]
        %v261 = vld [vmem:[#allocation6 + $0x10] sm:$0xff]
        %v262 = vld [vmem:[#allocation6 + $0x18] sm:$0xff]
        %v263 = vld [vmem:[#allocation6 + $0x20] sm:$0xff]
        %v264 = vld [vmem:[#allocation6 + $0x28] sm:$0xff]
        %v265 = vld [vmem:[#allocation6 + $0x30] sm:$0xff]
        %v266 = vld [vmem:[#allocation6 + $0x38] sm:$0xff]
        %v267 = vld [vmem:[#allocation6 + $0x40] sm:$0xff]
        %v268 = vld [vmem:[#allocation6 + $0x48] sm:$0xff]
        %v269 = vld [vmem:[#allocation6 + $0x50] sm:$0xff]
        %v270 = vld [vmem:[#allocation6 + $0x58] sm:$0xff]
        %v271 = vld [vmem:[#allocation6 + $0x60] sm:$0xff]
        %v272 = vld [vmem:[#allocation6 + $0x68] sm:$0xff]
        %v273 = vld [vmem:[#allocation6 + $0x70] sm:$0xff]
        %v274 = vld [vmem:[#allocation6 + $0x78] sm:$0xff]
        %v275 = vld [vmem:[#allocation6 + $0x80] sm:$0xff]
        %v276 = vld [vmem:[#allocation6 + $0x88] sm:$0xff]
        %v277 = vld [vmem:[#allocation6 + $0x90] sm:$0xff]
        %v278 = vld [vmem:[#allocation6 + $0x98] sm:$0xff]
        %v279 = vld [vmem:[#allocation6 + $0xa0] sm:$0xff]
        %v280 = vld [vmem:[#allocation6 + $0xa8] sm:$0xff]
        %v281 = vld [vmem:[#allocation6 + $0xb0] sm:$0xff]
        %v282 = vld [vmem:[#allocation6 + $0xb8] sm:$0xff]
        %v283 = vld [vmem:[#allocation6 + $0xc0] sm:$0xff]
        %v284 = vld [vmem:[#allocation6 + $0xc8] sm:$0xff]
        %v285 = vld [vmem:[#allocation6 + $0xd0] sm:$0xff]
        %v286 = vld [vmem:[#allocation6 + $0xd8] sm:$0xff]
        %v287 = vld [vmem:[#allocation6 + $0xe0] sm:$0xff]
        %v288 = vld [vmem:[#allocation6 + $0xe8] sm:$0xff]
        %v289 = vld [vmem:[#allocation6 + $0xf0] sm:$0xff]
        %v290 = vld [vmem:[#allocation6 + $0xf8] sm:$0xff]
        %v291 = vld [vmem:[#allocation6 + $0x100] sm:$0xff]
        %v292 = vld [vmem:[#allocation6 + $0x108] sm:$0xff]
        %v293 = vld [vmem:[#allocation6 + $0x110] sm:$0xff]
        %v294 = vld [vmem:[#allocation6 + $0x118] sm:$0xff]
        %v295 = vld [vmem:[#allocation6 + $0x120] sm:$0xff]
        %v296 = vld [vmem:[#allocation6 + $0x128] sm:$0xff]
        %v297 = vld [vmem:[#allocation6 + $0x130] sm:$0xff]
        %v298 = vld [vmem:[#allocation6 + $0x138] sm:$0xff]
        %v299 = vld [vmem:[#allocation6 + $0x140] sm:$0xff]
        %v300 = vld [vmem:[#allocation6 + $0x148] sm:$0xff]
        %v301 = vld [vmem:[#allocation6 + $0x150] sm:$0xff]
        %v302 = vld [vmem:[#allocation6 + $0x158] sm:$0xff]
        %v303 = vld [vmem:[#allocation6 + $0x160] sm:$0xff]
        %v304 = vld [vmem:[#allocation6 + $0x168] sm:$0xff]
        %v305 = vld [vmem:[#allocation6 + $0x170] sm:$0xff]
        %v306 = vld [vmem:[#allocation6 + $0x178] sm:$0xff]
        %v307 = vld [vmem:[#allocation6 + $0x180] sm:$0xff]
        %v308 = vld [vmem:[#allocation6 + $0x188] sm:$0xff]
        %v309 = vld [vmem:[#allocation6 + $0x190] sm:$0xff]
        %v310 = vld [vmem:[#allocation6 + $0x198] sm:$0xff]
        %v311 = vld [vmem:[#allocation6 + $0x1a0] sm:$0xff]
        %v312 = vld [vmem:[#allocation6 + $0x1a8] sm:$0xff]
        %v313 = vld [vmem:[#allocation6 + $0x1b0] sm:$0xff]
        %v314 = vld [vmem:[#allocation6 + $0x1b8] sm:$0xff]
        %v315 = vld [vmem:[#allocation6 + $0x1c0] sm:$0xff]
        %v316 = vld [vmem:[#allocation6 + $0x1c8] sm:$0xff]
        %v317 = vld [vmem:[#allocation6 + $0x1d0] sm:$0xff]
        %v318 = vld [vmem:[#allocation6 + $0x1d8] sm:$0xff]
        %v319 = vld [vmem:[#allocation6 + $0x1e0] sm:$0xff]
        %v320 = vld [vmem:[#allocation6 + $0x1e8] sm:$0xff]
        %v321 = vld [vmem:[#allocation6 + $0x1f0] sm:$0xff]
        %v322 = vld [vmem:[#allocation6 + $0x1f8] sm:$0xff]
        %v323 = vld [vmem:[#allocation6 + $0x200] sm:$0xff]
        %v324 = vld [vmem:[#allocation6 + $0x208] sm:$0xff]
        %v325 = vld [vmem:[#allocation6 + $0x210] sm:$0xff]
        %v326 = vld [vmem:[#allocation6 + $0x218] sm:$0xff]
        %v327 = vld [vmem:[#allocation6 + $0x220] sm:$0xff]
        %v328 = vld [vmem:[#allocation6 + $0x228] sm:$0xff]
        %v329 = vld [vmem:[#allocation6 + $0x230] sm:$0xff]
        %v330 = vld [vmem:[#allocation6 + $0x238] sm:$0xff]
        %v331 = vld [vmem:[#allocation6 + $0x240] sm:$0xff]
        %v332 = vld [vmem:[#allocation6 + $0x248] sm:$0xff]
        %v333 = vld [vmem:[#allocation6 + $0x250] sm:$0xff]
        %v334 = vld [vmem:[#allocation6 + $0x258] sm:$0xff]
        %v335 = vld [vmem:[#allocation6 + $0x260] sm:$0xff]
        %v336 = vld [vmem:[#allocation6 + $0x268] sm:$0xff]
        %v337 = vld [vmem:[#allocation6 + $0x270] sm:$0xff]
        %v338 = vld [vmem:[#allocation6 + $0x278] sm:$0xff]
        %v339 = vld [vmem:[#allocation6 + $0x280] sm:$0xff]
        %v340 = vld [vmem:[#allocation6 + $0x288] sm:$0xff]
        %v341 = vld [vmem:[#allocation6 + $0x290] sm:$0xff]
        %v342 = vld [vmem:[#allocation6 + $0x298] sm:$0xff]
        %v343 = vld [vmem:[#allocation6 + $0x2a0] sm:$0xff]
        %v344 = vld [vmem:[#allocation6 + $0x2a8] sm:$0xff]
        %v345 = vld [vmem:[#allocation6 + $0x2b0] sm:$0xff]
        %v346 = vld [vmem:[#allocation6 + $0x2b8] sm:$0xff]
        %v347 = vld [vmem:[#allocation6 + $0x2c0] sm:$0xff]
        %v348 = vld [vmem:[#allocation6 + $0x2c8] sm:$0xff]
        %v349 = vld [vmem:[#allocation6 + $0x2d0] sm:$0xff]
        %v350 = vld [vmem:[#allocation6 + $0x2d8] sm:$0xff]
        %v351 = vld [vmem:[#allocation6 + $0x2e0] sm:$0xff]
        %v352 = vld [vmem:[#allocation6 + $0x2e8] sm:$0xff]
        %v353 = vld [vmem:[#allocation6 + $0x2f0] sm:$0xff]
        %v354 = vld [vmem:[#allocation6 + $0x2f8] sm:$0xff]
        %v355 = vld [vmem:[#allocation6 + $0x300] sm:$0xff]
        %v356 = vld [vmem:[#allocation6 + $0x308] sm:$0xff]
        %v357 = vld [vmem:[#allocation6 + $0x310] sm:$0xff]
        %v358 = vld [vmem:[#allocation6 + $0x318] sm:$0xff]
        %v359 = vld [vmem:[#allocation6 + $0x320] sm:$0xff]
        %v360 = vld [vmem:[#allocation6 + $0x328] sm:$0xff]
        %v361 = vld [vmem:[#allocation6 + $0x330] sm:$0xff]
        %v362 = vld [vmem:[#allocation6 + $0x338] sm:$0xff]
        %v363 = vld [vmem:[#allocation6 + $0x340] sm:$0xff]
        %v364 = vld [vmem:[#allocation6 + $0x348] sm:$0xff]
        %v365 = vld [vmem:[#allocation6 + $0x350] sm:$0xff]
        %v366 = vld [vmem:[#allocation6 + $0x358] sm:$0xff]
        %v367 = vld [vmem:[#allocation6 + $0x360] sm:$0xff]
        %v368 = vld [vmem:[#allocation6 + $0x368] sm:$0xff]
        %v369 = vld [vmem:[#allocation6 + $0x370] sm:$0xff]
        %v370 = vld [vmem:[#allocation6 + $0x378] sm:$0xff]
        %v371 = vld [vmem:[#allocation6 + $0x380] sm:$0xff]
        %v372 = vld [vmem:[#allocation6 + $0x388] sm:$0xff]
        %v373 = vld [vmem:[#allocation6 + $0x390] sm:$0xff]
        %v374 = vld [vmem:[#allocation6 + $0x398] sm:$0xff]
        %v375 = vld [vmem:[#allocation6 + $0x3a0] sm:$0xff]
        %v376 = vld [vmem:[#allocation6 + $0x3a8] sm:$0xff]
        %v377 = vld [vmem:[#allocation6 + $0x3b0] sm:$0xff]
        %v378 = vld [vmem:[#allocation6 + $0x3b8] sm:$0xff]
        %v379 = vld [vmem:[#allocation6 + $0x3c0] sm:$0xff]
        %v380 = vld [vmem:[#allocation6 + $0x3c8] sm:$0xff]
        %v381 = vld [vmem:[#allocation6 + $0x3d0] sm:$0xff]
        %v382 = vld [vmem:[#allocation6 + $0x3d8] sm:$0xff]
        %v383 = vld [vmem:[#allocation6 + $0x3e0] sm:$0xff]
        %v384 = vld [vmem:[#allocation6 + $0x3e8] sm:$0xff]
        %v385 = vld [vmem:[#allocation6 + $0x3f0] sm:$0xff]
        %v386 = vld [vmem:[#allocation6 + $0x3f8] sm:$0xff]
        %v387 = vld [vmem:[#allocation6 + $0x400] sm:$0xff]
        %v388 = vld [vmem:[#allocation6 + $0x408] sm:$0xff]
        %v389 = vld [vmem:[#allocation6 + $0x410] sm:$0xff]
        %v390 = vld [vmem:[#allocation6 + $0x418] sm:$0xff]
        %v391 = vld [vmem:[#allocation6 + $0x420] sm:$0xff]
        %v392 = vld [vmem:[#allocation6 + $0x428] sm:$0xff]
        %v393 = vld [vmem:[#allocation6 + $0x430] sm:$0xff]
        %v394 = vld [vmem:[#allocation6 + $0x438] sm:$0xff]
        %v395 = vld [vmem:[#allocation6 + $0x440] sm:$0xff]
        %v396 = vld [vmem:[#allocation6 + $0x448] sm:$0xff]
        %v397 = vld [vmem:[#allocation6 + $0x450] sm:$0xff]
        %v398 = vld [vmem:[#allocation6 + $0x458] sm:$0xff]
        %v399 = vld [vmem:[#allocation6 + $0x460] sm:$0xff]
        %v400 = vld [vmem:[#allocation6 + $0x468] sm:$0xff]
        %v401 = vld [vmem:[#allocation6 + $0x470] sm:$0xff]
        %v402 = vld [vmem:[#allocation6 + $0x478] sm:$0xff]
        %v403 = vld [vmem:[#allocation6 + $0x480] sm:$0xff]
        %v404 = vld [vmem:[#allocation6 + $0x488] sm:$0xff]
        %v405 = vld [vmem:[#allocation6 + $0x490] sm:$0xff]
        %v406 = vld [vmem:[#allocation6 + $0x498] sm:$0xff]
        %v407 = vld [vmem:[#allocation6 + $0x4a0] sm:$0xff]
        %v408 = vld [vmem:[#allocation6 + $0x4a8] sm:$0xff]
        %v409 = vld [vmem:[#allocation6 + $0x4b0] sm:$0xff]
        %v410 = vld [vmem:[#allocation6 + $0x4b8] sm:$0xff]
        %v411 = vld [vmem:[#allocation6 + $0x4c0] sm:$0xff]
        %v412 = vld [vmem:[#allocation6 + $0x4c8] sm:$0xff]
        %v413 = vld [vmem:[#allocation6 + $0x4d0] sm:$0xff]
        %v414 = vld [vmem:[#allocation6 + $0x4d8] sm:$0xff]
        %v415 = vld [vmem:[#allocation6 + $0x4e0] sm:$0xff]
        %v416 = vld [vmem:[#allocation6 + $0x4e8] sm:$0xff]
        %v417 = vld [vmem:[#allocation6 + $0x4f0] sm:$0xff]
        %v418 = vld [vmem:[#allocation6 + $0x4f8] sm:$0xff]
        %v419 = vld [vmem:[#allocation6 + $0x500] sm:$0xff]
        %v420 = vld [vmem:[#allocation6 + $0x508] sm:$0xff]
        %v421 = vld [vmem:[#allocation6 + $0x510] sm:$0xff]
        %v422 = vld [vmem:[#allocation6 + $0x518] sm:$0xff]
        %v423 = vld [vmem:[#allocation6 + $0x520] sm:$0xff]
        %v424 = vld [vmem:[#allocation6 + $0x528] sm:$0xff]
        %v425 = vld [vmem:[#allocation6 + $0x530] sm:$0xff]
        %v426 = vld [vmem:[#allocation6 + $0x538] sm:$0xff]
        %v427 = vld [vmem:[#allocation6 + $0x540] sm:$0xff]
        %v428 = vld [vmem:[#allocation6 + $0x548] sm:$0xff]
        %v429 = vld [vmem:[#allocation6 + $0x550] sm:$0xff]
        %v430 = vld [vmem:[#allocation6 + $0x558] sm:$0xff]
        %v431 = vld [vmem:[#allocation6 + $0x560] sm:$0xff]
        %v432 = vld [vmem:[#allocation6 + $0x568] sm:$0xff]
        %v433 = vld [vmem:[#allocation6 + $0x570] sm:$0xff]
        %v434 = vld [vmem:[#allocation6 + $0x578] sm:$0xff]
        %v435 = vld [vmem:[#allocation6 + $0x580] sm:$0xff]
        %v436 = vld [vmem:[#allocation6 + $0x588] sm:$0xff]
        %v437 = vld [vmem:[#allocation6 + $0x590] sm:$0xff]
        %v438 = vld [vmem:[#allocation6 + $0x598] sm:$0xff]
        %v439 = vld [vmem:[#allocation6 + $0x5a0] sm:$0xff]
        %v440 = vld [vmem:[#allocation6 + $0x5a8] sm:$0xff]
        %v441 = vld [vmem:[#allocation6 + $0x5b0] sm:$0xff]
        %v442 = vld [vmem:[#allocation6 + $0x5b8] sm:$0xff]
        %v443 = vld [vmem:[#allocation6 + $0x5c0] sm:$0xff]
        %v444 = vld [vmem:[#allocation6 + $0x5c8] sm:$0xff]
        %v445 = vld [vmem:[#allocation6 + $0x5d0] sm:$0xff]
        %v446 = vld [vmem:[#allocation6 + $0x5d8] sm:$0xff]
        %v447 = vld [vmem:[#allocation6 + $0x5e0] sm:$0xff]
        %v448 = vld [vmem:[#allocation6 + $0x5e8] sm:$0xff]
        %v449 = vld [vmem:[#allocation6 + $0x5f0] sm:$0xff]
        %v450 = vld [vmem:[#allocation6 + $0x5f8] sm:$0xff]
        %v451 = vld [vmem:[#allocation6 + $0x600] sm:$0xff]
        %v452 = vld [vmem:[#allocation6 + $0x608] sm:$0xff]
        %v453 = vld [vmem:[#allocation6 + $0x610] sm:$0xff]
        %v454 = vld [vmem:[#allocation6 + $0x618] sm:$0xff]
        %v455 = vld [vmem:[#allocation6 + $0x620] sm:$0xff]
        %v456 = vld [vmem:[#allocation6 + $0x628] sm:$0xff]
        %v457 = vld [vmem:[#allocation6 + $0x630] sm:$0xff]
        %v458 = vld [vmem:[#allocation6 + $0x638] sm:$0xff]
        %v459 = vld [vmem:[#allocation6 + $0x640] sm:$0xff]
        %v460 = vld [vmem:[#allocation6 + $0x648] sm:$0xff]
        %v461 = vld [vmem:[#allocation6 + $0x650] sm:$0xff]
        %v462 = vld [vmem:[#allocation6 + $0x658] sm:$0xff]
        %v463 = vld [vmem:[#allocation6 + $0x660] sm:$0xff]
        %v464 = vld [vmem:[#allocation6 + $0x668] sm:$0xff]
        %v465 = vld [vmem:[#allocation6 + $0x670] sm:$0xff]
        %v466 = vld [vmem:[#allocation6 + $0x678] sm:$0xff]
        %v467 = vld [vmem:[#allocation6 + $0x680] sm:$0xff]
        %v468 = vld [vmem:[#allocation6 + $0x688] sm:$0xff]
        %v469 = vld [vmem:[#allocation6 + $0x690] sm:$0xff]
        %v470 = vld [vmem:[#allocation6 + $0x698] sm:$0xff]
        %v471 = vld [vmem:[#allocation6 + $0x6a0] sm:$0xff]
        %v472 = vld [vmem:[#allocation6 + $0x6a8] sm:$0xff]
        %v473 = vld [vmem:[#allocation6 + $0x6b0] sm:$0xff]
        %v474 = vld [vmem:[#allocation6 + $0x6b8] sm:$0xff]
        %v475 = vld [vmem:[#allocation6 + $0x6c0] sm:$0xff]
        %v476 = vld [vmem:[#allocation6 + $0x6c8] sm:$0xff]
        %v477 = vld [vmem:[#allocation6 + $0x6d0] sm:$0xff]
        %v478 = vld [vmem:[#allocation6 + $0x6d8] sm:$0xff]
        %v479 = vld [vmem:[#allocation6 + $0x6e0] sm:$0xff]
        %v480 = vld [vmem:[#allocation6 + $0x6e8] sm:$0xff]
        %v481 = vld [vmem:[#allocation6 + $0x6f0] sm:$0xff]
        %v482 = vld [vmem:[#allocation6 + $0x6f8] sm:$0xff]
        %v483 = vld [vmem:[#allocation6 + $0x700] sm:$0xff]
        %v484 = vld [vmem:[#allocation6 + $0x708] sm:$0xff]
        %v485 = vld [vmem:[#allocation6 + $0x710] sm:$0xff]
        %v486 = vld [vmem:[#allocation6 + $0x718] sm:$0xff]
        %v487 = vld [vmem:[#allocation6 + $0x720] sm:$0xff]
        %v488 = vld [vmem:[#allocation6 + $0x728] sm:$0xff]
        %v489 = vld [vmem:[#allocation6 + $0x730] sm:$0xff]
        %v490 = vld [vmem:[#allocation6 + $0x738] sm:$0xff]
        %v491 = vld [vmem:[#allocation6 + $0x740] sm:$0xff]
        %v492 = vld [vmem:[#allocation6 + $0x748] sm:$0xff]
        %v493 = vld [vmem:[#allocation6 + $0x750] sm:$0xff]
        %v494 = vld [vmem:[#allocation6 + $0x758] sm:$0xff]
        %v495 = vld [vmem:[#allocation6 + $0x760] sm:$0xff]
        %v496 = vld [vmem:[#allocation6 + $0x768] sm:$0xff]
        %v497 = vld [vmem:[#allocation6 + $0x770] sm:$0xff]
        %v498 = vld [vmem:[#allocation6 + $0x778] sm:$0xff]
        %v499 = vld [vmem:[#allocation6 + $0x780] sm:$0xff]
        %v500 = vld [vmem:[#allocation6 + $0x788] sm:$0xff]
        %v501 = vld [vmem:[#allocation6 + $0x790] sm:$0xff]
        %v502 = vld [vmem:[#allocation6 + $0x798] sm:$0xff]
        %v503 = vld [vmem:[#allocation6 + $0x7a0] sm:$0xff]
        %v504 = vld [vmem:[#allocation6 + $0x7a8] sm:$0xff]
        %v505 = vld [vmem:[#allocation6 + $0x7b0] sm:$0xff]
        %v506 = vld [vmem:[#allocation6 + $0x7b8] sm:$0xff]
        %v507 = vld [vmem:[#allocation6 + $0x7c0] sm:$0xff]
        %v508 = vld [vmem:[#allocation6 + $0x7c8] sm:$0xff]
        %v509 = vld [vmem:[#allocation6 + $0x7d0] sm:$0xff]
        %v510 = vld [vmem:[#allocation6 + $0x7d8] sm:$0xff]
        %v511 = vld [vmem:[#allocation6 + $0x7e0] sm:$0xff]
        %v512 = vld [vmem:[#allocation6 + $0x7e8] sm:$0xff]
        %v513 = vld [vmem:[#allocation6 + $0x7f0] sm:$0xff]
        %v514 = vld [vmem:[#allocation6 + $0x7f8] sm:$0xff]
        %v515 = vld [vmem:[#allocation6 + $0x800] sm:$0xff]
        %v516 = vld [vmem:[#allocation6 + $0x808] sm:$0xff]
        %v517 = vld [vmem:[#allocation6 + $0x810] sm:$0xff]
        %v518 = vld [vmem:[#allocation6 + $0x818] sm:$0xff]
        %v519 = vld [vmem:[#allocation6 + $0x820] sm:$0xff]
        %v520 = vld [vmem:[#allocation6 + $0x828] sm:$0xff]
        %v521 = vld [vmem:[#allocation6 + $0x830] sm:$0xff]
        %v522 = vld [vmem:[#allocation6 + $0x838] sm:$0xff]
        %v523 = vld [vmem:[#allocation6 + $0x840] sm:$0xff]
        %v524 = vld [vmem:[#allocation6 + $0x848] sm:$0xff]
        %v525 = vld [vmem:[#allocation6 + $0x850] sm:$0xff]
        %v526 = vld [vmem:[#allocation6 + $0x858] sm:$0xff]
        %v527 = vld [vmem:[#allocation6 + $0x860] sm:$0xff]
        %v528 = vld [vmem:[#allocation6 + $0x868] sm:$0xff]
        %v529 = vld [vmem:[#allocation6 + $0x870] sm:$0xff]
        %v530 = vld [vmem:[#allocation6 + $0x878] sm:$0xff]
        %v531 = vld [vmem:[#allocation6 + $0x880] sm:$0xff]
        %v532 = vld [vmem:[#allocation6 + $0x888] sm:$0xff]
        %v533 = vld [vmem:[#allocation6 + $0x890] sm:$0xff]
        %v534 = vld [vmem:[#allocation6 + $0x898] sm:$0xff]
        %v535 = vld [vmem:[#allocation6 + $0x8a0] sm:$0xff]
        %v536 = vld [vmem:[#allocation6 + $0x8a8] sm:$0xff]
        %v537 = vld [vmem:[#allocation6 + $0x8b0] sm:$0xff]
        %v538 = vld [vmem:[#allocation6 + $0x8b8] sm:$0xff]
        %v539 = vld [vmem:[#allocation6 + $0x8c0] sm:$0xff]
        %v540 = vld [vmem:[#allocation6 + $0x8c8] sm:$0xff]
        %v541 = vld [vmem:[#allocation6 + $0x8d0] sm:$0xff]
        %v542 = vld [vmem:[#allocation6 + $0x8d8] sm:$0xff]
        %v543 = vld [vmem:[#allocation6 + $0x8e0] sm:$0xff]
        %v544 = vld [vmem:[#allocation6 + $0x8e8] sm:$0xff]
        %v545 = vld [vmem:[#allocation6 + $0x8f0] sm:$0xff]
        %v546 = vld [vmem:[#allocation6 + $0x8f8] sm:$0xff]
        %v547 = vld [vmem:[#allocation6 + $0x900] sm:$0xff]
        %v548 = vld [vmem:[#allocation6 + $0x908] sm:$0xff]
        %v549 = vld [vmem:[#allocation6 + $0x910] sm:$0xff]
        %v550 = vld [vmem:[#allocation6 + $0x918] sm:$0xff]
        %v551 = vld [vmem:[#allocation6 + $0x920] sm:$0xff]
        %v552 = vld [vmem:[#allocation6 + $0x928] sm:$0xff]
        %v553 = vld [vmem:[#allocation6 + $0x930] sm:$0xff]
        %v554 = vld [vmem:[#allocation6 + $0x938] sm:$0xff]
        %v555 = vld [vmem:[#allocation6 + $0x940] sm:$0xff]
        %v556 = vld [vmem:[#allocation6 + $0x948] sm:$0xff]
        %v557 = vld [vmem:[#allocation6 + $0x950] sm:$0xff]
        %v558 = vld [vmem:[#allocation6 + $0x958] sm:$0xff]
        %v559 = vld [vmem:[#allocation6 + $0x960] sm:$0xff]
        %v560 = vld [vmem:[#allocation6 + $0x968] sm:$0xff]
        %v561 = vld [vmem:[#allocation6 + $0x970] sm:$0xff]
        %v562 = vld [vmem:[#allocation6 + $0x978] sm:$0xff]
        %v563 = vld [vmem:[#allocation6 + $0x980] sm:$0xff]
        %v564 = vld [vmem:[#allocation6 + $0x988] sm:$0xff]
        %v565 = vld [vmem:[#allocation6 + $0x990] sm:$0xff]
        %v566 = vld [vmem:[#allocation6 + $0x998] sm:$0xff]
        %v567 = vld [vmem:[#allocation6 + $0x9a0] sm:$0xff]
        %v568 = vld [vmem:[#allocation6 + $0x9a8] sm:$0xff]
        %v569 = vld [vmem:[#allocation6 + $0x9b0] sm:$0xff]
        %v570 = vld [vmem:[#allocation6 + $0x9b8] sm:$0xff]
        %v571 = vld [vmem:[#allocation6 + $0x9c0] sm:$0xff]
        %v572 = vld [vmem:[#allocation6 + $0x9c8] sm:$0xff]
        %v573 = vld [vmem:[#allocation6 + $0x9d0] sm:$0xff]
        %v574 = vld [vmem:[#allocation6 + $0x9d8] sm:$0xff]
        %v575 = vld [vmem:[#allocation6 + $0x9e0] sm:$0xff]
        %v576 = vld [vmem:[#allocation6 + $0x9e8] sm:$0xff]
        %v577 = vld [vmem:[#allocation6 + $0x9f0] sm:$0xff]
        %v578 = vld [vmem:[#allocation6 + $0x9f8] sm:$0xff]
        %v579 = vld [vmem:[#allocation6 + $0xa00] sm:$0xff]
        %v580 = vld [vmem:[#allocation6 + $0xa08] sm:$0xff]
        %v581 = vld [vmem:[#allocation6 + $0xa10] sm:$0xff]
        %v582 = vld [vmem:[#allocation6 + $0xa18] sm:$0xff]
        %v583 = vld [vmem:[#allocation6 + $0xa20] sm:$0xff]
        %v584 = vld [vmem:[#allocation6 + $0xa28] sm:$0xff]
        %v585 = vld [vmem:[#allocation6 + $0xa30] sm:$0xff]
        %v586 = vld [vmem:[#allocation6 + $0xa38] sm:$0xff]
        %v587 = vld [vmem:[#allocation6 + $0xa40] sm:$0xff]
        %v588 = vld [vmem:[#allocation6 + $0xa48] sm:$0xff]
        %v589 = vld [vmem:[#allocation6 + $0xa50] sm:$0xff]
        %v590 = vld [vmem:[#allocation6 + $0xa58] sm:$0xff]
        %v591 = vld [vmem:[#allocation6 + $0xa60] sm:$0xff]
        %v592 = vld [vmem:[#allocation6 + $0xa68] sm:$0xff]
        %v593 = vld [vmem:[#allocation6 + $0xa70] sm:$0xff]
        %v594 = vld [vmem:[#allocation6 + $0xa78] sm:$0xff]
        %v595 = vld [vmem:[#allocation6 + $0xa80] sm:$0xff]
        %v596 = vld [vmem:[#allocation6 + $0xa88] sm:$0xff]
        %v597 = vld [vmem:[#allocation6 + $0xa90] sm:$0xff]
        %v598 = vld [vmem:[#allocation6 + $0xa98] sm:$0xff]
        %v599 = vld [vmem:[#allocation6 + $0xaa0] sm:$0xff]
        %v600 = vld [vmem:[#allocation6 + $0xaa8] sm:$0xff]
        %v601 = vld [vmem:[#allocation6 + $0xab0] sm:$0xff]
        %v602 = vld [vmem:[#allocation6 + $0xab8] sm:$0xff]
        %v603 = vld [vmem:[#allocation6 + $0xac0] sm:$0xff]
        %v604 = vld [vmem:[#allocation6 + $0xac8] sm:$0xff]
        %v605 = vld [vmem:[#allocation6 + $0xad0] sm:$0xff]
        %v606 = vld [vmem:[#allocation6 + $0xad8] sm:$0xff]
        %v607 = vld [vmem:[#allocation6 + $0xae0] sm:$0xff]
        %v608 = vld [vmem:[#allocation6 + $0xae8] sm:$0xff]
        %v609 = vld [vmem:[#allocation6 + $0xaf0] sm:$0xff]
        %v610 = vld [vmem:[#allocation6 + $0xaf8] sm:$0xff]
        %v611 = vld [vmem:[#allocation6 + $0xb00] sm:$0xff]
        %v612 = vld [vmem:[#allocation6 + $0xb08] sm:$0xff]
        %v613 = vld [vmem:[#allocation6 + $0xb10] sm:$0xff]
        %v614 = vld [vmem:[#allocation6 + $0xb18] sm:$0xff]
        %v615 = vld [vmem:[#allocation6 + $0xb20] sm:$0xff]
        %v616 = vld [vmem:[#allocation6 + $0xb28] sm:$0xff]
        %v617 = vld [vmem:[#allocation6 + $0xb30] sm:$0xff]
        %v618 = vld [vmem:[#allocation6 + $0xb38] sm:$0xff]
        %v619 = vld [vmem:[#allocation6 + $0xb40] sm:$0xff]
        %v620 = vld [vmem:[#allocation6 + $0xb48] sm:$0xff]
        %v621 = vld [vmem:[#allocation6 + $0xb50] sm:$0xff]
        %v622 = vld [vmem:[#allocation6 + $0xb58] sm:$0xff]
        %v623 = vld [vmem:[#allocation6 + $0xb60] sm:$0xff]
        %v624 = vld [vmem:[#allocation6 + $0xb68] sm:$0xff]
        %v625 = vld [vmem:[#allocation6 + $0xb70] sm:$0xff]
        %v626 = vld [vmem:[#allocation6 + $0xb78] sm:$0xff]
        %v627 = vld [vmem:[#allocation6 + $0xb80] sm:$0xff]
        %v628 = vld [vmem:[#allocation6 + $0xb88] sm:$0xff]
        %v629 = vld [vmem:[#allocation6 + $0xb90] sm:$0xff]
        %v630 = vld [vmem:[#allocation6 + $0xb98] sm:$0xff]
        %v631 = vld [vmem:[#allocation6 + $0xba0] sm:$0xff]
        %v632 = vld [vmem:[#allocation6 + $0xba8] sm:$0xff]
        %v633 = vld [vmem:[#allocation6 + $0xbb0] sm:$0xff]
        %v634 = vld [vmem:[#allocation6 + $0xbb8] sm:$0xff]
        %v635 = vld [vmem:[#allocation6 + $0xbc0] sm:$0xff]
        %v636 = vld [vmem:[#allocation6 + $0xbc8] sm:$0xff]
        %v637 = vld [vmem:[#allocation6 + $0xbd0] sm:$0xff]
        %v638 = vld [vmem:[#allocation6 + $0xbd8] sm:$0xff]
        %v639 = vld [vmem:[#allocation6 + $0xbe0] sm:$0xff]
        %v640 = vld [vmem:[#allocation6 + $0xbe8] sm:$0xff]
        %v641 = vld [vmem:[#allocation6 + $0xbf0] sm:$0xff]
        %v642 = vld [vmem:[#allocation6 + $0xbf8] sm:$0xff]
        %v643 = vld [vmem:[#allocation6 + $0xc00] sm:$0xff]
        %v644 = vld [vmem:[#allocation6 + $0xc08] sm:$0xff]
        %v645 = vld [vmem:[#allocation6 + $0xc10] sm:$0xff]
        %v646 = vld [vmem:[#allocation6 + $0xc18] sm:$0xff]
        %v647 = vld [vmem:[#allocation6 + $0xc20] sm:$0xff]
        %v648 = vld [vmem:[#allocation6 + $0xc28] sm:$0xff]
        %v649 = vld [vmem:[#allocation6 + $0xc30] sm:$0xff]
        %v650 = vld [vmem:[#allocation6 + $0xc38] sm:$0xff]
        %v651 = vld [vmem:[#allocation6 + $0xc40] sm:$0xff]
        %v652 = vld [vmem:[#allocation6 + $0xc48] sm:$0xff]
        %v653 = vld [vmem:[#allocation6 + $0xc50] sm:$0xff]
        %v654 = vld [vmem:[#allocation6 + $0xc58] sm:$0xff]
        %v655 = vld [vmem:[#allocation6 + $0xc60] sm:$0xff]
        %v656 = vld [vmem:[#allocation6 + $0xc68] sm:$0xff]
        %v657 = vld [vmem:[#allocation6 + $0xc70] sm:$0xff]
        %v658 = vld [vmem:[#allocation6 + $0xc78] sm:$0xff]
        %v659 = vld [vmem:[#allocation6 + $0xc80] sm:$0xff]
        %v660 = vld [vmem:[#allocation6 + $0xc88] sm:$0xff]
        %v661 = vld [vmem:[#allocation6 + $0xc90] sm:$0xff]
        %v662 = vld [vmem:[#allocation6 + $0xc98] sm:$0xff]
        %v663 = vld [vmem:[#allocation6 + $0xca0] sm:$0xff]
        %v664 = vld [vmem:[#allocation6 + $0xca8] sm:$0xff]
        %v665 = vld [vmem:[#allocation6 + $0xcb0] sm:$0xff]
        %v666 = vld [vmem:[#allocation6 + $0xcb8] sm:$0xff]
        %v667 = vld [vmem:[#allocation6 + $0xcc0] sm:$0xff]
        %v668 = vld [vmem:[#allocation6 + $0xcc8] sm:$0xff]
        %v669 = vld [vmem:[#allocation6 + $0xcd0] sm:$0xff]
        %v670 = vld [vmem:[#allocation6 + $0xcd8] sm:$0xff]
        %v671 = vld [vmem:[#allocation6 + $0xce0] sm:$0xff]
        %v672 = vld [vmem:[#allocation6 + $0xce8] sm:$0xff]
        %v673 = vld [vmem:[#allocation6 + $0xcf0] sm:$0xff]
        %v674 = vld [vmem:[#allocation6 + $0xcf8] sm:$0xff]
        %v675 = vld [vmem:[#allocation6 + $0xd00] sm:$0xff]
        %v676 = vld [vmem:[#allocation6 + $0xd08] sm:$0xff]
        %v677 = vld [vmem:[#allocation6 + $0xd10] sm:$0xff]
        %v678 = vld [vmem:[#allocation6 + $0xd18] sm:$0xff]
        %v679 = vld [vmem:[#allocation6 + $0xd20] sm:$0xff]
        %v680 = vld [vmem:[#allocation6 + $0xd28] sm:$0xff]
        %v681 = vld [vmem:[#allocation6 + $0xd30] sm:$0xff]
        %v682 = vld [vmem:[#allocation6 + $0xd38] sm:$0xff]
        %v683 = vld [vmem:[#allocation6 + $0xd40] sm:$0xff]
        %v684 = vld [vmem:[#allocation6 + $0xd48] sm:$0xff]
        %v685 = vld [vmem:[#allocation6 + $0xd50] sm:$0xff]
        %v686 = vld [vmem:[#allocation6 + $0xd58] sm:$0xff]
        %v687 = vld [vmem:[#allocation6 + $0xd60] sm:$0xff]
        %v688 = vld [vmem:[#allocation6 + $0xd68] sm:$0xff]
        %v689 = vld [vmem:[#allocation6 + $0xd70] sm:$0xff]
        %v690 = vld [vmem:[#allocation6 + $0xd78] sm:$0xff]
        %691 = vmatprep.subr.mxu0 %v395
        %692 = vmatpush1.msra.mxu0 %v394
        %693 = vmatprep.subr.mxu0 %v386
        %694 = vmatpush1.msra.mxu0 %v385
        %695 = vmatprep.subr.mxu0 %v377
        %696 = vmatpush1.msra.mxu0 %v376
        %697 = vmatprep.subr.mxu0 %v368
        %698 = vmatpush1.msra.mxu0 %v367
        %699 = vmatprep.subr.mxu0 %v359
        %700 = vmatpush1.msra.mxu0 %v358
        %701 = vmatprep.subr.mxu0 %v350
        %702 = vmatpush1.msra.mxu0 %v349
        %703 = vmatprep.subr.mxu0 %v341
        %704 = vmatpush1.msra.mxu0 %v340
        %705 = vmatprep.subr.mxu0 %v332
        %706 = vmatpush1.msra.mxu0 %v331
        %707 = vmatprep.subr.mxu0 %v323
        %708 = vmatpush1.msra.mxu0 %v322
        %709 = vmatprep.subr.mxu0 %v314
        %710 = vmatpush1.msra.mxu0 %v313
        %711 = vmatprep.subr.mxu0 %v305
        %712 = vmatpush1.msra.mxu0 %v304
        %713 = vmatprep.subr.mxu0 %v296
        %714 = vmatpush1.msra.mxu0 %v295
        %715 = vmatprep.subr.mxu0 %v287
        %716 = vmatpush1.msra.mxu0 %v286
        %717 = vmatprep.subr.mxu0 %v278
        %718 = vmatpush1.msra.mxu0 %v277
        %719 = vmatprep.subr.mxu0 %v269
        %720 = vmatpush1.msra.mxu0 %v268
        %721 = vmatprep.subr.mxu0 %v260
        %722 = vmatpush1.msra.mxu0 %v259
        %723 = vmatprep.subr.mxu0 %v539
        %724 = vmatpush2.msra.mxu0 %v538
        %725 = vmatprep.subr.mxu0 %v530
        %726 = vmatpush2.msra.mxu0 %v529
        %727 = vmatprep.subr.mxu0 %v521
        %728 = vmatpush2.msra.mxu0 %v520
        %729 = vmatprep.subr.mxu0 %v512
        %730 = vmatpush2.msra.mxu0 %v511
        %731 = vmatprep.subr.mxu0 %v503
        %732 = vmatpush2.msra.mxu0 %v502
        %733 = vmatprep.subr.mxu0 %v494
        %734 = vmatpush2.msra.mxu0 %v493
        %735 = vmatprep.subr.mxu0 %v485
        %736 = vmatpush2.msra.mxu0 %v484
        %737 = vmatprep.subr.mxu0 %v476
        %738 = vmatpush2.msra.mxu0 %v475
        %739 = vmatprep.subr.mxu0 %v467
        %740 = vmatpush2.msra.mxu0 %v466
        %741 = vmatprep.subr.mxu0 %v458
        %742 = vmatpush2.msra.mxu0 %v457
        %743 = vmatprep.subr.mxu0 %v449
        %744 = vmatpush2.msra.mxu0 %v448
        %745 = vmatprep.subr.mxu0 %v440
        %746 = vmatpush2.msra.mxu0 %v439
        %747 = vmatprep.subr.mxu0 %v431
        %748 = vmatpush2.msra.mxu0 %v430
        %749 = vmatprep.subr.mxu0 %v422
        %750 = vmatpush2.msra.mxu0 %v421
        %751 = vmatprep.subr.mxu0 %v413
        %752 = vmatpush2.msra.mxu0 %v412
        %753 = vmatprep.subr.mxu0 %v404
        %754 = vmatpush2.msra.mxu0 %v403
        %755 = vmatprep.mubr.f32.mxu0 %v257
        %756 = vmatmul.mubr.f32.gmra.mxu0 %v256
        %v757 = vpop.f32.mrf.mxu0
        %v758 = vadd.f32 0.0, %v757
        %v759 = vpop.f32.mrf.mxu0
        %v760 = vadd.f32 0.0, %v759
        %761 = vdwg.mxu0
        %762 = vmatprep.subr.mxu0 %v683
        %763 = vmatpush1.msra.mxu0 %v682
        %764 = vmatprep.subr.mxu0 %v674
        %765 = vmatpush1.msra.mxu0 %v673
        %766 = vmatprep.subr.mxu0 %v665
        %767 = vmatpush1.msra.mxu0 %v664
        %768 = vmatprep.subr.mxu0 %v656
        %769 = vmatpush1.msra.mxu0 %v655
        %770 = vmatprep.subr.mxu0 %v647
        %771 = vmatpush1.msra.mxu0 %v646
        %772 = vmatprep.subr.mxu0 %v638
        %773 = vmatpush1.msra.mxu0 %v637
        %774 = vmatprep.subr.mxu0 %v629
        %775 = vmatpush1.msra.mxu0 %v628
        %776 = vmatprep.subr.mxu0 %v620
        %777 = vmatpush1.msra.mxu0 %v619
        %778 = vmatprep.subr.mxu0 %v611
        %779 = vmatpush1.msra.mxu0 %v610
        %780 = vmatprep.subr.mxu0 %v602
        %781 = vmatpush1.msra.mxu0 %v601
        %782 = vmatprep.subr.mxu0 %v593
        %783 = vmatpush1.msra.mxu0 %v592
        %784 = vmatprep.subr.mxu0 %v584
        %785 = vmatpush1.msra.mxu0 %v583
        %786 = vmatprep.subr.mxu0 %v575
        %787 = vmatpush1.msra.mxu0 %v574
        %788 = vmatprep.subr.mxu0 %v566
        %789 = vmatpush1.msra.mxu0 %v565
        %790 = vmatprep.subr.mxu0 %v557
        %791 = vmatpush1.msra.mxu0 %v556
        %792 = vmatprep.subr.mxu0 %v548
        %793 = vmatpush1.msra.mxu0 %v547
        %794 = vmatprep.subr.mxu0 0.0
        %795 = vmatpush2.msra.mxu0 0.0
        %796 = vmatprep.subr.mxu0 0.0
        %797 = vmatpush2.msra.mxu0 0.0
        %798 = vmatprep.subr.mxu0 0.0
        %799 = vmatpush2.msra.mxu0 0.0
        %800 = vmatprep.subr.mxu0 0.0
        %801 = vmatpush2.msra.mxu0 0.0
        %802 = vmatprep.subr.mxu0 0.0
        %803 = vmatpush2.msra.mxu0 0.0
        %804 = vmatprep.subr.mxu0 0.0
        %805 = vmatpush2.msra.mxu0 0.0
        %806 = vmatprep.subr.mxu0 0.0
        %807 = vmatpush2.msra.mxu0 0.0
        %808 = vmatprep.subr.mxu0 0.0
        %809 = vmatpush2.msra.mxu0 0.0
        %810 = vmatprep.subr.mxu0 0.0
        %811 = vmatpush2.msra.mxu0 0.0
        %812 = vmatprep.subr.mxu0 0.0
        %813 = vmatpush2.msra.mxu0 0.0
        %814 = vmatprep.subr.mxu0 0.0
        %815 = vmatpush2.msra.mxu0 0.0
        %816 = vmatprep.subr.mxu0 0.0
        %817 = vmatpush2.msra.mxu0 0.0
        %818 = vmatprep.subr.mxu0 0.0
        %819 = vmatpush2.msra.mxu0 0.0
        %820 = vmatprep.subr.mxu0 0.0
        %821 = vmatpush2.msra.mxu0 0.0
        %822 = vmatprep.subr.mxu0 0.0
        %823 = vmatpush2.msra.mxu0 0.0
        %824 = vmatprep.subr.mxu0 0.0
        %825 = vmatpush2.msra.mxu0 0.0
        %826 = vmatprep.mubr.f32.mxu0 0.0
        %827 = vmatmul.mubr.f32.gmra.mxu0 %v258
        %v828 = vpop.f32.mrf.mxu0
        %v829 = vadd.f32 %v758, %v828
        %v830 = vpop.f32.mrf.mxu0
        %v831 = vadd.f32 %v760, %v830
        %832 = vdwg.mxu0
        %833 = vmatprep.subr.mxu0 %v397
        %834 = vmatpush1.msra.mxu0 %v396
        %835 = vmatprep.subr.mxu0 %v388
        %836 = vmatpush1.msra.mxu0 %v387
        %837 = vmatprep.subr.mxu0 %v379
        %838 = vmatpush1.msra.mxu0 %v378
        %839 = vmatprep.subr.mxu0 %v370
        %840 = vmatpush1.msra.mxu0 %v369
        %841 = vmatprep.subr.mxu0 %v361
        %842 = vmatpush1.msra.mxu0 %v360
        %843 = vmatprep.subr.mxu0 %v352
        %844 = vmatpush1.msra.mxu0 %v351
        %845 = vmatprep.subr.mxu0 %v343
        %846 = vmatpush1.msra.mxu0 %v342
        %847 = vmatprep.subr.mxu0 %v334
        %848 = vmatpush1.msra.mxu0 %v333
        %849 = vmatprep.subr.mxu0 %v325
        %850 = vmatpush1.msra.mxu0 %v324
        %851 = vmatprep.subr.mxu0 %v316
        %852 = vmatpush1.msra.mxu0 %v315
        %853 = vmatprep.subr.mxu0 %v307
        %854 = vmatpush1.msra.mxu0 %v306
        %855 = vmatprep.subr.mxu0 %v298
        %856 = vmatpush1.msra.mxu0 %v297
        %857 = vmatprep.subr.mxu0 %v289
        %858 = vmatpush1.msra.mxu0 %v288
        %859 = vmatprep.subr.mxu0 %v280
        %860 = vmatpush1.msra.mxu0 %v279
        %861 = vmatprep.subr.mxu0 %v271
        %862 = vmatpush1.msra.mxu0 %v270
        %863 = vmatprep.subr.mxu0 %v262
        %864 = vmatpush1.msra.mxu0 %v261
        %865 = vmatprep.subr.mxu0 %v541
        %866 = vmatpush2.msra.mxu0 %v540
        %867 = vmatprep.subr.mxu0 %v532
        %868 = vmatpush2.msra.mxu0 %v531
        %869 = vmatprep.subr.mxu0 %v523
        %870 = vmatpush2.msra.mxu0 %v522
        %871 = vmatprep.subr.mxu0 %v514
        %872 = vmatpush2.msra.mxu0 %v513
        %873 = vmatprep.subr.mxu0 %v505
        %874 = vmatpush2.msra.mxu0 %v504
        %875 = vmatprep.subr.mxu0 %v496
        %876 = vmatpush2.msra.mxu0 %v495
        %877 = vmatprep.subr.mxu0 %v487
        %878 = vmatpush2.msra.mxu0 %v486
        %879 = vmatprep.subr.mxu0 %v478
        %880 = vmatpush2.msra.mxu0 %v477
        %881 = vmatprep.subr.mxu0 %v469
        %882 = vmatpush2.msra.mxu0 %v468
        %883 = vmatprep.subr.mxu0 %v460
        %884 = vmatpush2.msra.mxu0 %v459
        %885 = vmatprep.subr.mxu0 %v451
        %886 = vmatpush2.msra.mxu0 %v450
        %887 = vmatprep.subr.mxu0 %v442
        %888 = vmatpush2.msra.mxu0 %v441
        %889 = vmatprep.subr.mxu0 %v433
        %890 = vmatpush2.msra.mxu0 %v432
        %891 = vmatprep.subr.mxu0 %v424
        %892 = vmatpush2.msra.mxu0 %v423
        %893 = vmatprep.subr.mxu0 %v415
        %894 = vmatpush2.msra.mxu0 %v414
        %895 = vmatprep.subr.mxu0 %v406
        %896 = vmatpush2.msra.mxu0 %v405
        %897 = vmatprep.mubr.f32.mxu0 %v257
        %898 = vmatmul.mubr.f32.gmra.mxu0 %v256
        %v899 = vpop.f32.mrf.mxu0
        %v900 = vadd.f32 0.0, %v899
        %v901 = vpop.f32.mrf.mxu0
        %v902 = vadd.f32 0.0, %v901
        %903 = vdwg.mxu0
        %904 = vmatprep.subr.mxu0 %v685
        %905 = vmatpush1.msra.mxu0 %v684
        %906 = vmatprep.subr.mxu0 %v676
        %907 = vmatpush1.msra.mxu0 %v675
        %908 = vmatprep.subr.mxu0 %v667
        %909 = vmatpush1.msra.mxu0 %v666
        %910 = vmatprep.subr.mxu0 %v658
        %911 = vmatpush1.msra.mxu0 %v657
        %912 = vmatprep.subr.mxu0 %v649
        %913 = vmatpush1.msra.mxu0 %v648
        %914 = vmatprep.subr.mxu0 %v640
        %915 = vmatpush1.msra.mxu0 %v639
        %916 = vmatprep.subr.mxu0 %v631
        %917 = vmatpush1.msra.mxu0 %v630
        %918 = vmatprep.subr.mxu0 %v622
        %919 = vmatpush1.msra.mxu0 %v621
        %920 = vmatprep.subr.mxu0 %v613
        %921 = vmatpush1.msra.mxu0 %v612
        %922 = vmatprep.subr.mxu0 %v604
        %923 = vmatpush1.msra.mxu0 %v603
        %924 = vmatprep.subr.mxu0 %v595
        %925 = vmatpush1.msra.mxu0 %v594
        %926 = vmatprep.subr.mxu0 %v586
        %927 = vmatpush1.msra.mxu0 %v585
        %928 = vmatprep.subr.mxu0 %v577
        %929 = vmatpush1.msra.mxu0 %v576
        %930 = vmatprep.subr.mxu0 %v568
        %931 = vmatpush1.msra.mxu0 %v567
        %932 = vmatprep.subr.mxu0 %v559
        %933 = vmatpush1.msra.mxu0 %v558
        %934 = vmatprep.subr.mxu0 %v550
        %935 = vmatpush1.msra.mxu0 %v549
        %936 = vmatprep.subr.mxu0 0.0
        %937 = vmatpush2.msra.mxu0 0.0
        %938 = vmatprep.subr.mxu0 0.0
        %939 = vmatpush2.msra.mxu0 0.0
        %940 = vmatprep.subr.mxu0 0.0
        %941 = vmatpush2.msra.mxu0 0.0
        %942 = vmatprep.subr.mxu0 0.0
        %943 = vmatpush2.msra.mxu0 0.0
        %944 = vmatprep.subr.mxu0 0.0
        %945 = vmatpush2.msra.mxu0 0.0
        %946 = vmatprep.subr.mxu0 0.0
        %947 = vmatpush2.msra.mxu0 0.0
        %948 = vmatprep.subr.mxu0 0.0
        %949 = vmatpush2.msra.mxu0 0.0
        %950 = vmatprep.subr.mxu0 0.0
        %951 = vmatpush2.msra.mxu0 0.0
        %952 = vmatprep.subr.mxu0 0.0
        %953 = vmatpush2.msra.mxu0 0.0
        %954 = vmatprep.subr.mxu0 0.0
        %955 = vmatpush2.msra.mxu0 0.0
        %956 = vmatprep.subr.mxu0 0.0
        %957 = vmatpush2.msra.mxu0 0.0
        %958 = vmatprep.subr.mxu0 0.0
        %959 = vmatpush2.msra.mxu0 0.0
        %960 = vmatprep.subr.mxu0 0.0
        %961 = vmatpush2.msra.mxu0 0.0
        %962 = vmatprep.subr.mxu0 0.0
        %963 = vmatpush2.msra.mxu0 0.0
        %964 = vmatprep.subr.mxu0 0.0
        %965 = vmatpush2.msra.mxu0 0.0
        %966 = vmatprep.subr.mxu0 0.0
        %967 = vmatpush2.msra.mxu0 0.0
        %968 = vmatprep.mubr.f32.mxu0 0.0
        %969 = vmatmul.mubr.f32.gmra.mxu0 %v258
        %v970 = vpop.f32.mrf.mxu0
        %v971 = vadd.f32 %v900, %v970
        %v972 = vpop.f32.mrf.mxu0
        %v973 = vadd.f32 %v902, %v972
        %974 = vdwg.mxu0
        %975 = vmatprep.subr.mxu0 %v399
        %976 = vmatpush1.msra.mxu0 %v398
        %977 = vmatprep.subr.mxu0 %v390
        %978 = vmatpush1.msra.mxu0 %v389
        %979 = vmatprep.subr.mxu0 %v381
        %980 = vmatpush1.msra.mxu0 %v380
        %981 = vmatprep.subr.mxu0 %v372
        %982 = vmatpush1.msra.mxu0 %v371
        %983 = vmatprep.subr.mxu0 %v363
        %984 = vmatpush1.msra.mxu0 %v362
        %985 = vmatprep.subr.mxu0 %v354
        %986 = vmatpush1.msra.mxu0 %v353
        %987 = vmatprep.subr.mxu0 %v345
        %988 = vmatpush1.msra.mxu0 %v344
        %989 = vmatprep.subr.mxu0 %v336
        %990 = vmatpush1.msra.mxu0 %v335
        %991 = vmatprep.subr.mxu0 %v327
        %992 = vmatpush1.msra.mxu0 %v326
        %993 = vmatprep.subr.mxu0 %v318
        %994 = vmatpush1.msra.mxu0 %v317
        %995 = vmatprep.subr.mxu0 %v309
        %996 = vmatpush1.msra.mxu0 %v308
        %997 = vmatprep.subr.mxu0 %v300
        %998 = vmatpush1.msra.mxu0 %v299
        %999 = vmatprep.subr.mxu0 %v291
        %1000 = vmatpush1.msra.mxu0 %v290
        %1001 = vmatprep.subr.mxu0 %v282
        %1002 = vmatpush1.msra.mxu0 %v281
        %1003 = vmatprep.subr.mxu0 %v273
        %1004 = vmatpush1.msra.mxu0 %v272
        %1005 = vmatprep.subr.mxu0 %v264
        %1006 = vmatpush1.msra.mxu0 %v263
        %1007 = vmatprep.subr.mxu0 %v543
        %1008 = vmatpush2.msra.mxu0 %v542
        %1009 = vmatprep.subr.mxu0 %v534
        %1010 = vmatpush2.msra.mxu0 %v533
        %1011 = vmatprep.subr.mxu0 %v525
        %1012 = vmatpush2.msra.mxu0 %v524
        %1013 = vmatprep.subr.mxu0 %v516
        %1014 = vmatpush2.msra.mxu0 %v515
        %1015 = vmatprep.subr.mxu0 %v507
        %1016 = vmatpush2.msra.mxu0 %v506
        %1017 = vmatprep.subr.mxu0 %v498
        %1018 = vmatpush2.msra.mxu0 %v497
        %1019 = vmatprep.subr.mxu0 %v489
        %1020 = vmatpush2.msra.mxu0 %v488
        %1021 = vmatprep.subr.mxu0 %v480
        %1022 = vmatpush2.msra.mxu0 %v479
        %1023 = vmatprep.subr.mxu0 %v471
        %1024 = vmatpush2.msra.mxu0 %v470
        %1025 = vmatprep.subr.mxu0 %v462
        %1026 = vmatpush2.msra.mxu0 %v461
        %1027 = vmatprep.subr.mxu0 %v453
        %1028 = vmatpush2.msra.mxu0 %v452
        %1029 = vmatprep.subr.mxu0 %v444
        %1030 = vmatpush2.msra.mxu0 %v443
        %1031 = vmatprep.subr.mxu0 %v435
        %1032 = vmatpush2.msra.mxu0 %v434
        %1033 = vmatprep.subr.mxu0 %v426
        %1034 = vmatpush2.msra.mxu0 %v425
        %1035 = vmatprep.subr.mxu0 %v417
        %1036 = vmatpush2.msra.mxu0 %v416
        %1037 = vmatprep.subr.mxu0 %v408
        %1038 = vmatpush2.msra.mxu0 %v407
        %1039 = vmatprep.mubr.f32.mxu0 %v257
        %1040 = vmatmul.mubr.f32.gmra.mxu0 %v256
        %v1041 = vpop.f32.mrf.mxu0
        %v1042 = vadd.f32 0.0, %v1041
        %v1043 = vpop.f32.mrf.mxu0
        %v1044 = vadd.f32 0.0, %v1043
        %1045 = vdwg.mxu0
        %1046 = vmatprep.subr.mxu0 %v687
        %1047 = vmatpush1.msra.mxu0 %v686
        %1048 = vmatprep.subr.mxu0 %v678
        %1049 = vmatpush1.msra.mxu0 %v677
        %1050 = vmatprep.subr.mxu0 %v669
        %1051 = vmatpush1.msra.mxu0 %v668
        %1052 = vmatprep.subr.mxu0 %v660
        %1053 = vmatpush1.msra.mxu0 %v659
        %1054 = vmatprep.subr.mxu0 %v651
        %1055 = vmatpush1.msra.mxu0 %v650
        %1056 = vmatprep.subr.mxu0 %v642
        %1057 = vmatpush1.msra.mxu0 %v641
        %1058 = vmatprep.subr.mxu0 %v633
        %1059 = vmatpush1.msra.mxu0 %v632
        %1060 = vmatprep.subr.mxu0 %v624
        %1061 = vmatpush1.msra.mxu0 %v623
        %1062 = vmatprep.subr.mxu0 %v615
        %1063 = vmatpush1.msra.mxu0 %v614
        %1064 = vmatprep.subr.mxu0 %v606
        %1065 = vmatpush1.msra.mxu0 %v605
        %1066 = vmatprep.subr.mxu0 %v597
        %1067 = vmatpush1.msra.mxu0 %v596
        %1068 = vmatprep.subr.mxu0 %v588
        %1069 = vmatpush1.msra.mxu0 %v587
        %1070 = vmatprep.subr.mxu0 %v579
        %1071 = vmatpush1.msra.mxu0 %v578
        %1072 = vmatprep.subr.mxu0 %v570
        %1073 = vmatpush1.msra.mxu0 %v569
        %1074 = vmatprep.subr.mxu0 %v561
        %1075 = vmatpush1.msra.mxu0 %v560
        %1076 = vmatprep.subr.mxu0 %v552
        %1077 = vmatpush1.msra.mxu0 %v551
        %1078 = vmatprep.subr.mxu0 0.0
        %1079 = vmatpush2.msra.mxu0 0.0
        %1080 = vmatprep.subr.mxu0 0.0
        %1081 = vmatpush2.msra.mxu0 0.0
        %1082 = vmatprep.subr.mxu0 0.0
        %1083 = vmatpush2.msra.mxu0 0.0
        %1084 = vmatprep.subr.mxu0 0.0
        %1085 = vmatpush2.msra.mxu0 0.0
        %1086 = vmatprep.subr.mxu0 0.0
        %1087 = vmatpush2.msra.mxu0 0.0
        %1088 = vmatprep.subr.mxu0 0.0
        %1089 = vmatpush2.msra.mxu0 0.0
        %1090 = vmatprep.subr.mxu0 0.0
        %1091 = vmatpush2.msra.mxu0 0.0
        %1092 = vmatprep.subr.mxu0 0.0
        %1093 = vmatpush2.msra.mxu0 0.0
        %1094 = vmatprep.subr.mxu0 0.0
        %1095 = vmatpush2.msra.mxu0 0.0
        %1096 = vmatprep.subr.mxu0 0.0
        %1097 = vmatpush2.msra.mxu0 0.0
        %1098 = vmatprep.subr.mxu0 0.0
        %1099 = vmatpush2.msra.mxu0 0.0
        %1100 = vmatprep.subr.mxu0 0.0
        %1101 = vmatpush2.msra.mxu0 0.0
        %1102 = vmatprep.subr.mxu0 0.0
        %1103 = vmatpush2.msra.mxu0 0.0
        %1104 = vmatprep.subr.mxu0 0.0
        %1105 = vmatpush2.msra.mxu0 0.0
        %1106 = vmatprep.subr.mxu0 0.0
        %1107 = vmatpush2.msra.mxu0 0.0
        %1108 = vmatprep.subr.mxu0 0.0
        %1109 = vmatpush2.msra.mxu0 0.0
        %1110 = vmatprep.mubr.f32.mxu0 0.0
        %1111 = vmatmul.mubr.f32.gmra.mxu0 %v258
        %v1112 = vpop.f32.mrf.mxu0
        %v1113 = vadd.f32 %v1042, %v1112
        %v1114 = vpop.f32.mrf.mxu0
        %v1115 = vadd.f32 %v1044, %v1114
        %1116 = vdwg.mxu0
        %1117 = vmatprep.subr.mxu0 %v401
        %1118 = vmatpush1.msra.mxu0 %v400
        %1119 = vmatprep.subr.mxu0 %v392
        %1120 = vmatpush1.msra.mxu0 %v391
        %1121 = vmatprep.subr.mxu0 %v383
        %1122 = vmatpush1.msra.mxu0 %v382
        %1123 = vmatprep.subr.mxu0 %v374
        %1124 = vmatpush1.msra.mxu0 %v373
        %1125 = vmatprep.subr.mxu0 %v365
        %1126 = vmatpush1.msra.mxu0 %v364
        %1127 = vmatprep.subr.mxu0 %v356
        %1128 = vmatpush1.msra.mxu0 %v355
        %1129 = vmatprep.subr.mxu0 %v347
        %1130 = vmatpush1.msra.mxu0 %v346
        %1131 = vmatprep.subr.mxu0 %v338
        %1132 = vmatpush1.msra.mxu0 %v337
        %1133 = vmatprep.subr.mxu0 %v329
        %1134 = vmatpush1.msra.mxu0 %v328
        %1135 = vmatprep.subr.mxu0 %v320
        %1136 = vmatpush1.msra.mxu0 %v319
        %1137 = vmatprep.subr.mxu0 %v311
        %1138 = vmatpush1.msra.mxu0 %v310
        %1139 = vmatprep.subr.mxu0 %v302
        %1140 = vmatpush1.msra.mxu0 %v301
        %1141 = vmatprep.subr.mxu0 %v293
        %1142 = vmatpush1.msra.mxu0 %v292
        %1143 = vmatprep.subr.mxu0 %v284
        %1144 = vmatpush1.msra.mxu0 %v283
        %1145 = vmatprep.subr.mxu0 %v275
        %1146 = vmatpush1.msra.mxu0 %v274
        %1147 = vmatprep.subr.mxu0 %v266
        %1148 = vmatpush1.msra.mxu0 %v265
        %1149 = vmatprep.subr.mxu0 %v545
        %1150 = vmatpush2.msra.mxu0 %v544
        %1151 = vmatprep.subr.mxu0 %v536
        %1152 = vmatpush2.msra.mxu0 %v535
        %1153 = vmatprep.subr.mxu0 %v527
        %1154 = vmatpush2.msra.mxu0 %v526
        %1155 = vmatprep.subr.mxu0 %v518
        %1156 = vmatpush2.msra.mxu0 %v517
        %1157 = vmatprep.subr.mxu0 %v509
        %1158 = vmatpush2.msra.mxu0 %v508
        %1159 = vmatprep.subr.mxu0 %v500
        %1160 = vmatpush2.msra.mxu0 %v499
        %1161 = vmatprep.subr.mxu0 %v491
        %1162 = vmatpush2.msra.mxu0 %v490
        %1163 = vmatprep.subr.mxu0 %v482
        %1164 = vmatpush2.msra.mxu0 %v481
        %1165 = vmatprep.subr.mxu0 %v473
        %1166 = vmatpush2.msra.mxu0 %v472
        %1167 = vmatprep.subr.mxu0 %v464
        %1168 = vmatpush2.msra.mxu0 %v463
        %1169 = vmatprep.subr.mxu0 %v455
        %1170 = vmatpush2.msra.mxu0 %v454
        %1171 = vmatprep.subr.mxu0 %v446
        %1172 = vmatpush2.msra.mxu0 %v445
        %1173 = vmatprep.subr.mxu0 %v437
        %1174 = vmatpush2.msra.mxu0 %v436
        %1175 = vmatprep.subr.mxu0 %v428
        %1176 = vmatpush2.msra.mxu0 %v427
        %1177 = vmatprep.subr.mxu0 %v419
        %1178 = vmatpush2.msra.mxu0 %v418
        %1179 = vmatprep.subr.mxu0 %v410
        %1180 = vmatpush2.msra.mxu0 %v409
        %1181 = vmatprep.mubr.f32.mxu0 %v257
        %1182 = vmatmul.mubr.f32.gmra.mxu0 %v256
        %v1183 = vpop.f32.mrf.mxu0
        %v1184 = vadd.f32 0.0, %v1183
        %v1185 = vpop.f32.mrf.mxu0
        %v1186 = vadd.f32 0.0, %v1185
        %1187 = vdwg.mxu0
        %1188 = vmatprep.subr.mxu0 %v689
        %1189 = vmatpush1.msra.mxu0 %v688
        %1190 = vmatprep.subr.mxu0 %v680
        %1191 = vmatpush1.msra.mxu0 %v679
        %1192 = vmatprep.subr.mxu0 %v671
        %1193 = vmatpush1.msra.mxu0 %v670
        %1194 = vmatprep.subr.mxu0 %v662
        %1195 = vmatpush1.msra.mxu0 %v661
        %1196 = vmatprep.subr.mxu0 %v653
        %1197 = vmatpush1.msra.mxu0 %v652
        %1198 = vmatprep.subr.mxu0 %v644
        %1199 = vmatpush1.msra.mxu0 %v643
        %1200 = vmatprep.subr.mxu0 %v635
        %1201 = vmatpush1.msra.mxu0 %v634
        %1202 = vmatprep.subr.mxu0 %v626
        %1203 = vmatpush1.msra.mxu0 %v625
        %1204 = vmatprep.subr.mxu0 %v617
        %1205 = vmatpush1.msra.mxu0 %v616
        %1206 = vmatprep.subr.mxu0 %v608
        %1207 = vmatpush1.msra.mxu0 %v607
        %1208 = vmatprep.subr.mxu0 %v599
        %1209 = vmatpush1.msra.mxu0 %v598
        %1210 = vmatprep.subr.mxu0 %v590
        %1211 = vmatpush1.msra.mxu0 %v589
        %1212 = vmatprep.subr.mxu0 %v581
        %1213 = vmatpush1.msra.mxu0 %v580
        %1214 = vmatprep.subr.mxu0 %v572
        %1215 = vmatpush1.msra.mxu0 %v571
        %1216 = vmatprep.subr.mxu0 %v563
        %1217 = vmatpush1.msra.mxu0 %v562
        %1218 = vmatprep.subr.mxu0 %v554
        %1219 = vmatpush1.msra.mxu0 %v553
        %1220 = vmatprep.subr.mxu0 0.0
        %1221 = vmatpush2.msra.mxu0 0.0
        %1222 = vmatprep.subr.mxu0 0.0
        %1223 = vmatpush2.msra.mxu0 0.0
        %1224 = vmatprep.subr.mxu0 0.0
        %1225 = vmatpush2.msra.mxu0 0.0
        %1226 = vmatprep.subr.mxu0 0.0
        %1227 = vmatpush2.msra.mxu0 0.0
        %1228 = vmatprep.subr.mxu0 0.0
        %1229 = vmatpush2.msra.mxu0 0.0
        %1230 = vmatprep.subr.mxu0 0.0
        %1231 = vmatpush2.msra.mxu0 0.0
        %1232 = vmatprep.subr.mxu0 0.0
        %1233 = vmatpush2.msra.mxu0 0.0
        %1234 = vmatprep.subr.mxu0 0.0
        %1235 = vmatpush2.msra.mxu0 0.0
        %1236 = vmatprep.subr.mxu0 0.0
        %1237 = vmatpush2.msra.mxu0 0.0
        %1238 = vmatprep.subr.mxu0 0.0
        %1239 = vmatpush2.msra.mxu0 0.0
        %1240 = vmatprep.subr.mxu0 0.0
        %1241 = vmatpush2.msra.mxu0 0.0
        %1242 = vmatprep.subr.mxu0 0.0
        %1243 = vmatpush2.msra.mxu0 0.0
        %1244 = vmatprep.subr.mxu0 0.0
        %1245 = vmatpush2.msra.mxu0 0.0
        %1246 = vmatprep.subr.mxu0 0.0
        %1247 = vmatpush2.msra.mxu0 0.0
        %1248 = vmatprep.subr.mxu0 0.0
        %1249 = vmatpush2.msra.mxu0 0.0
        %1250 = vmatprep.subr.mxu0 0.0
        %1251 = vmatpush2.msra.mxu0 0.0
        %1252 = vmatprep.mubr.f32.mxu0 0.0
        %1253 = vmatmul.mubr.f32.gmra.mxu0 %v258
        %v1254 = vpop.f32.mrf.mxu0
        %v1255 = vadd.f32 %v1184, %v1254
        %v1256 = vpop.f32.mrf.mxu0
        %v1257 = vadd.f32 %v1186, %v1256
        %1258 = vdwg.mxu0
        %1259 = vmatprep.subr.mxu0 0.0
        %1260 = vmatpush1.msra.mxu0 %v402
        %1261 = vmatprep.subr.mxu0 0.0
        %1262 = vmatpush1.msra.mxu0 %v393
        %1263 = vmatprep.subr.mxu0 0.0
        %1264 = vmatpush1.msra.mxu0 %v384
        %1265 = vmatprep.subr.mxu0 0.0
        %1266 = vmatpush1.msra.mxu0 %v375
        %1267 = vmatprep.subr.mxu0 0.0
        %1268 = vmatpush1.msra.mxu0 %v366
        %1269 = vmatprep.subr.mxu0 0.0
        %1270 = vmatpush1.msra.mxu0 %v357
        %1271 = vmatprep.subr.mxu0 0.0
        %1272 = vmatpush1.msra.mxu0 %v348
        %1273 = vmatprep.subr.mxu0 0.0
        %1274 = vmatpush1.msra.mxu0 %v339
        %1275 = vmatprep.subr.mxu0 0.0
        %1276 = vmatpush1.msra.mxu0 %v330
        %1277 = vmatprep.subr.mxu0 0.0
        %1278 = vmatpush1.msra.mxu0 %v321
        %1279 = vmatprep.subr.mxu0 0.0
        %1280 = vmatpush1.msra.mxu0 %v312
        %1281 = vmatprep.subr.mxu0 0.0
        %1282 = vmatpush1.msra.mxu0 %v303
        %1283 = vmatprep.subr.mxu0 0.0
        %1284 = vmatpush1.msra.mxu0 %v294
        %1285 = vmatprep.subr.mxu0 0.0
        %1286 = vmatpush1.msra.mxu0 %v285
        %1287 = vmatprep.subr.mxu0 0.0
        %1288 = vmatpush1.msra.mxu0 %v276
        %1289 = vmatprep.subr.mxu0 0.0
        %1290 = vmatpush1.msra.mxu0 %v267
        %1291 = vmatprep.subr.mxu0 0.0
        %1292 = vmatpush2.msra.mxu0 %v546
        %1293 = vmatprep.subr.mxu0 0.0
        %1294 = vmatpush2.msra.mxu0 %v537
        %1295 = vmatprep.subr.mxu0 0.0
        %1296 = vmatpush2.msra.mxu0 %v528
        %1297 = vmatprep.subr.mxu0 0.0
        %1298 = vmatpush2.msra.mxu0 %v519
        %1299 = vmatprep.subr.mxu0 0.0
        %1300 = vmatpush2.msra.mxu0 %v510
        %1301 = vmatprep.subr.mxu0 0.0
        %1302 = vmatpush2.msra.mxu0 %v501
        %1303 = vmatprep.subr.mxu0 0.0
        %1304 = vmatpush2.msra.mxu0 %v492
        %1305 = vmatprep.subr.mxu0 0.0
        %1306 = vmatpush2.msra.mxu0 %v483
        %1307 = vmatprep.subr.mxu0 0.0
        %1308 = vmatpush2.msra.mxu0 %v474
        %1309 = vmatprep.subr.mxu0 0.0
        %1310 = vmatpush2.msra.mxu0 %v465
        %1311 = vmatprep.subr.mxu0 0.0
        %1312 = vmatpush2.msra.mxu0 %v456
        %1313 = vmatprep.subr.mxu0 0.0
        %1314 = vmatpush2.msra.mxu0 %v447
        %1315 = vmatprep.subr.mxu0 0.0
        %1316 = vmatpush2.msra.mxu0 %v438
        %1317 = vmatprep.subr.mxu0 0.0
        %1318 = vmatpush2.msra.mxu0 %v429
        %1319 = vmatprep.subr.mxu0 0.0
        %1320 = vmatpush2.msra.mxu0 %v420
        %1321 = vmatprep.subr.mxu0 0.0
        %1322 = vmatpush2.msra.mxu0 %v411
        %1323 = vmatprep.mubr.f32.mxu0 %v257
        %1324 = vmatmul.mubr.f32.gmra.mxu0 %v256
        %v1325 = vpop.f32.mrf.mxu0
        %v1326 = vadd.f32 0.0, %v1325
        %v1327 = vpop.f32.mrf.mxu0
        %1328 = vdwg.mxu0
        %1329 = vmatprep.subr.mxu0 0.0
        %1330 = vmatpush1.msra.mxu0 %v690
        %1331 = vmatprep.subr.mxu0 0.0
        %1332 = vmatpush1.msra.mxu0 %v681
        %1333 = vmatprep.subr.mxu0 0.0
        %1334 = vmatpush1.msra.mxu0 %v672
        %1335 = vmatprep.subr.mxu0 0.0
        %1336 = vmatpush1.msra.mxu0 %v663
        %1337 = vmatprep.subr.mxu0 0.0
        %1338 = vmatpush1.msra.mxu0 %v654
        %1339 = vmatprep.subr.mxu0 0.0
        %1340 = vmatpush1.msra.mxu0 %v645
        %1341 = vmatprep.subr.mxu0 0.0
        %1342 = vmatpush1.msra.mxu0 %v636
        %1343 = vmatprep.subr.mxu0 0.0
        %1344 = vmatpush1.msra.mxu0 %v627
        %1345 = vmatprep.subr.mxu0 0.0
        %1346 = vmatpush1.msra.mxu0 %v618
        %1347 = vmatprep.subr.mxu0 0.0
        %1348 = vmatpush1.msra.mxu0 %v609
        %1349 = vmatprep.subr.mxu0 0.0
        %1350 = vmatpush1.msra.mxu0 %v600
        %1351 = vmatprep.subr.mxu0 0.0
        %1352 = vmatpush1.msra.mxu0 %v591
        %1353 = vmatprep.subr.mxu0 0.0
        %1354 = vmatpush1.msra.mxu0 %v582
        %1355 = vmatprep.subr.mxu0 0.0
        %1356 = vmatpush1.msra.mxu0 %v573
        %1357 = vmatprep.subr.mxu0 0.0
        %1358 = vmatpush1.msra.mxu0 %v564
        %1359 = vmatprep.subr.mxu0 0.0
        %1360 = vmatpush1.msra.mxu0 %v555
        %1361 = vmatprep.subr.mxu0 0.0
        %1362 = vmatpush2.msra.mxu0 0.0
        %1363 = vmatprep.subr.mxu0 0.0
        %1364 = vmatpush2.msra.mxu0 0.0
        %1365 = vmatprep.subr.mxu0 0.0
        %1366 = vmatpush2.msra.mxu0 0.0
        %1367 = vmatprep.subr.mxu0 0.0
        %1368 = vmatpush2.msra.mxu0 0.0
        %1369 = vmatprep.subr.mxu0 0.0
        %1370 = vmatpush2.msra.mxu0 0.0
        %1371 = vmatprep.subr.mxu0 0.0
        %1372 = vmatpush2.msra.mxu0 0.0
        %1373 = vmatprep.subr.mxu0 0.0
        %1374 = vmatpush2.msra.mxu0 0.0
        %1375 = vmatprep.subr.mxu0 0.0
        %1376 = vmatpush2.msra.mxu0 0.0
        %1377 = vmatprep.subr.mxu0 0.0
        %1378 = vmatpush2.msra.mxu0 0.0
        %1379 = vmatprep.subr.mxu0 0.0
        %1380 = vmatpush2.msra.mxu0 0.0
        %1381 = vmatprep.subr.mxu0 0.0
        %1382 = vmatpush2.msra.mxu0 0.0
        %1383 = vmatprep.subr.mxu0 0.0
        %1384 = vmatpush2.msra.mxu0 0.0
        %1385 = vmatprep.subr.mxu0 0.0
        %1386 = vmatpush2.msra.mxu0 0.0
        %1387 = vmatprep.subr.mxu0 0.0
        %1388 = vmatpush2.msra.mxu0 0.0
        %1389 = vmatprep.subr.mxu0 0.0
        %1390 = vmatpush2.msra.mxu0 0.0
        %1391 = vmatprep.subr.mxu0 0.0
        %1392 = vmatpush2.msra.mxu0 0.0
        %1393 = vmatprep.mubr.f32.mxu0 0.0
        %1394 = vmatmul.mubr.f32.gmra.mxu0 %v258
        %v1395 = vpop.f32.mrf.mxu0
        %v1396 = vadd.f32 %v1326, %v1395
        %v1397 = vpop.f32.mrf.mxu0
        %1398 = vdwg.mxu0
        %v1399 = vlaneseq
        %v1400 = vshrl.u32 %v1399, 7
        %v1401 = vlaneseq
        %v1402 = vand.u32 %v1401, 127
        %vm1403 = vcmp.ge.s32.totalorder %v1400, %v1402
        %v1404 = vsel %vm1403, 0.0, -1e+30
        %vm1405 = vcmask 523264
        %v1407 = vsel %vm1405, %v829, 0
        %v1410 = vsel %vm1405, %v973, 0
        %1412 = vmatprep.subr.mxu0 0.0
        %1413 = vmatpush1.xpose.msra.mxu0 0.0
        %1414 = vmatprep.subr.mxu0 0.0
        %1415 = vmatpush1.xpose.msra.mxu0 0.0
        %1416 = vmatprep.subr.mxu0 0.0
        %1417 = vmatpush1.xpose.msra.mxu0 0.0
        %1418 = vmatprep.subr.mxu0 0.0
        %1419 = vmatpush1.xpose.msra.mxu0 0.0
        %1420 = vmatprep.subr.mxu0 0.0
        %1421 = vmatpush1.xpose.msra.mxu0 0.0
        %1422 = vmatprep.subr.mxu0 0.0
        %1423 = vmatpush1.xpose.msra.mxu0 0.0
        %1424 = vmatprep.subr.mxu0 0.0
        %1425 = vmatpush1.xpose.msra.mxu0 0.0
        %1426 = vmatprep.subr.mxu0 0.0
        %1427 = vmatpush1.xpose.msra.mxu0 0.0
        %1428 = vmatprep.subr.mxu0 0.0
        %1429 = vmatpush1.xpose.msra.mxu0 0.0
        %1430 = vmatprep.subr.mxu0 0.0
        %1431 = vmatpush1.xpose.msra.mxu0 0.0
        %1432 = vmatprep.subr.mxu0 0.0
        %1433 = vmatpush1.xpose.msra.mxu0 0.0
        %1434 = vmatprep.subr.mxu0 0.0
        %1435 = vmatpush1.xpose.msra.mxu0 0.0
        %1436 = vmatprep.subr.mxu0 0.0
        %1437 = vmatpush1.xpose.msra.mxu0 0.0
        %1438 = vmatprep.subr.mxu0 0.0
        %1439 = vmatpush1.xpose.msra.mxu0 0.0
        %1440 = vmatprep.subr.mxu0 0.0
        %1441 = vmatpush1.xpose.msra.mxu0 0.0
        %1442 = vmatprep.subr.mxu0 0.0
        %1443 = vmatpush1.xpose.msra.mxu0 %v1410
        %1444 = vmatprep.subr.mxu0 0.0
        %1445 = vmatpush2.xpose.msra.mxu0 0.0
        %1446 = vmatprep.subr.mxu0 0.0
        %1447 = vmatpush2.xpose.msra.mxu0 0.0
        %1448 = vmatprep.subr.mxu0 0.0
        %1449 = vmatpush2.xpose.msra.mxu0 0.0
        %1450 = vmatprep.subr.mxu0 0.0
        %1451 = vmatpush2.xpose.msra.mxu0 0.0
        %1452 = vmatprep.subr.mxu0 0.0
        %1453 = vmatpush2.xpose.msra.mxu0 0.0
        %1454 = vmatprep.subr.mxu0 0.0
        %1455 = vmatpush2.xpose.msra.mxu0 0.0
        %1456 = vmatprep.subr.mxu0 0.0
        %1457 = vmatpush2.xpose.msra.mxu0 0.0
        %1458 = vmatprep.subr.mxu0 0.0
        %1459 = vmatpush2.xpose.msra.mxu0 0.0
        %1460 = vmatprep.subr.mxu0 0.0
        %1461 = vmatpush2.xpose.msra.mxu0 0.0
        %1462 = vmatprep.subr.mxu0 0.0
        %1463 = vmatpush2.xpose.msra.mxu0 0.0
        %1464 = vmatprep.subr.mxu0 0.0
        %1465 = vmatpush2.xpose.msra.mxu0 0.0
        %1466 = vmatprep.subr.mxu0 0.0
        %1467 = vmatpush2.xpose.msra.mxu0 0.0
        %1468 = vmatprep.subr.mxu0 0.0
        %1469 = vmatpush2.xpose.msra.mxu0 0.0
        %1470 = vmatprep.subr.mxu0 0.0
        %1471 = vmatpush2.xpose.msra.mxu0 0.0
        %1472 = vmatprep.subr.mxu0 0.0
        %1473 = vmatpush2.xpose.msra.mxu0 0.0
        %1474 = vmatprep.subr.mxu0 0.0
        %1475 = vmatpush2.xpose.msra.mxu0 0.0
        %1476 = vmatprep.mubr.f32.mxu0 0.0
        %1477 = vmatmul.mubr.f32.gmra.mxu0 %v1407
        %v1478 = vpop.f32.mrf.mxu0
        %v1479 = vadd.f32 %v1404, %v1478
        %v1480 = vpop.f32.mrf.mxu0
        %1481 = vdwg.mxu0
        %vm1482 = vcmask 64512
        %v1483 = vsel %vm1482, %v1479, -inf
        %1484 = vmax.xlane.f32.xlu0 %v1483
        %v1485 = vpop.xlane.xlu0 %1484
        %v1486 = vsub.f32 %v1479, %v1485
        %v1487 = vmul.f32 %v1486, 1.442695
        %v1488 = vpow.pop %v1487
        %v1489 = vsel %vm1482, %v1488, 0.0
        %1490 = vadd.xlane.f32.xlu0 %v1489
        %v1491 = vpop.xlane.xlu0 %1490
        %v1493 = vsel %vm1482, %v1488, 0
        %1495 = vmatprep.subr.mxu0 0.0
        %1496 = vmatpush1.msra.mxu0 0.0
        %1497 = vmatprep.subr.mxu0 0.0
        %1498 = vmatpush1.msra.mxu0 0.0
        %1499 = vmatprep.subr.mxu0 0.0
        %1500 = vmatpush1.msra.mxu0 0.0
        %1501 = vmatprep.subr.mxu0 0.0
        %1502 = vmatpush1.msra.mxu0 0.0
        %1503 = vmatprep.subr.mxu0 0.0
        %1504 = vmatpush1.msra.mxu0 0.0
        %1505 = vmatprep.subr.mxu0 0.0
        %1506 = vmatpush1.msra.mxu0 0.0
        %1507 = vmatprep.subr.mxu0 0.0
        %1508 = vmatpush1.msra.mxu0 0.0
        %1509 = vmatprep.subr.mxu0 0.0
        %1510 = vmatpush1.msra.mxu0 0.0
        %1511 = vmatprep.subr.mxu0 0.0
        %1512 = vmatpush1.msra.mxu0 0.0
        %1513 = vmatprep.subr.mxu0 0.0
        %1514 = vmatpush1.msra.mxu0 0.0
        %1515 = vmatprep.subr.mxu0 0.0
        %1516 = vmatpush1.msra.mxu0 0.0
        %1517 = vmatprep.subr.mxu0 0.0
        %1518 = vmatpush1.msra.mxu0 0.0
        %1519 = vmatprep.subr.mxu0 0.0
        %1520 = vmatpush1.msra.mxu0 0.0
        %1521 = vmatprep.subr.mxu0 0.0
        %1522 = vmatpush1.msra.mxu0 0.0
        %1523 = vmatprep.subr.mxu0 0.0
        %1524 = vmatpush1.msra.mxu0 0.0
        %1525 = vmatprep.subr.mxu0 0.0
        %1526 = vmatpush1.msra.mxu0 %v1255
        %1527 = vmatprep.subr.mxu0 0.0
        %1528 = vmatpush2.msra.mxu0 0.0
        %1529 = vmatprep.subr.mxu0 0.0
        %1530 = vmatpush2.msra.mxu0 0.0
        %1531 = vmatprep.subr.mxu0 0.0
        %1532 = vmatpush2.msra.mxu0 0.0
        %1533 = vmatprep.subr.mxu0 0.0
        %1534 = vmatpush2.msra.mxu0 0.0
        %1535 = vmatprep.subr.mxu0 0.0
        %1536 = vmatpush2.msra.mxu0 0.0
        %1537 = vmatprep.subr.mxu0 0.0
        %1538 = vmatpush2.msra.mxu0 0.0
        %1539 = vmatprep.subr.mxu0 0.0
        %1540 = vmatpush2.msra.mxu0 0.0
        %1541 = vmatprep.subr.mxu0 0.0
        %1542 = vmatpush2.msra.mxu0 0.0
        %1543 = vmatprep.subr.mxu0 0.0
        %1544 = vmatpush2.msra.mxu0 0.0
        %1545 = vmatprep.subr.mxu0 0.0
        %1546 = vmatpush2.msra.mxu0 0.0
        %1547 = vmatprep.subr.mxu0 0.0
        %1548 = vmatpush2.msra.mxu0 0.0
        %1549 = vmatprep.subr.mxu0 0.0
        %1550 = vmatpush2.msra.mxu0 0.0
        %1551 = vmatprep.subr.mxu0 0.0
        %1552 = vmatpush2.msra.mxu0 0.0
        %1553 = vmatprep.subr.mxu0 0.0
        %1554 = vmatpush2.msra.mxu0 0.0
        %1555 = vmatprep.subr.mxu0 0.0
        %1556 = vmatpush2.msra.mxu0 0.0
        %1557 = vmatprep.subr.mxu0 0.0
        %1558 = vmatpush2.msra.mxu0 0.0
        %1559 = vmatprep.mubr.f32.mxu0 0.0
        %1560 = vmatmul.mubr.f32.gmra.mxu0 %v1493
        %v1561 = vpop.f32.mrf.mxu0
        %v1562 = vadd.f32 0.0, %v1561
        %v1563 = vpop.f32.mrf.mxu0
        %1564 = vdwg.mxu0
        %v1565 = vrcp.pop %v1491
        %v1566 = vmul.f32 %v1562, %v1565
        %1567 = vst.msk [vmem:[#allocation2] sm:$0xff] %vm1405, %v1566
        %1568 = vrot.lane.b32.xlu0 %v829, 64
        %v1569 = vpop.permute.xlu0 %1568
        %1570 = vrot.lane.b32.xlu0 %v973, 64
        %v1571 = vpop.permute.xlu0 %1570
        %v1572 = vsel %vm1405, %v1569, 0
        %v1574 = vsel %vm1405, %v1571, 0
        %1576 = vmatprep.subr.mxu0 0.0
        %1577 = vmatpush1.xpose.msra.mxu0 0.0
        %1578 = vmatprep.subr.mxu0 0.0
        %1579 = vmatpush1.xpose.msra.mxu0 0.0
        %1580 = vmatprep.subr.mxu0 0.0
        %1581 = vmatpush1.xpose.msra.mxu0 0.0
        %1582 = vmatprep.subr.mxu0 0.0
        %1583 = vmatpush1.xpose.msra.mxu0 0.0
        %1584 = vmatprep.subr.mxu0 0.0
        %1585 = vmatpush1.xpose.msra.mxu0 0.0
        %1586 = vmatprep.subr.mxu0 0.0
        %1587 = vmatpush1.xpose.msra.mxu0 0.0
        %1588 = vmatprep.subr.mxu0 0.0
        %1589 = vmatpush1.xpose.msra.mxu0 0.0
        %1590 = vmatprep.subr.mxu0 0.0
        %1591 = vmatpush1.xpose.msra.mxu0 0.0
        %1592 = vmatprep.subr.mxu0 0.0
        %1593 = vmatpush1.xpose.msra.mxu0 0.0
        %1594 = vmatprep.subr.mxu0 0.0
        %1595 = vmatpush1.xpose.msra.mxu0 0.0
        %1596 = vmatprep.subr.mxu0 0.0
        %1597 = vmatpush1.xpose.msra.mxu0 0.0
        %1598 = vmatprep.subr.mxu0 0.0
        %1599 = vmatpush1.xpose.msra.mxu0 0.0
        %1600 = vmatprep.subr.mxu0 0.0
        %1601 = vmatpush1.xpose.msra.mxu0 0.0
        %1602 = vmatprep.subr.mxu0 0.0
        %1603 = vmatpush1.xpose.msra.mxu0 0.0
        %1604 = vmatprep.subr.mxu0 0.0
        %1605 = vmatpush1.xpose.msra.mxu0 0.0
        %1606 = vmatprep.subr.mxu0 0.0
        %1607 = vmatpush1.xpose.msra.mxu0 %v1574
        %1608 = vmatprep.subr.mxu0 0.0
        %1609 = vmatpush2.xpose.msra.mxu0 0.0
        %1610 = vmatprep.subr.mxu0 0.0
        %1611 = vmatpush2.xpose.msra.mxu0 0.0
        %1612 = vmatprep.subr.mxu0 0.0
        %1613 = vmatpush2.xpose.msra.mxu0 0.0
        %1614 = vmatprep.subr.mxu0 0.0
        %1615 = vmatpush2.xpose.msra.mxu0 0.0
        %1616 = vmatprep.subr.mxu0 0.0
        %1617 = vmatpush2.xpose.msra.mxu0 0.0
        %1618 = vmatprep.subr.mxu0 0.0
        %1619 = vmatpush2.xpose.msra.mxu0 0.0
        %1620 = vmatprep.subr.mxu0 0.0
        %1621 = vmatpush2.xpose.msra.mxu0 0.0
        %1622 = vmatprep.subr.mxu0 0.0
        %1623 = vmatpush2.xpose.msra.mxu0 0.0
        %1624 = vmatprep.subr.mxu0 0.0
        %1625 = vmatpush2.xpose.msra.mxu0 0.0
        %1626 = vmatprep.subr.mxu0 0.0
        %1627 = vmatpush2.xpose.msra.mxu0 0.0
        %1628 = vmatprep.subr.mxu0 0.0
        %1629 = vmatpush2.xpose.msra.mxu0 0.0
        %1630 = vmatprep.subr.mxu0 0.0
        %1631 = vmatpush2.xpose.msra.mxu0 0.0
        %1632 = vmatprep.subr.mxu0 0.0
        %1633 = vmatpush2.xpose.msra.mxu0 0.0
        %1634 = vmatprep.subr.mxu0 0.0
        %1635 = vmatpush2.xpose.msra.mxu0 0.0
        %1636 = vmatprep.subr.mxu0 0.0
        %1637 = vmatpush2.xpose.msra.mxu0 0.0
        %1638 = vmatprep.subr.mxu0 0.0
        %1639 = vmatpush2.xpose.msra.mxu0 0.0
        %1640 = vmatprep.mubr.f32.mxu0 0.0
        %1641 = vmatmul.mubr.f32.gmra.mxu0 %v1572
        %v1642 = vpop.f32.mrf.mxu0
        %v1643 = vadd.f32 %v1404, %v1642
        %v1644 = vpop.f32.mrf.mxu0
        %1645 = vdwg.mxu0
        %v1646 = vsel %vm1482, %v1643, -inf
        %1647 = vmax.xlane.f32.xlu0 %v1646
        %v1648 = vpop.xlane.xlu0 %1647
        %v1649 = vsub.f32 %v1643, %v1648
        %v1650 = vmul.f32 %v1649, 1.442695
        %v1651 = vpow.pop %v1650
        %v1652 = vsel %vm1482, %v1651, 0.0
        %1653 = vadd.xlane.f32.xlu0 %v1652
        %v1654 = vpop.xlane.xlu0 %1653
        %1656 = vrot.lane.b32.xlu0 %v1255, 64
        %v1657 = vpop.permute.xlu0 %1656
        %v1660 = vsel %vm1482, %v1651, 0
        %1662 = vmatprep.subr.mxu0 0.0
        %1663 = vmatpush1.msra.mxu0 0.0
        %1664 = vmatprep.subr.mxu0 0.0
        %1665 = vmatpush1.msra.mxu0 0.0
        %1666 = vmatprep.subr.mxu0 0.0
        %1667 = vmatpush1.msra.mxu0 0.0
        %1668 = vmatprep.subr.mxu0 0.0
        %1669 = vmatpush1.msra.mxu0 0.0
        %1670 = vmatprep.subr.mxu0 0.0
        %1671 = vmatpush1.msra.mxu0 0.0
        %1672 = vmatprep.subr.mxu0 0.0
        %1673 = vmatpush1.msra.mxu0 0.0
        %1674 = vmatprep.subr.mxu0 0.0
        %1675 = vmatpush1.msra.mxu0 0.0
        %1676 = vmatprep.subr.mxu0 0.0
        %1677 = vmatpush1.msra.mxu0 0.0
        %1678 = vmatprep.subr.mxu0 0.0
        %1679 = vmatpush1.msra.mxu0 0.0
        %1680 = vmatprep.subr.mxu0 0.0
        %1681 = vmatpush1.msra.mxu0 0.0
        %1682 = vmatprep.subr.mxu0 0.0
        %1683 = vmatpush1.msra.mxu0 0.0
        %1684 = vmatprep.subr.mxu0 0.0
        %1685 = vmatpush1.msra.mxu0 0.0
        %1686 = vmatprep.subr.mxu0 0.0
        %1687 = vmatpush1.msra.mxu0 0.0
        %1688 = vmatprep.subr.mxu0 0.0
        %1689 = vmatpush1.msra.mxu0 0.0
        %1690 = vmatprep.subr.mxu0 0.0
        %1691 = vmatpush1.msra.mxu0 0.0
        %1692 = vmatprep.subr.mxu0 0.0
        %1693 = vmatpush1.msra.mxu0 %v1657
        %1694 = vmatprep.subr.mxu0 0.0
        %1695 = vmatpush2.msra.mxu0 0.0
        %1696 = vmatprep.subr.mxu0 0.0
        %1697 = vmatpush2.msra.mxu0 0.0
        %1698 = vmatprep.subr.mxu0 0.0
        %1699 = vmatpush2.msra.mxu0 0.0
        %1700 = vmatprep.subr.mxu0 0.0
        %1701 = vmatpush2.msra.mxu0 0.0
        %1702 = vmatprep.subr.mxu0 0.0
        %1703 = vmatpush2.msra.mxu0 0.0
        %1704 = vmatprep.subr.mxu0 0.0
        %1705 = vmatpush2.msra.mxu0 0.0
        %1706 = vmatprep.subr.mxu0 0.0
        %1707 = vmatpush2.msra.mxu0 0.0
        %1708 = vmatprep.subr.mxu0 0.0
        %1709 = vmatpush2.msra.mxu0 0.0
        %1710 = vmatprep.subr.mxu0 0.0
        %1711 = vmatpush2.msra.mxu0 0.0
        %1712 = vmatprep.subr.mxu0 0.0
        %1713 = vmatpush2.msra.mxu0 0.0
        %1714 = vmatprep.subr.mxu0 0.0
        %1715 = vmatpush2.msra.mxu0 0.0
        %1716 = vmatprep.subr.mxu0 0.0
        %1717 = vmatpush2.msra.mxu0 0.0
        %1718 = vmatprep.subr.mxu0 0.0
        %1719 = vmatpush2.msra.mxu0 0.0
        %1720 = vmatprep.subr.mxu0 0.0
        %1721 = vmatpush2.msra.mxu0 0.0
        %1722 = vmatprep.subr.mxu0 0.0
        %1723 = vmatpush2.msra.mxu0 0.0
        %1724 = vmatprep.subr.mxu0 0.0
        %1725 = vmatpush2.msra.mxu0 0.0
        %1726 = vmatprep.mubr.f32.mxu0 0.0
        %1727 = vmatmul.mubr.f32.gmra.mxu0 %v1660
        %v1728 = vpop.f32.mrf.mxu0
        %v1729 = vadd.f32 0.0, %v1728
        %v1730 = vpop.f32.mrf.mxu0
        %1731 = vdwg.mxu0
        %v1732 = vrcp.pop %v1654
        %v1733 = vmul.f32 %v1729, %v1732
        %1735 = vrot.lane.b32.xlu0 %v1733, 64
        %v1736 = vpop.permute.xlu0 %1735
        %vm1738 = vcmask 1048064
        %1739 = vst.msk [vmem:[#allocation2] sm:$0xff] %vm1738, %v1736
        %v1741 = vsel %vm1405, %v831, 0
        %v1744 = vsel %vm1405, %v1113, 0
        %1746 = vmatprep.subr.mxu0 0.0
        %1747 = vmatpush1.xpose.msra.mxu0 0.0
        %1748 = vmatprep.subr.mxu0 0.0
        %1749 = vmatpush1.xpose.msra.mxu0 0.0
        %1750 = vmatprep.subr.mxu0 0.0
        %1751 = vmatpush1.xpose.msra.mxu0 0.0
        %1752 = vmatprep.subr.mxu0 0.0
        %1753 = vmatpush1.xpose.msra.mxu0 0.0
        %1754 = vmatprep.subr.mxu0 0.0
        %1755 = vmatpush1.xpose.msra.mxu0 0.0
        %1756 = vmatprep.subr.mxu0 0.0
        %1757 = vmatpush1.xpose.msra.mxu0 0.0
        %1758 = vmatprep.subr.mxu0 0.0
        %1759 = vmatpush1.xpose.msra.mxu0 0.0
        %1760 = vmatprep.subr.mxu0 0.0
        %1761 = vmatpush1.xpose.msra.mxu0 0.0
        %1762 = vmatprep.subr.mxu0 0.0
        %1763 = vmatpush1.xpose.msra.mxu0 0.0
        %1764 = vmatprep.subr.mxu0 0.0
        %1765 = vmatpush1.xpose.msra.mxu0 0.0
        %1766 = vmatprep.subr.mxu0 0.0
        %1767 = vmatpush1.xpose.msra.mxu0 0.0
        %1768 = vmatprep.subr.mxu0 0.0
        %1769 = vmatpush1.xpose.msra.mxu0 0.0
        %1770 = vmatprep.subr.mxu0 0.0
        %1771 = vmatpush1.xpose.msra.mxu0 0.0
        %1772 = vmatprep.subr.mxu0 0.0
        %1773 = vmatpush1.xpose.msra.mxu0 0.0
        %1774 = vmatprep.subr.mxu0 0.0
        %1775 = vmatpush1.xpose.msra.mxu0 0.0
        %1776 = vmatprep.subr.mxu0 0.0
        %1777 = vmatpush1.xpose.msra.mxu0 %v1744
        %1778 = vmatprep.subr.mxu0 0.0
        %1779 = vmatpush2.xpose.msra.mxu0 0.0
        %1780 = vmatprep.subr.mxu0 0.0
        %1781 = vmatpush2.xpose.msra.mxu0 0.0
        %1782 = vmatprep.subr.mxu0 0.0
        %1783 = vmatpush2.xpose.msra.mxu0 0.0
        %1784 = vmatprep.subr.mxu0 0.0
        %1785 = vmatpush2.xpose.msra.mxu0 0.0
        %1786 = vmatprep.subr.mxu0 0.0
        %1787 = vmatpush2.xpose.msra.mxu0 0.0
        %1788 = vmatprep.subr.mxu0 0.0
        %1789 = vmatpush2.xpose.msra.mxu0 0.0
        %1790 = vmatprep.subr.mxu0 0.0
        %1791 = vmatpush2.xpose.msra.mxu0 0.0
        %1792 = vmatprep.subr.mxu0 0.0
        %1793 = vmatpush2.xpose.msra.mxu0 0.0
        %1794 = vmatprep.subr.mxu0 0.0
        %1795 = vmatpush2.xpose.msra.mxu0 0.0
        %1796 = vmatprep.subr.mxu0 0.0
        %1797 = vmatpush2.xpose.msra.mxu0 0.0
        %1798 = vmatprep.subr.mxu0 0.0
        %1799 = vmatpush2.xpose.msra.mxu0 0.0
        %1800 = vmatprep.subr.mxu0 0.0
        %1801 = vmatpush2.xpose.msra.mxu0 0.0
        %1802 = vmatprep.subr.mxu0 0.0
        %1803 = vmatpush2.xpose.msra.mxu0 0.0
        %1804 = vmatprep.subr.mxu0 0.0
        %1805 = vmatpush2.xpose.msra.mxu0 0.0
        %1806 = vmatprep.subr.mxu0 0.0
        %1807 = vmatpush2.xpose.msra.mxu0 0.0
        %1808 = vmatprep.subr.mxu0 0.0
        %1809 = vmatpush2.xpose.msra.mxu0 0.0
        %1810 = vmatprep.mubr.f32.mxu0 0.0
        %1811 = vmatmul.mubr.f32.gmra.mxu0 %v1741
        %v1812 = vpop.f32.mrf.mxu0
        %v1813 = vadd.f32 %v1404, %v1812
        %v1814 = vpop.f32.mrf.mxu0
        %1815 = vdwg.mxu0
        %v1816 = vsel %vm1482, %v1813, -inf
        %1817 = vmax.xlane.f32.xlu0 %v1816
        %v1818 = vpop.xlane.xlu0 %1817
        %v1819 = vsub.f32 %v1813, %v1818
        %v1820 = vmul.f32 %v1819, 1.442695
        %v1821 = vpow.pop %v1820
        %v1822 = vsel %vm1482, %v1821, 0.0
        %1823 = vadd.xlane.f32.xlu0 %v1822
        %v1824 = vpop.xlane.xlu0 %1823
        %v1826 = vsel %vm1482, %v1821, 0
        %1828 = vmatprep.subr.mxu0 0.0
        %1829 = vmatpush1.msra.mxu0 0.0
        %1830 = vmatprep.subr.mxu0 0.0
        %1831 = vmatpush1.msra.mxu0 0.0
        %1832 = vmatprep.subr.mxu0 0.0
        %1833 = vmatpush1.msra.mxu0 0.0
        %1834 = vmatprep.subr.mxu0 0.0
        %1835 = vmatpush1.msra.mxu0 0.0
        %1836 = vmatprep.subr.mxu0 0.0
        %1837 = vmatpush1.msra.mxu0 0.0
        %1838 = vmatprep.subr.mxu0 0.0
        %1839 = vmatpush1.msra.mxu0 0.0
        %1840 = vmatprep.subr.mxu0 0.0
        %1841 = vmatpush1.msra.mxu0 0.0
        %1842 = vmatprep.subr.mxu0 0.0
        %1843 = vmatpush1.msra.mxu0 0.0
        %1844 = vmatprep.subr.mxu0 0.0
        %1845 = vmatpush1.msra.mxu0 0.0
        %1846 = vmatprep.subr.mxu0 0.0
        %1847 = vmatpush1.msra.mxu0 0.0
        %1848 = vmatprep.subr.mxu0 0.0
        %1849 = vmatpush1.msra.mxu0 0.0
        %1850 = vmatprep.subr.mxu0 0.0
        %1851 = vmatpush1.msra.mxu0 0.0
        %1852 = vmatprep.subr.mxu0 0.0
        %1853 = vmatpush1.msra.mxu0 0.0
        %1854 = vmatprep.subr.mxu0 0.0
        %1855 = vmatpush1.msra.mxu0 0.0
        %1856 = vmatprep.subr.mxu0 0.0
        %1857 = vmatpush1.msra.mxu0 0.0
        %1858 = vmatprep.subr.mxu0 0.0
        %1859 = vmatpush1.msra.mxu0 %v1257
        %1860 = vmatprep.subr.mxu0 0.0
        %1861 = vmatpush2.msra.mxu0 0.0
        %1862 = vmatprep.subr.mxu0 0.0
        %1863 = vmatpush2.msra.mxu0 0.0
        %1864 = vmatprep.subr.mxu0 0.0
        %1865 = vmatpush2.msra.mxu0 0.0
        %1866 = vmatprep.subr.mxu0 0.0
        %1867 = vmatpush2.msra.mxu0 0.0
        %1868 = vmatprep.subr.mxu0 0.0
        %1869 = vmatpush2.msra.mxu0 0.0
        %1870 = vmatprep.subr.mxu0 0.0
        %1871 = vmatpush2.msra.mxu0 0.0
        %1872 = vmatprep.subr.mxu0 0.0
        %1873 = vmatpush2.msra.mxu0 0.0
        %1874 = vmatprep.subr.mxu0 0.0
        %1875 = vmatpush2.msra.mxu0 0.0
        %1876 = vmatprep.subr.mxu0 0.0
        %1877 = vmatpush2.msra.mxu0 0.0
        %1878 = vmatprep.subr.mxu0 0.0
        %1879 = vmatpush2.msra.mxu0 0.0
        %1880 = vmatprep.subr.mxu0 0.0
        %1881 = vmatpush2.msra.mxu0 0.0
        %1882 = vmatprep.subr.mxu0 0.0
        %1883 = vmatpush2.msra.mxu0 0.0
        %1884 = vmatprep.subr.mxu0 0.0
        %1885 = vmatpush2.msra.mxu0 0.0
        %1886 = vmatprep.subr.mxu0 0.0
        %1887 = vmatpush2.msra.mxu0 0.0
        %1888 = vmatprep.subr.mxu0 0.0
        %1889 = vmatpush2.msra.mxu0 0.0
        %1890 = vmatprep.subr.mxu0 0.0
        %1891 = vmatpush2.msra.mxu0 0.0
        %1892 = vmatprep.mubr.f32.mxu0 0.0
        %1893 = vmatmul.mubr.f32.gmra.mxu0 %v1826
        %v1894 = vpop.f32.mrf.mxu0
        %v1895 = vadd.f32 0.0, %v1894
        %v1896 = vpop.f32.mrf.mxu0
        %1897 = vdwg.mxu0
        %v1898 = vrcp.pop %v1824
        %v1899 = vmul.f32 %v1895, %v1898
        %1900 = vst.msk [vmem:[#allocation2 + $0x8] sm:$0xff] %vm1405, %v1899
        %1901 = vrot.lane.b32.xlu0 %v831, 64
        %v1902 = vpop.permute.xlu0 %1901
        %1903 = vrot.lane.b32.xlu0 %v1113, 64
        %v1904 = vpop.permute.xlu0 %1903
        %v1905 = vsel %vm1405, %v1902, 0
        %v1907 = vsel %vm1405, %v1904, 0
        %1909 = vmatprep.subr.mxu0 0.0
        %1910 = vmatpush1.xpose.msra.mxu0 0.0
        %1911 = vmatprep.subr.mxu0 0.0
        %1912 = vmatpush1.xpose.msra.mxu0 0.0
        %1913 = vmatprep.subr.mxu0 0.0
        %1914 = vmatpush1.xpose.msra.mxu0 0.0
        %1915 = vmatprep.subr.mxu0 0.0
        %1916 = vmatpush1.xpose.msra.mxu0 0.0
        %1917 = vmatprep.subr.mxu0 0.0
        %1918 = vmatpush1.xpose.msra.mxu0 0.0
        %1919 = vmatprep.subr.mxu0 0.0
        %1920 = vmatpush1.xpose.msra.mxu0 0.0
        %1921 = vmatprep.subr.mxu0 0.0
        %1922 = vmatpush1.xpose.msra.mxu0 0.0
        %1923 = vmatprep.subr.mxu0 0.0
        %1924 = vmatpush1.xpose.msra.mxu0 0.0
        %1925 = vmatprep.subr.mxu0 0.0
        %1926 = vmatpush1.xpose.msra.mxu0 0.0
        %1927 = vmatprep.subr.mxu0 0.0
        %1928 = vmatpush1.xpose.msra.mxu0 0.0
        %1929 = vmatprep.subr.mxu0 0.0
        %1930 = vmatpush1.xpose.msra.mxu0 0.0
        %1931 = vmatprep.subr.mxu0 0.0
        %1932 = vmatpush1.xpose.msra.mxu0 0.0
        %1933 = vmatprep.subr.mxu0 0.0
        %1934 = vmatpush1.xpose.msra.mxu0 0.0
        %1935 = vmatprep.subr.mxu0 0.0
        %1936 = vmatpush1.xpose.msra.mxu0 0.0
        %1937 = vmatprep.subr.mxu0 0.0
        %1938 = vmatpush1.xpose.msra.mxu0 0.0
        %1939 = vmatprep.subr.mxu0 0.0
        %1940 = vmatpush1.xpose.msra.mxu0 %v1907
        %1941 = vmatprep.subr.mxu0 0.0
        %1942 = vmatpush2.xpose.msra.mxu0 0.0
        %1943 = vmatprep.subr.mxu0 0.0
        %1944 = vmatpush2.xpose.msra.mxu0 0.0
        %1945 = vmatprep.subr.mxu0 0.0
        %1946 = vmatpush2.xpose.msra.mxu0 0.0
        %1947 = vmatprep.subr.mxu0 0.0
        %1948 = vmatpush2.xpose.msra.mxu0 0.0
        %1949 = vmatprep.subr.mxu0 0.0
        %1950 = vmatpush2.xpose.msra.mxu0 0.0
        %1951 = vmatprep.subr.mxu0 0.0
        %1952 = vmatpush2.xpose.msra.mxu0 0.0
        %1953 = vmatprep.subr.mxu0 0.0
        %1954 = vmatpush2.xpose.msra.mxu0 0.0
        %1955 = vmatprep.subr.mxu0 0.0
        %1956 = vmatpush2.xpose.msra.mxu0 0.0
        %1957 = vmatprep.subr.mxu0 0.0
        %1958 = vmatpush2.xpose.msra.mxu0 0.0
        %1959 = vmatprep.subr.mxu0 0.0
        %1960 = vmatpush2.xpose.msra.mxu0 0.0
        %1961 = vmatprep.subr.mxu0 0.0
        %1962 = vmatpush2.xpose.msra.mxu0 0.0
        %1963 = vmatprep.subr.mxu0 0.0
        %1964 = vmatpush2.xpose.msra.mxu0 0.0
        %1965 = vmatprep.subr.mxu0 0.0
        %1966 = vmatpush2.xpose.msra.mxu0 0.0
        %1967 = vmatprep.subr.mxu0 0.0
        %1968 = vmatpush2.xpose.msra.mxu0 0.0
        %1969 = vmatprep.subr.mxu0 0.0
        %1970 = vmatpush2.xpose.msra.mxu0 0.0
        %1971 = vmatprep.subr.mxu0 0.0
        %1972 = vmatpush2.xpose.msra.mxu0 0.0
        %1973 = vmatprep.mubr.f32.mxu0 0.0
        %1974 = vmatmul.mubr.f32.gmra.mxu0 %v1905
        %v1975 = vpop.f32.mrf.mxu0
        %v1976 = vadd.f32 %v1404, %v1975
        %v1977 = vpop.f32.mrf.mxu0
        %1978 = vdwg.mxu0
        %v1979 = vsel %vm1482, %v1976, -inf
        %1980 = vmax.xlane.f32.xlu0 %v1979
        %v1981 = vpop.xlane.xlu0 %1980
        %v1982 = vsub.f32 %v1976, %v1981
        %v1983 = vmul.f32 %v1982, 1.442695
        %v1984 = vpow.pop %v1983
        %v1985 = vsel %vm1482, %v1984, 0.0
        %1986 = vadd.xlane.f32.xlu0 %v1985
        %v1987 = vpop.xlane.xlu0 %1986
        %1989 = vrot.lane.b32.xlu0 %v1257, 64
        %v1990 = vpop.permute.xlu0 %1989
        %v1993 = vsel %vm1482, %v1984, 0
        %1995 = vmatprep.subr.mxu0 0.0
        %1996 = vmatpush1.msra.mxu0 0.0
        %1997 = vmatprep.subr.mxu0 0.0
        %1998 = vmatpush1.msra.mxu0 0.0
        %1999 = vmatprep.subr.mxu0 0.0
        %2000 = vmatpush1.msra.mxu0 0.0
        %2001 = vmatprep.subr.mxu0 0.0
        %2002 = vmatpush1.msra.mxu0 0.0
        %2003 = vmatprep.subr.mxu0 0.0
        %2004 = vmatpush1.msra.mxu0 0.0
        %2005 = vmatprep.subr.mxu0 0.0
        %2006 = vmatpush1.msra.mxu0 0.0
        %2007 = vmatprep.subr.mxu0 0.0
        %2008 = vmatpush1.msra.mxu0 0.0
        %2009 = vmatprep.subr.mxu0 0.0
        %2010 = vmatpush1.msra.mxu0 0.0
        %2011 = vmatprep.subr.mxu0 0.0
        %2012 = vmatpush1.msra.mxu0 0.0
        %2013 = vmatprep.subr.mxu0 0.0
        %2014 = vmatpush1.msra.mxu0 0.0
        %2015 = vmatprep.subr.mxu0 0.0
        %2016 = vmatpush1.msra.mxu0 0.0
        %2017 = vmatprep.subr.mxu0 0.0
        %2018 = vmatpush1.msra.mxu0 0.0
        %2019 = vmatprep.subr.mxu0 0.0
        %2020 = vmatpush1.msra.mxu0 0.0
        %2021 = vmatprep.subr.mxu0 0.0
        %2022 = vmatpush1.msra.mxu0 0.0
        %2023 = vmatprep.subr.mxu0 0.0
        %2024 = vmatpush1.msra.mxu0 0.0
        %2025 = vmatprep.subr.mxu0 0.0
        %2026 = vmatpush1.msra.mxu0 %v1990
        %2027 = vmatprep.subr.mxu0 0.0
        %2028 = vmatpush2.msra.mxu0 0.0
        %2029 = vmatprep.subr.mxu0 0.0
        %2030 = vmatpush2.msra.mxu0 0.0
        %2031 = vmatprep.subr.mxu0 0.0
        %2032 = vmatpush2.msra.mxu0 0.0
        %2033 = vmatprep.subr.mxu0 0.0
        %2034 = vmatpush2.msra.mxu0 0.0
        %2035 = vmatprep.subr.mxu0 0.0
        %2036 = vmatpush2.msra.mxu0 0.0
        %2037 = vmatprep.subr.mxu0 0.0
        %2038 = vmatpush2.msra.mxu0 0.0
        %2039 = vmatprep.subr.mxu0 0.0
        %2040 = vmatpush2.msra.mxu0 0.0
        %2041 = vmatprep.subr.mxu0 0.0
        %2042 = vmatpush2.msra.mxu0 0.0
        %2043 = vmatprep.subr.mxu0 0.0
        %2044 = vmatpush2.msra.mxu0 0.0
        %2045 = vmatprep.subr.mxu0 0.0
        %2046 = vmatpush2.msra.mxu0 0.0
        %2047 = vmatprep.subr.mxu0 0.0
        %2048 = vmatpush2.msra.mxu0 0.0
        %2049 = vmatprep.subr.mxu0 0.0
        %2050 = vmatpush2.msra.mxu0 0.0
        %2051 = vmatprep.subr.mxu0 0.0
        %2052 = vmatpush2.msra.mxu0 0.0
        %2053 = vmatprep.subr.mxu0 0.0
        %2054 = vmatpush2.msra.mxu0 0.0
        %2055 = vmatprep.subr.mxu0 0.0
        %2056 = vmatpush2.msra.mxu0 0.0
        %2057 = vmatprep.subr.mxu0 0.0
        %2058 = vmatpush2.msra.mxu0 0.0
        %2059 = vmatprep.mubr.f32.mxu0 0.0
        %2060 = vmatmul.mubr.f32.gmra.mxu0 %v1993
        %v2061 = vpop.f32.mrf.mxu0
        %v2062 = vadd.f32 0.0, %v2061
        %v2063 = vpop.f32.mrf.mxu0
        %2064 = vdwg.mxu0
        %v2065 = vrcp.pop %v1987
        %v2066 = vmul.f32 %v2062, %v2065
        %2068 = vrot.lane.b32.xlu0 %v2066, 64
        %v2069 = vpop.permute.xlu0 %2068
        %2071 = vst.msk [vmem:[#allocation2 + $0x8] sm:$0xff] %vm1738, %v2069
        %v2073 = vsel %vm1405, %v971, 0
        %v2076 = vsel %vm1405, %v1115, 0
        %2078 = vmatprep.subr.mxu0 0.0
        %2079 = vmatpush1.xpose.msra.mxu0 0.0
        %2080 = vmatprep.subr.mxu0 0.0
        %2081 = vmatpush1.xpose.msra.mxu0 0.0
        %2082 = vmatprep.subr.mxu0 0.0
        %2083 = vmatpush1.xpose.msra.mxu0 0.0
        %2084 = vmatprep.subr.mxu0 0.0
        %2085 = vmatpush1.xpose.msra.mxu0 0.0
        %2086 = vmatprep.subr.mxu0 0.0
        %2087 = vmatpush1.xpose.msra.mxu0 0.0
        %2088 = vmatprep.subr.mxu0 0.0
        %2089 = vmatpush1.xpose.msra.mxu0 0.0
        %2090 = vmatprep.subr.mxu0 0.0
        %2091 = vmatpush1.xpose.msra.mxu0 0.0
        %2092 = vmatprep.subr.mxu0 0.0
        %2093 = vmatpush1.xpose.msra.mxu0 0.0
        %2094 = vmatprep.subr.mxu0 0.0
        %2095 = vmatpush1.xpose.msra.mxu0 0.0
        %2096 = vmatprep.subr.mxu0 0.0
        %2097 = vmatpush1.xpose.msra.mxu0 0.0
        %2098 = vmatprep.subr.mxu0 0.0
        %2099 = vmatpush1.xpose.msra.mxu0 0.0
        %2100 = vmatprep.subr.mxu0 0.0
        %2101 = vmatpush1.xpose.msra.mxu0 0.0
        %2102 = vmatprep.subr.mxu0 0.0
        %2103 = vmatpush1.xpose.msra.mxu0 0.0
        %2104 = vmatprep.subr.mxu0 0.0
        %2105 = vmatpush1.xpose.msra.mxu0 0.0
        %2106 = vmatprep.subr.mxu0 0.0
        %2107 = vmatpush1.xpose.msra.mxu0 0.0
        %2108 = vmatprep.subr.mxu0 0.0
        %2109 = vmatpush1.xpose.msra.mxu0 %v2076
        %2110 = vmatprep.subr.mxu0 0.0
        %2111 = vmatpush2.xpose.msra.mxu0 0.0
        %2112 = vmatprep.subr.mxu0 0.0
        %2113 = vmatpush2.xpose.msra.mxu0 0.0
        %2114 = vmatprep.subr.mxu0 0.0
        %2115 = vmatpush2.xpose.msra.mxu0 0.0
        %2116 = vmatprep.subr.mxu0 0.0
        %2117 = vmatpush2.xpose.msra.mxu0 0.0
        %2118 = vmatprep.subr.mxu0 0.0
        %2119 = vmatpush2.xpose.msra.mxu0 0.0
        %2120 = vmatprep.subr.mxu0 0.0
        %2121 = vmatpush2.xpose.msra.mxu0 0.0
        %2122 = vmatprep.subr.mxu0 0.0
        %2123 = vmatpush2.xpose.msra.mxu0 0.0
        %2124 = vmatprep.subr.mxu0 0.0
        %2125 = vmatpush2.xpose.msra.mxu0 0.0
        %2126 = vmatprep.subr.mxu0 0.0
        %2127 = vmatpush2.xpose.msra.mxu0 0.0
        %2128 = vmatprep.subr.mxu0 0.0
        %2129 = vmatpush2.xpose.msra.mxu0 0.0
        %2130 = vmatprep.subr.mxu0 0.0
        %2131 = vmatpush2.xpose.msra.mxu0 0.0
        %2132 = vmatprep.subr.mxu0 0.0
        %2133 = vmatpush2.xpose.msra.mxu0 0.0
        %2134 = vmatprep.subr.mxu0 0.0
        %2135 = vmatpush2.xpose.msra.mxu0 0.0
        %2136 = vmatprep.subr.mxu0 0.0
        %2137 = vmatpush2.xpose.msra.mxu0 0.0
        %2138 = vmatprep.subr.mxu0 0.0
        %2139 = vmatpush2.xpose.msra.mxu0 0.0
        %2140 = vmatprep.subr.mxu0 0.0
        %2141 = vmatpush2.xpose.msra.mxu0 0.0
        %2142 = vmatprep.mubr.f32.mxu0 0.0
        %2143 = vmatmul.mubr.f32.gmra.mxu0 %v2073
        %v2144 = vpop.f32.mrf.mxu0
        %v2145 = vadd.f32 %v1404, %v2144
        %v2146 = vpop.f32.mrf.mxu0
        %2147 = vdwg.mxu0
        %v2148 = vsel %vm1482, %v2145, -inf
        %2149 = vmax.xlane.f32.xlu0 %v2148
        %v2150 = vpop.xlane.xlu0 %2149
        %v2151 = vsub.f32 %v2145, %v2150
        %v2152 = vmul.f32 %v2151, 1.442695
        %v2153 = vpow.pop %v2152
        %v2154 = vsel %vm1482, %v2153, 0.0
        %2155 = vadd.xlane.f32.xlu0 %v2154
        %v2156 = vpop.xlane.xlu0 %2155
        %v2158 = vsel %vm1482, %v2153, 0
        %2160 = vmatprep.subr.mxu0 0.0
        %2161 = vmatpush1.msra.mxu0 0.0
        %2162 = vmatprep.subr.mxu0 0.0
        %2163 = vmatpush1.msra.mxu0 0.0
        %2164 = vmatprep.subr.mxu0 0.0
        %2165 = vmatpush1.msra.mxu0 0.0
        %2166 = vmatprep.subr.mxu0 0.0
        %2167 = vmatpush1.msra.mxu0 0.0
        %2168 = vmatprep.subr.mxu0 0.0
        %2169 = vmatpush1.msra.mxu0 0.0
        %2170 = vmatprep.subr.mxu0 0.0
        %2171 = vmatpush1.msra.mxu0 0.0
        %2172 = vmatprep.subr.mxu0 0.0
        %2173 = vmatpush1.msra.mxu0 0.0
        %2174 = vmatprep.subr.mxu0 0.0
        %2175 = vmatpush1.msra.mxu0 0.0
        %2176 = vmatprep.subr.mxu0 0.0
        %2177 = vmatpush1.msra.mxu0 0.0
        %2178 = vmatprep.subr.mxu0 0.0
        %2179 = vmatpush1.msra.mxu0 0.0
        %2180 = vmatprep.subr.mxu0 0.0
        %2181 = vmatpush1.msra.mxu0 0.0
        %2182 = vmatprep.subr.mxu0 0.0
        %2183 = vmatpush1.msra.mxu0 0.0
        %2184 = vmatprep.subr.mxu0 0.0
        %2185 = vmatpush1.msra.mxu0 0.0
        %2186 = vmatprep.subr.mxu0 0.0
        %2187 = vmatpush1.msra.mxu0 0.0
        %2188 = vmatprep.subr.mxu0 0.0
        %2189 = vmatpush1.msra.mxu0 0.0
        %2190 = vmatprep.subr.mxu0 0.0
        %2191 = vmatpush1.msra.mxu0 %v1396
        %2192 = vmatprep.subr.mxu0 0.0
        %2193 = vmatpush2.msra.mxu0 0.0
        %2194 = vmatprep.subr.mxu0 0.0
        %2195 = vmatpush2.msra.mxu0 0.0
        %2196 = vmatprep.subr.mxu0 0.0
        %2197 = vmatpush2.msra.mxu0 0.0
        %2198 = vmatprep.subr.mxu0 0.0
        %2199 = vmatpush2.msra.mxu0 0.0
        %2200 = vmatprep.subr.mxu0 0.0
        %2201 = vmatpush2.msra.mxu0 0.0
        %2202 = vmatprep.subr.mxu0 0.0
        %2203 = vmatpush2.msra.mxu0 0.0
        %2204 = vmatprep.subr.mxu0 0.0
        %2205 = vmatpush2.msra.mxu0 0.0
        %2206 = vmatprep.subr.mxu0 0.0
        %2207 = vmatpush2.msra.mxu0 0.0
        %2208 = vmatprep.subr.mxu0 0.0
        %2209 = vmatpush2.msra.mxu0 0.0
        %2210 = vmatprep.subr.mxu0 0.0
        %2211 = vmatpush2.msra.mxu0 0.0
        %2212 = vmatprep.subr.mxu0 0.0
        %2213 = vmatpush2.msra.mxu0 0.0
        %2214 = vmatprep.subr.mxu0 0.0
        %2215 = vmatpush2.msra.mxu0 0.0
        %2216 = vmatprep.subr.mxu0 0.0
        %2217 = vmatpush2.msra.mxu0 0.0
        %2218 = vmatprep.subr.mxu0 0.0
        %2219 = vmatpush2.msra.mxu0 0.0
        %2220 = vmatprep.subr.mxu0 0.0
        %2221 = vmatpush2.msra.mxu0 0.0
        %2222 = vmatprep.subr.mxu0 0.0
        %2223 = vmatpush2.msra.mxu0 0.0
        %2224 = vmatprep.mubr.f32.mxu0 0.0
        %2225 = vmatmul.mubr.f32.gmra.mxu0 %v2158
        %v2226 = vpop.f32.mrf.mxu0
        %v2227 = vadd.f32 0.0, %v2226
        %v2228 = vpop.f32.mrf.mxu0
        %2229 = vdwg.mxu0
        %v2230 = vrcp.pop %v2156
        %v2231 = vmul.f32 %v2227, %v2230
        %2232 = vst.msk [vmem:[#allocation2 + $0x10] sm:$0xff] %vm1405, %v2231
        %2233 = vrot.lane.b32.xlu0 %v971, 64
        %v2234 = vpop.permute.xlu0 %2233
        %2235 = vrot.lane.b32.xlu0 %v1115, 64
        %v2236 = vpop.permute.xlu0 %2235
        %v2237 = vsel %vm1405, %v2234, 0
        %v2239 = vsel %vm1405, %v2236, 0
        %2241 = vmatprep.subr.mxu0 0.0
        %2242 = vmatpush1.xpose.msra.mxu0 0.0
        %2243 = vmatprep.subr.mxu0 0.0
        %2244 = vmatpush1.xpose.msra.mxu0 0.0
        %2245 = vmatprep.subr.mxu0 0.0
        %2246 = vmatpush1.xpose.msra.mxu0 0.0
        %2247 = vmatprep.subr.mxu0 0.0
        %2248 = vmatpush1.xpose.msra.mxu0 0.0
        %2249 = vmatprep.subr.mxu0 0.0
        %2250 = vmatpush1.xpose.msra.mxu0 0.0
        %2251 = vmatprep.subr.mxu0 0.0
        %2252 = vmatpush1.xpose.msra.mxu0 0.0
        %2253 = vmatprep.subr.mxu0 0.0
        %2254 = vmatpush1.xpose.msra.mxu0 0.0
        %2255 = vmatprep.subr.mxu0 0.0
        %2256 = vmatpush1.xpose.msra.mxu0 0.0
        %2257 = vmatprep.subr.mxu0 0.0
        %2258 = vmatpush1.xpose.msra.mxu0 0.0
        %2259 = vmatprep.subr.mxu0 0.0
        %2260 = vmatpush1.xpose.msra.mxu0 0.0
        %2261 = vmatprep.subr.mxu0 0.0
        %2262 = vmatpush1.xpose.msra.mxu0 0.0
        %2263 = vmatprep.subr.mxu0 0.0
        %2264 = vmatpush1.xpose.msra.mxu0 0.0
        %2265 = vmatprep.subr.mxu0 0.0
        %2266 = vmatpush1.xpose.msra.mxu0 0.0
        %2267 = vmatprep.subr.mxu0 0.0
        %2268 = vmatpush1.xpose.msra.mxu0 0.0
        %2269 = vmatprep.subr.mxu0 0.0
        %2270 = vmatpush1.xpose.msra.mxu0 0.0
        %2271 = vmatprep.subr.mxu0 0.0
        %2272 = vmatpush1.xpose.msra.mxu0 %v2239
        %2273 = vmatprep.subr.mxu0 0.0
        %2274 = vmatpush2.xpose.msra.mxu0 0.0
        %2275 = vmatprep.subr.mxu0 0.0
        %2276 = vmatpush2.xpose.msra.mxu0 0.0
        %2277 = vmatprep.subr.mxu0 0.0
        %2278 = vmatpush2.xpose.msra.mxu0 0.0
        %2279 = vmatprep.subr.mxu0 0.0
        %2280 = vmatpush2.xpose.msra.mxu0 0.0
        %2281 = vmatprep.subr.mxu0 0.0
        %2282 = vmatpush2.xpose.msra.mxu0 0.0
        %2283 = vmatprep.subr.mxu0 0.0
        %2284 = vmatpush2.xpose.msra.mxu0 0.0
        %2285 = vmatprep.subr.mxu0 0.0
        %2286 = vmatpush2.xpose.msra.mxu0 0.0
        %2287 = vmatprep.subr.mxu0 0.0
        %2288 = vmatpush2.xpose.msra.mxu0 0.0
        %2289 = vmatprep.subr.mxu0 0.0
        %2290 = vmatpush2.xpose.msra.mxu0 0.0
        %2291 = vmatprep.subr.mxu0 0.0
        %2292 = vmatpush2.xpose.msra.mxu0 0.0
        %2293 = vmatprep.subr.mxu0 0.0
        %2294 = vmatpush2.xpose.msra.mxu0 0.0
        %2295 = vmatprep.subr.mxu0 0.0
        %2296 = vmatpush2.xpose.msra.mxu0 0.0
        %2297 = vmatprep.subr.mxu0 0.0
        %2298 = vmatpush2.xpose.msra.mxu0 0.0
        %2299 = vmatprep.subr.mxu0 0.0
        %2300 = vmatpush2.xpose.msra.mxu0 0.0
        %2301 = vmatprep.subr.mxu0 0.0
        %2302 = vmatpush2.xpose.msra.mxu0 0.0
        %2303 = vmatprep.subr.mxu0 0.0
        %2304 = vmatpush2.xpose.msra.mxu0 0.0
        %2305 = vmatprep.mubr.f32.mxu0 0.0
        %2306 = vmatmul.mubr.f32.gmra.mxu0 %v2237
        %v2307 = vpop.f32.mrf.mxu0
        %v2308 = vadd.f32 %v1404, %v2307
        %v2309 = vpop.f32.mrf.mxu0
        %2310 = vdwg.mxu0
        %v2311 = vsel %vm1482, %v2308, -inf
        %2312 = vmax.xlane.f32.xlu0 %v2311
        %v2313 = vpop.xlane.xlu0 %2312
        %v2314 = vsub.f32 %v2308, %v2313
        %v2315 = vmul.f32 %v2314, 1.442695
        %v2316 = vpow.pop %v2315
        %v2317 = vsel %vm1482, %v2316, 0.0
        %2318 = vadd.xlane.f32.xlu0 %v2317
        %v2319 = vpop.xlane.xlu0 %2318
        %2321 = vrot.lane.b32.xlu0 %v1396, 64
        %v2322 = vpop.permute.xlu0 %2321
        %v2325 = vsel %vm1482, %v2316, 0
        %2327 = vmatprep.subr.mxu0 0.0
        %2328 = vmatpush1.msra.mxu0 0.0
        %2329 = vmatprep.subr.mxu0 0.0
        %2330 = vmatpush1.msra.mxu0 0.0
        %2331 = vmatprep.subr.mxu0 0.0
        %2332 = vmatpush1.msra.mxu0 0.0
        %2333 = vmatprep.subr.mxu0 0.0
        %2334 = vmatpush1.msra.mxu0 0.0
        %2335 = vmatprep.subr.mxu0 0.0
        %2336 = vmatpush1.msra.mxu0 0.0
        %2337 = vmatprep.subr.mxu0 0.0
        %2338 = vmatpush1.msra.mxu0 0.0
        %2339 = vmatprep.subr.mxu0 0.0
        %2340 = vmatpush1.msra.mxu0 0.0
        %2341 = vmatprep.subr.mxu0 0.0
        %2342 = vmatpush1.msra.mxu0 0.0
        %2343 = vmatprep.subr.mxu0 0.0
        %2344 = vmatpush1.msra.mxu0 0.0
        %2345 = vmatprep.subr.mxu0 0.0
        %2346 = vmatpush1.msra.mxu0 0.0
        %2347 = vmatprep.subr.mxu0 0.0
        %2348 = vmatpush1.msra.mxu0 0.0
        %2349 = vmatprep.subr.mxu0 0.0
        %2350 = vmatpush1.msra.mxu0 0.0
        %2351 = vmatprep.subr.mxu0 0.0
        %2352 = vmatpush1.msra.mxu0 0.0
        %2353 = vmatprep.subr.mxu0 0.0
        %2354 = vmatpush1.msra.mxu0 0.0
        %2355 = vmatprep.subr.mxu0 0.0
        %2356 = vmatpush1.msra.mxu0 0.0
        %2357 = vmatprep.subr.mxu0 0.0
        %2358 = vmatpush1.msra.mxu0 %v2322
        %2359 = vmatprep.subr.mxu0 0.0
        %2360 = vmatpush2.msra.mxu0 0.0
        %2361 = vmatprep.subr.mxu0 0.0
        %2362 = vmatpush2.msra.mxu0 0.0
        %2363 = vmatprep.subr.mxu0 0.0
        %2364 = vmatpush2.msra.mxu0 0.0
        %2365 = vmatprep.subr.mxu0 0.0
        %2366 = vmatpush2.msra.mxu0 0.0
        %2367 = vmatprep.subr.mxu0 0.0
        %2368 = vmatpush2.msra.mxu0 0.0
        %2369 = vmatprep.subr.mxu0 0.0
        %2370 = vmatpush2.msra.mxu0 0.0
        %2371 = vmatprep.subr.mxu0 0.0
        %2372 = vmatpush2.msra.mxu0 0.0
        %2373 = vmatprep.subr.mxu0 0.0
        %2374 = vmatpush2.msra.mxu0 0.0
        %2375 = vmatprep.subr.mxu0 0.0
        %2376 = vmatpush2.msra.mxu0 0.0
        %2377 = vmatprep.subr.mxu0 0.0
        %2378 = vmatpush2.msra.mxu0 0.0
        %2379 = vmatprep.subr.mxu0 0.0
        %2380 = vmatpush2.msra.mxu0 0.0
        %2381 = vmatprep.subr.mxu0 0.0
        %2382 = vmatpush2.msra.mxu0 0.0
        %2383 = vmatprep.subr.mxu0 0.0
        %2384 = vmatpush2.msra.mxu0 0.0
        %2385 = vmatprep.subr.mxu0 0.0
        %2386 = vmatpush2.msra.mxu0 0.0
        %2387 = vmatprep.subr.mxu0 0.0
        %2388 = vmatpush2.msra.mxu0 0.0
        %2389 = vmatprep.subr.mxu0 0.0
        %2390 = vmatpush2.msra.mxu0 0.0
        %2391 = vmatprep.mubr.f32.mxu0 0.0
        %2392 = vmatmul.mubr.f32.gmra.mxu0 %v2325
        %v2393 = vpop.f32.mrf.mxu0
        %v2394 = vadd.f32 0.0, %v2393
        %v2395 = vpop.f32.mrf.mxu0
        %2396 = vdwg.mxu0
        %v2397 = vrcp.pop %v2319
        %v2398 = vmul.f32 %v2394, %v2397
        %2400 = vrot.lane.b32.xlu0 %v2398, 64
        %v2401 = vpop.permute.xlu0 %2400
        %2403 = vst.msk [vmem:[#allocation2 + $0x10] sm:$0xff] %vm1738, %v2401
        %v2404 = vld [vmem:[#allocation2] sm:$0xff]
        %v2405 = vld [vmem:[#allocation2 + $0x8] sm:$0xff]
        %v2406 = vld [vmem:[#allocation2 + $0x10] sm:$0xff]
        %v2407 = vld [vmem:[#allocation8] sm:$0xff]
        %v2408 = vld [vmem:[#allocation8 + $0x8] sm:$0xff]
        %v2409 = vld [vmem:[#allocation8 + $0x10] sm:$0xff]
        %v2410 = vld [vmem:[#allocation8 + $0x18] sm:$0xff]
        %v2411 = vld [vmem:[#allocation8 + $0x20] sm:$0xff]
        %v2412 = vld [vmem:[#allocation8 + $0x28] sm:$0xff]
        %v2413 = vld [vmem:[#allocation8 + $0x30] sm:$0xff]
        %v2414 = vld [vmem:[#allocation8 + $0x38] sm:$0xff]
        %v2415 = vld [vmem:[#allocation8 + $0x40] sm:$0xff]
        %v2416 = vld [vmem:[#allocation8 + $0x48] sm:$0xff]
        %v2417 = vld [vmem:[#allocation8 + $0x50] sm:$0xff]
        %v2418 = vld [vmem:[#allocation8 + $0x58] sm:$0xff]
        %v2419 = vld [vmem:[#allocation8 + $0x60] sm:$0xff]
        %v2420 = vld [vmem:[#allocation8 + $0x68] sm:$0xff]
        %v2421 = vld [vmem:[#allocation8 + $0x70] sm:$0xff]
        %v2422 = vld [vmem:[#allocation8 + $0x78] sm:$0xff]
        %v2423 = vld [vmem:[#allocation8 + $0x80] sm:$0xff]
        %v2424 = vld [vmem:[#allocation8 + $0x88] sm:$0xff]
        %v2425 = vld [vmem:[#allocation8 + $0x90] sm:$0xff]
        %v2426 = vld [vmem:[#allocation8 + $0x98] sm:$0xff]
        %v2427 = vld [vmem:[#allocation8 + $0xa0] sm:$0xff]
        %v2428 = vld [vmem:[#allocation8 + $0xa8] sm:$0xff]
        %v2429 = vld [vmem:[#allocation8 + $0xb0] sm:$0xff]
        %v2430 = vld [vmem:[#allocation8 + $0xb8] sm:$0xff]
        %v2431 = vld [vmem:[#allocation8 + $0xc0] sm:$0xff]
        %v2432 = vld [vmem:[#allocation8 + $0xc8] sm:$0xff]
        %v2433 = vld [vmem:[#allocation8 + $0xd0] sm:$0xff]
        %v2434 = vld [vmem:[#allocation8 + $0xd8] sm:$0xff]
        %v2435 = vld [vmem:[#allocation8 + $0xe0] sm:$0xff]
        %v2436 = vld [vmem:[#allocation8 + $0xe8] sm:$0xff]
        %v2437 = vld [vmem:[#allocation8 + $0xf0] sm:$0xff]
        %v2438 = vld [vmem:[#allocation8 + $0xf8] sm:$0xff]
        %v2439 = vld [vmem:[#allocation8 + $0x100] sm:$0xff]
        %v2440 = vld [vmem:[#allocation8 + $0x108] sm:$0xff]
        %v2441 = vld [vmem:[#allocation8 + $0x110] sm:$0xff]
        %v2442 = vld [vmem:[#allocation8 + $0x118] sm:$0xff]
        %v2443 = vld [vmem:[#allocation8 + $0x120] sm:$0xff]
        %v2444 = vld [vmem:[#allocation8 + $0x128] sm:$0xff]
        %v2445 = vld [vmem:[#allocation8 + $0x130] sm:$0xff]
        %v2446 = vld [vmem:[#allocation8 + $0x138] sm:$0xff]
        %v2447 = vld [vmem:[#allocation8 + $0x140] sm:$0xff]
        %v2448 = vld [vmem:[#allocation8 + $0x148] sm:$0xff]
        %v2449 = vld [vmem:[#allocation8 + $0x150] sm:$0xff]
        %v2450 = vld [vmem:[#allocation8 + $0x158] sm:$0xff]
        %v2451 = vld [vmem:[#allocation8 + $0x160] sm:$0xff]
        %v2452 = vld [vmem:[#allocation8 + $0x168] sm:$0xff]
        %v2453 = vld [vmem:[#allocation8 + $0x170] sm:$0xff]
        %v2454 = vld [vmem:[#allocation8 + $0x178] sm:$0xff]
        %v2455 = vld [vmem:[#allocation8 + $0x180] sm:$0xff]
        %v2456 = vld [vmem:[#allocation8 + $0x188] sm:$0xff]
        %v2457 = vld [vmem:[#allocation8 + $0x190] sm:$0xff]
        %v2458 = vld [vmem:[#allocation8 + $0x198] sm:$0xff]
        %v2459 = vld [vmem:[#allocation8 + $0x1a0] sm:$0xff]
        %v2460 = vld [vmem:[#allocation8 + $0x1a8] sm:$0xff]
        %v2461 = vld [vmem:[#allocation8 + $0x1b0] sm:$0xff]
        %v2462 = vld [vmem:[#allocation8 + $0x1b8] sm:$0xff]
        %v2463 = vld [vmem:[#allocation8 + $0x1c0] sm:$0xff]
        %v2464 = vld [vmem:[#allocation8 + $0x1c8] sm:$0xff]
        %v2465 = vld [vmem:[#allocation8 + $0x1d0] sm:$0xff]
        %v2466 = vld [vmem:[#allocation8 + $0x1d8] sm:$0xff]
        %v2467 = vld [vmem:[#allocation8 + $0x1e0] sm:$0xff]
        %v2468 = vld [vmem:[#allocation8 + $0x1e8] sm:$0xff]
        %v2469 = vld [vmem:[#allocation8 + $0x1f0] sm:$0xff]
        %v2470 = vld [vmem:[#allocation8 + $0x1f8] sm:$0xff]
        %v2471 = vld [vmem:[#allocation8 + $0x200] sm:$0xff]
        %v2472 = vld [vmem:[#allocation8 + $0x208] sm:$0xff]
        %v2473 = vld [vmem:[#allocation8 + $0x210] sm:$0xff]
        %v2474 = vld [vmem:[#allocation8 + $0x218] sm:$0xff]
        %v2475 = vld [vmem:[#allocation8 + $0x220] sm:$0xff]
        %v2476 = vld [vmem:[#allocation8 + $0x228] sm:$0xff]
        %v2477 = vld [vmem:[#allocation8 + $0x230] sm:$0xff]
        %v2478 = vld [vmem:[#allocation8 + $0x238] sm:$0xff]
        %v2479 = vld [vmem:[#allocation8 + $0x240] sm:$0xff]
        %v2480 = vld [vmem:[#allocation8 + $0x248] sm:$0xff]
        %v2481 = vld [vmem:[#allocation8 + $0x250] sm:$0xff]
        %v2482 = vld [vmem:[#allocation8 + $0x258] sm:$0xff]
        %v2483 = vld [vmem:[#allocation8 + $0x260] sm:$0xff]
        %v2484 = vld [vmem:[#allocation8 + $0x268] sm:$0xff]
        %v2485 = vld [vmem:[#allocation8 + $0x270] sm:$0xff]
        %v2486 = vld [vmem:[#allocation8 + $0x278] sm:$0xff]
        %v2487 = vld [vmem:[#allocation8 + $0x280] sm:$0xff]
        %v2488 = vld [vmem:[#allocation8 + $0x288] sm:$0xff]
        %v2489 = vld [vmem:[#allocation8 + $0x290] sm:$0xff]
        %v2490 = vld [vmem:[#allocation8 + $0x298] sm:$0xff]
        %v2491 = vld [vmem:[#allocation8 + $0x2a0] sm:$0xff]
        %v2492 = vld [vmem:[#allocation8 + $0x2a8] sm:$0xff]
        %v2493 = vld [vmem:[#allocation8 + $0x2b0] sm:$0xff]
        %v2494 = vld [vmem:[#allocation8 + $0x2b8] sm:$0xff]
        %v2495 = vld [vmem:[#allocation8 + $0x2c0] sm:$0xff]
        %v2496 = vld [vmem:[#allocation8 + $0x2c8] sm:$0xff]
        %v2497 = vld [vmem:[#allocation8 + $0x2d0] sm:$0xff]
        %v2498 = vld [vmem:[#allocation8 + $0x2d8] sm:$0xff]
        %v2499 = vld [vmem:[#allocation8 + $0x2e0] sm:$0xff]
        %v2500 = vld [vmem:[#allocation8 + $0x2e8] sm:$0xff]
        %v2501 = vld [vmem:[#allocation8 + $0x2f0] sm:$0xff]
        %v2502 = vld [vmem:[#allocation8 + $0x2f8] sm:$0xff]
        %v2503 = vld [vmem:[#allocation8 + $0x300] sm:$0xff]
        %v2504 = vld [vmem:[#allocation8 + $0x308] sm:$0xff]
        %v2505 = vld [vmem:[#allocation8 + $0x310] sm:$0xff]
        %v2506 = vld [vmem:[#allocation8 + $0x318] sm:$0xff]
        %v2507 = vld [vmem:[#allocation8 + $0x320] sm:$0xff]
        %v2508 = vld [vmem:[#allocation8 + $0x328] sm:$0xff]
        %v2509 = vld [vmem:[#allocation8 + $0x330] sm:$0xff]
        %v2510 = vld [vmem:[#allocation8 + $0x338] sm:$0xff]
        %v2511 = vld [vmem:[#allocation8 + $0x340] sm:$0xff]
        %v2512 = vld [vmem:[#allocation8 + $0x348] sm:$0xff]
        %v2513 = vld [vmem:[#allocation8 + $0x350] sm:$0xff]
        %v2514 = vld [vmem:[#allocation8 + $0x358] sm:$0xff]
        %v2515 = vld [vmem:[#allocation8 + $0x360] sm:$0xff]
        %v2516 = vld [vmem:[#allocation8 + $0x368] sm:$0xff]
        %v2517 = vld [vmem:[#allocation8 + $0x370] sm:$0xff]
        %v2518 = vld [vmem:[#allocation8 + $0x378] sm:$0xff]
        %v2519 = vld [vmem:[#allocation8 + $0x380] sm:$0xff]
        %v2520 = vld [vmem:[#allocation8 + $0x388] sm:$0xff]
        %v2521 = vld [vmem:[#allocation8 + $0x390] sm:$0xff]
        %v2522 = vld [vmem:[#allocation8 + $0x398] sm:$0xff]
        %v2523 = vld [vmem:[#allocation8 + $0x3a0] sm:$0xff]
        %v2524 = vld [vmem:[#allocation8 + $0x3a8] sm:$0xff]
        %v2525 = vld [vmem:[#allocation8 + $0x3b0] sm:$0xff]
        %v2526 = vld [vmem:[#allocation8 + $0x3b8] sm:$0xff]
        %v2527 = vld [vmem:[#allocation8 + $0x3c0] sm:$0xff]
        %v2528 = vld [vmem:[#allocation8 + $0x3c8] sm:$0xff]
        %v2529 = vld [vmem:[#allocation8 + $0x3d0] sm:$0xff]
        %v2530 = vld [vmem:[#allocation8 + $0x3d8] sm:$0xff]
        %v2531 = vld [vmem:[#allocation8 + $0x3e0] sm:$0xff]
        %v2532 = vld [vmem:[#allocation8 + $0x3e8] sm:$0xff]
        %v2533 = vld [vmem:[#allocation8 + $0x3f0] sm:$0xff]
        %v2534 = vld [vmem:[#allocation8 + $0x3f8] sm:$0xff]
        %v2535 = vld [vmem:[#allocation8 + $0x400] sm:$0xff]
        %v2536 = vld [vmem:[#allocation8 + $0x408] sm:$0xff]
        %v2537 = vld [vmem:[#allocation8 + $0x410] sm:$0xff]
        %v2538 = vld [vmem:[#allocation8 + $0x418] sm:$0xff]
        %v2539 = vld [vmem:[#allocation8 + $0x420] sm:$0xff]
        %v2540 = vld [vmem:[#allocation8 + $0x428] sm:$0xff]
        %v2541 = vld [vmem:[#allocation8 + $0x430] sm:$0xff]
        %v2542 = vld [vmem:[#allocation8 + $0x438] sm:$0xff]
        %v2543 = vld [vmem:[#allocation8 + $0x440] sm:$0xff]
        %v2544 = vld [vmem:[#allocation8 + $0x448] sm:$0xff]
        %v2545 = vld [vmem:[#allocation8 + $0x450] sm:$0xff]
        %v2546 = vld [vmem:[#allocation8 + $0x458] sm:$0xff]
        %v2547 = vld [vmem:[#allocation8 + $0x460] sm:$0xff]
        %v2548 = vld [vmem:[#allocation8 + $0x468] sm:$0xff]
        %v2549 = vld [vmem:[#allocation8 + $0x470] sm:$0xff]
        %v2550 = vld [vmem:[#allocation8 + $0x478] sm:$0xff]
        %v2551 = vld [vmem:[#allocation9] sm:$0x7]
        %v2553 = vlaneseq
        %v2554 = vshrl.u32 %v2553, 7
        %v2555 = vsub.s32 0, %v2554
        %v2556 = vrot.slane %v2551, %v2555
        %v2557 = vlaneseq
        %v2558 = vshrl.u32 %v2557, 7
        %v2559 = vsub.s32 1, %v2558
        %v2560 = vrot.slane %v2551, %v2559
        %v2561 = vlaneseq
        %v2562 = vshrl.u32 %v2561, 7
        %v2563 = vsub.s32 2, %v2562
        %v2564 = vrot.slane %v2551, %v2563
        %2568 = vmatprep.subr.mxu0 %v2453
        %2569 = vmatpush1.msra.mxu0 %v2452
        %2570 = vmatprep.subr.mxu0 %v2450
        %2571 = vmatpush1.msra.mxu0 %v2449
        %2572 = vmatprep.subr.mxu0 %v2447
        %2573 = vmatpush1.msra.mxu0 %v2446
        %2574 = vmatprep.subr.mxu0 %v2444
        %2575 = vmatpush1.msra.mxu0 %v2443
        %2576 = vmatprep.subr.mxu0 %v2441
        %2577 = vmatpush1.msra.mxu0 %v2440
        %2578 = vmatprep.subr.mxu0 %v2438
        %2579 = vmatpush1.msra.mxu0 %v2437
        %2580 = vmatprep.subr.mxu0 %v2435
        %2581 = vmatpush1.msra.mxu0 %v2434
        %2582 = vmatprep.subr.mxu0 %v2432
        %2583 = vmatpush1.msra.mxu0 %v2431
        %2584 = vmatprep.subr.mxu0 %v2429
        %2585 = vmatpush1.msra.mxu0 %v2428
        %2586 = vmatprep.subr.mxu0 %v2426
        %2587 = vmatpush1.msra.mxu0 %v2425
        %2588 = vmatprep.subr.mxu0 %v2423
        %2589 = vmatpush1.msra.mxu0 %v2422
        %2590 = vmatprep.subr.mxu0 %v2420
        %2591 = vmatpush1.msra.mxu0 %v2419
        %2592 = vmatprep.subr.mxu0 %v2417
        %2593 = vmatpush1.msra.mxu0 %v2416
        %2594 = vmatprep.subr.mxu0 %v2414
        %2595 = vmatpush1.msra.mxu0 %v2413
        %2596 = vmatprep.subr.mxu0 %v2411
        %2597 = vmatpush1.msra.mxu0 %v2410
        %2598 = vmatprep.subr.mxu0 %v2408
        %2599 = vmatpush1.msra.mxu0 %v2407
        %2600 = vmatprep.subr.mxu0 %v2501
        %2601 = vmatpush2.msra.mxu0 %v2500
        %2602 = vmatprep.subr.mxu0 %v2498
        %2603 = vmatpush2.msra.mxu0 %v2497
        %2604 = vmatprep.subr.mxu0 %v2495
        %2605 = vmatpush2.msra.mxu0 %v2494
        %2606 = vmatprep.subr.mxu0 %v2492
        %2607 = vmatpush2.msra.mxu0 %v2491
        %2608 = vmatprep.subr.mxu0 %v2489
        %2609 = vmatpush2.msra.mxu0 %v2488
        %2610 = vmatprep.subr.mxu0 %v2486
        %2611 = vmatpush2.msra.mxu0 %v2485
        %2612 = vmatprep.subr.mxu0 %v2483
        %2613 = vmatpush2.msra.mxu0 %v2482
        %2614 = vmatprep.subr.mxu0 %v2480
        %2615 = vmatpush2.msra.mxu0 %v2479
        %2616 = vmatprep.subr.mxu0 %v2477
        %2617 = vmatpush2.msra.mxu0 %v2476
        %2618 = vmatprep.subr.mxu0 %v2474
        %2619 = vmatpush2.msra.mxu0 %v2473
        %2620 = vmatprep.subr.mxu0 %v2471
        %2621 = vmatpush2.msra.mxu0 %v2470
        %2622 = vmatprep.subr.mxu0 %v2468
        %2623 = vmatpush2.msra.mxu0 %v2467
        %2624 = vmatprep.subr.mxu0 %v2465
        %2625 = vmatpush2.msra.mxu0 %v2464
        %2626 = vmatprep.subr.mxu0 %v2462
        %2627 = vmatpush2.msra.mxu0 %v2461
        %2628 = vmatprep.subr.mxu0 %v2459
        %2629 = vmatpush2.msra.mxu0 %v2458
        %2630 = vmatprep.subr.mxu0 %v2456
        %2631 = vmatpush2.msra.mxu0 %v2455
        %2632 = vmatprep.mubr.f32.mxu0 %v2405
        %2633 = vmatmul.mubr.f32.gmra.mxu0 %v2404
        %v2634 = vpop.f32.mrf.mxu0
        %v2635 = vadd.f32 %v2556, %v2634
        %v2636 = vpop.f32.mrf.mxu0
        %v2637 = vadd.f32 %v2560, %v2636
        %2638 = vdwg.mxu0
        %2639 = vmatprep.subr.mxu0 %v2549
        %2640 = vmatpush1.msra.mxu0 %v2548
        %2641 = vmatprep.subr.mxu0 %v2546
        %2642 = vmatpush1.msra.mxu0 %v2545
        %2643 = vmatprep.subr.mxu0 %v2543
        %2644 = vmatpush1.msra.mxu0 %v2542
        %2645 = vmatprep.subr.mxu0 %v2540
        %2646 = vmatpush1.msra.mxu0 %v2539
        %2647 = vmatprep.subr.mxu0 %v2537
        %2648 = vmatpush1.msra.mxu0 %v2536
        %2649 = vmatprep.subr.mxu0 %v2534
        %2650 = vmatpush1.msra.mxu0 %v2533
        %2651 = vmatprep.subr.mxu0 %v2531
        %2652 = vmatpush1.msra.mxu0 %v2530
        %2653 = vmatprep.subr.mxu0 %v2528
        %2654 = vmatpush1.msra.mxu0 %v2527
        %2655 = vmatprep.subr.mxu0 %v2525
        %2656 = vmatpush1.msra.mxu0 %v2524
        %2657 = vmatprep.subr.mxu0 %v2522
        %2658 = vmatpush1.msra.mxu0 %v2521
        %2659 = vmatprep.subr.mxu0 %v2519
        %2660 = vmatpush1.msra.mxu0 %v2518
        %2661 = vmatprep.subr.mxu0 %v2516
        %2662 = vmatpush1.msra.mxu0 %v2515
        %2663 = vmatprep.subr.mxu0 %v2513
        %2664 = vmatpush1.msra.mxu0 %v2512
        %2665 = vmatprep.subr.mxu0 %v2510
        %2666 = vmatpush1.msra.mxu0 %v2509
        %2667 = vmatprep.subr.mxu0 %v2507
        %2668 = vmatpush1.msra.mxu0 %v2506
        %2669 = vmatprep.subr.mxu0 %v2504
        %2670 = vmatpush1.msra.mxu0 %v2503
        %2671 = vmatprep.subr.mxu0 0.0
        %2672 = vmatpush2.msra.mxu0 0.0
        %2673 = vmatprep.subr.mxu0 0.0
        %2674 = vmatpush2.msra.mxu0 0.0
        %2675 = vmatprep.subr.mxu0 0.0
        %2676 = vmatpush2.msra.mxu0 0.0
        %2677 = vmatprep.subr.mxu0 0.0
        %2678 = vmatpush2.msra.mxu0 0.0
        %2679 = vmatprep.subr.mxu0 0.0
        %2680 = vmatpush2.msra.mxu0 0.0
        %2681 = vmatprep.subr.mxu0 0.0
        %2682 = vmatpush2.msra.mxu0 0.0
        %2683 = vmatprep.subr.mxu0 0.0
        %2684 = vmatpush2.msra.mxu0 0.0
        %2685 = vmatprep.subr.mxu0 0.0
        %2686 = vmatpush2.msra.mxu0 0.0
        %2687 = vmatprep.subr.mxu0 0.0
        %2688 = vmatpush2.msra.mxu0 0.0
        %2689 = vmatprep.subr.mxu0 0.0
        %2690 = vmatpush2.msra.mxu0 0.0
        %2691 = vmatprep.subr.mxu0 0.0
        %2692 = vmatpush2.msra.mxu0 0.0
        %2693 = vmatprep.subr.mxu0 0.0
        %2694 = vmatpush2.msra.mxu0 0.0
        %2695 = vmatprep.subr.mxu0 0.0
        %2696 = vmatpush2.msra.mxu0 0.0
        %2697 = vmatprep.subr.mxu0 0.0
        %2698 = vmatpush2.msra.mxu0 0.0
        %2699 = vmatprep.subr.mxu0 0.0
        %2700 = vmatpush2.msra.mxu0 0.0
        %2701 = vmatprep.subr.mxu0 0.0
        %2702 = vmatpush2.msra.mxu0 0.0
        %2703 = vmatprep.mubr.f32.mxu0 0.0
        %2704 = vmatmul.mubr.f32.gmra.mxu0 %v2406
        %v2705 = vpop.f32.mrf.mxu0
        %v2706 = vadd.f32 %v2635, %v2705
        %v2707 = vpop.f32.mrf.mxu0
        %v2708 = vadd.f32 %v2637, %v2707
        %2709 = vdwg.mxu0
        %2710 = vmatprep.subr.mxu0 0.0
        %2711 = vmatpush1.msra.mxu0 %v2454
        %2712 = vmatprep.subr.mxu0 0.0
        %2713 = vmatpush1.msra.mxu0 %v2451
        %2714 = vmatprep.subr.mxu0 0.0
        %2715 = vmatpush1.msra.mxu0 %v2448
        %2716 = vmatprep.subr.mxu0 0.0
        %2717 = vmatpush1.msra.mxu0 %v2445
        %2718 = vmatprep.subr.mxu0 0.0
        %2719 = vmatpush1.msra.mxu0 %v2442
        %2720 = vmatprep.subr.mxu0 0.0
        %2721 = vmatpush1.msra.mxu0 %v2439
        %2722 = vmatprep.subr.mxu0 0.0
        %2723 = vmatpush1.msra.mxu0 %v2436
        %2724 = vmatprep.subr.mxu0 0.0
        %2725 = vmatpush1.msra.mxu0 %v2433
        %2726 = vmatprep.subr.mxu0 0.0
        %2727 = vmatpush1.msra.mxu0 %v2430
        %2728 = vmatprep.subr.mxu0 0.0
        %2729 = vmatpush1.msra.mxu0 %v2427
        %2730 = vmatprep.subr.mxu0 0.0
        %2731 = vmatpush1.msra.mxu0 %v2424
        %2732 = vmatprep.subr.mxu0 0.0
        %2733 = vmatpush1.msra.mxu0 %v2421
        %2734 = vmatprep.subr.mxu0 0.0
        %2735 = vmatpush1.msra.mxu0 %v2418
        %2736 = vmatprep.subr.mxu0 0.0
        %2737 = vmatpush1.msra.mxu0 %v2415
        %2738 = vmatprep.subr.mxu0 0.0
        %2739 = vmatpush1.msra.mxu0 %v2412
        %2740 = vmatprep.subr.mxu0 0.0
        %2741 = vmatpush1.msra.mxu0 %v2409
        %2742 = vmatprep.subr.mxu0 0.0
        %2743 = vmatpush2.msra.mxu0 %v2502
        %2744 = vmatprep.subr.mxu0 0.0
        %2745 = vmatpush2.msra.mxu0 %v2499
        %2746 = vmatprep.subr.mxu0 0.0
        %2747 = vmatpush2.msra.mxu0 %v2496
        %2748 = vmatprep.subr.mxu0 0.0
        %2749 = vmatpush2.msra.mxu0 %v2493
        %2750 = vmatprep.subr.mxu0 0.0
        %2751 = vmatpush2.msra.mxu0 %v2490
        %2752 = vmatprep.subr.mxu0 0.0
        %2753 = vmatpush2.msra.mxu0 %v2487
        %2754 = vmatprep.subr.mxu0 0.0
        %2755 = vmatpush2.msra.mxu0 %v2484
        %2756 = vmatprep.subr.mxu0 0.0
        %2757 = vmatpush2.msra.mxu0 %v2481
        %2758 = vmatprep.subr.mxu0 0.0
        %2759 = vmatpush2.msra.mxu0 %v2478
        %2760 = vmatprep.subr.mxu0 0.0
        %2761 = vmatpush2.msra.mxu0 %v2475
        %2762 = vmatprep.subr.mxu0 0.0
        %2763 = vmatpush2.msra.mxu0 %v2472
        %2764 = vmatprep.subr.mxu0 0.0
        %2765 = vmatpush2.msra.mxu0 %v2469
        %2766 = vmatprep.subr.mxu0 0.0
        %2767 = vmatpush2.msra.mxu0 %v2466
        %2768 = vmatprep.subr.mxu0 0.0
        %2769 = vmatpush2.msra.mxu0 %v2463
        %2770 = vmatprep.subr.mxu0 0.0
        %2771 = vmatpush2.msra.mxu0 %v2460
        %2772 = vmatprep.subr.mxu0 0.0
        %2773 = vmatpush2.msra.mxu0 %v2457
        %2774 = vmatprep.mubr.f32.mxu0 %v2405
        %2775 = vmatmul.mubr.f32.gmra.mxu0 %v2404
        %v2776 = vpop.f32.mrf.mxu0
        %v2777 = vadd.f32 %v2564, %v2776
        %v2778 = vpop.f32.mrf.mxu0
        %2779 = vdwg.mxu0
        %2780 = vmatprep.subr.mxu0 0.0
        %2781 = vmatpush1.msra.mxu0 %v2550
        %2782 = vmatprep.subr.mxu0 0.0
        %2783 = vmatpush1.msra.mxu0 %v2547
        %2784 = vmatprep.subr.mxu0 0.0
        %2785 = vmatpush1.msra.mxu0 %v2544
        %2786 = vmatprep.subr.mxu0 0.0
        %2787 = vmatpush1.msra.mxu0 %v2541
        %2788 = vmatprep.subr.mxu0 0.0
        %2789 = vmatpush1.msra.mxu0 %v2538
        %2790 = vmatprep.subr.mxu0 0.0
        %2791 = vmatpush1.msra.mxu0 %v2535
        %2792 = vmatprep.subr.mxu0 0.0
        %2793 = vmatpush1.msra.mxu0 %v2532
        %2794 = vmatprep.subr.mxu0 0.0
        %2795 = vmatpush1.msra.mxu0 %v2529
        %2796 = vmatprep.subr.mxu0 0.0
        %2797 = vmatpush1.msra.mxu0 %v2526
        %2798 = vmatprep.subr.mxu0 0.0
        %2799 = vmatpush1.msra.mxu0 %v2523
        %2800 = vmatprep.subr.mxu0 0.0
        %2801 = vmatpush1.msra.mxu0 %v2520
        %2802 = vmatprep.subr.mxu0 0.0
        %2803 = vmatpush1.msra.mxu0 %v2517
        %2804 = vmatprep.subr.mxu0 0.0
        %2805 = vmatpush1.msra.mxu0 %v2514
        %2806 = vmatprep.subr.mxu0 0.0
        %2807 = vmatpush1.msra.mxu0 %v2511
        %2808 = vmatprep.subr.mxu0 0.0
        %2809 = vmatpush1.msra.mxu0 %v2508
        %2810 = vmatprep.subr.mxu0 0.0
        %2811 = vmatpush1.msra.mxu0 %v2505
        %2812 = vmatprep.subr.mxu0 0.0
        %2813 = vmatpush2.msra.mxu0 0.0
        %2814 = vmatprep.subr.mxu0 0.0
        %2815 = vmatpush2.msra.mxu0 0.0
        %2816 = vmatprep.subr.mxu0 0.0
        %2817 = vmatpush2.msra.mxu0 0.0
        %2818 = vmatprep.subr.mxu0 0.0
        %2819 = vmatpush2.msra.mxu0 0.0
        %2820 = vmatprep.subr.mxu0 0.0
        %2821 = vmatpush2.msra.mxu0 0.0
        %2822 = vmatprep.subr.mxu0 0.0
        %2823 = vmatpush2.msra.mxu0 0.0
        %2824 = vmatprep.subr.mxu0 0.0
        %2825 = vmatpush2.msra.mxu0 0.0
        %2826 = vmatprep.subr.mxu0 0.0
        %2827 = vmatpush2.msra.mxu0 0.0
        %2828 = vmatprep.subr.mxu0 0.0
        %2829 = vmatpush2.msra.mxu0 0.0
        %2830 = vmatprep.subr.mxu0 0.0
        %2831 = vmatpush2.msra.mxu0 0.0
        %2832 = vmatprep.subr.mxu0 0.0
        %2833 = vmatpush2.msra.mxu0 0.0
        %2834 = vmatprep.subr.mxu0 0.0
        %2835 = vmatpush2.msra.mxu0 0.0
        %2836 = vmatprep.subr.mxu0 0.0
        %2837 = vmatpush2.msra.mxu0 0.0
        %2838 = vmatprep.subr.mxu0 0.0
        %2839 = vmatpush2.msra.mxu0 0.0
        %2840 = vmatprep.subr.mxu0 0.0
        %2841 = vmatpush2.msra.mxu0 0.0
        %2842 = vmatprep.subr.mxu0 0.0
        %2843 = vmatpush2.msra.mxu0 0.0
        %2844 = vmatprep.mubr.f32.mxu0 0.0
        %2845 = vmatmul.mubr.f32.gmra.mxu0 %v2406
        %v2846 = vpop.f32.mrf.mxu0
        %v2847 = vadd.f32 %v2777, %v2846
        %v2848 = vpop.f32.mrf.mxu0
        %2849 = vdwg.mxu0
        %2850 = vst [vmem:[%s255] sm:$0xff] %v2706
        %2851 = vst [vmem:[%s255 + $0x8] sm:$0xff] %v2708
        %2852 = vst [vmem:[%s255 + $0x10] sm:$0xff] %v2847
        %s2853 = sand.u32 %s120, 1
        %s2854 = scalar_lea.sflag [#allocation5], %s2853
        %s2855 = sand.u32 %s120, 1
        %s2856 = smul.addr %s2855, 24
        %s2857 = scalar_lea.vmem [#allocation11], %s2856
        // Predicated region
        $region53: #{tpu_custom_call.1} parent=35 // pred_check
          %p2858 = pneg %p130
        $region54: #{tpu_custom_call.1} parent=35 // pred_check_branch
          %2860 = sbr.rel (%p2858) target = $region56
        $region55: #{tpu_custom_call.1} parent=35 // pred_region
          %s2862 = ssub.s32 384, 384
          %2863 = vsyncadd %s2854, %s2862
          %s2864 = smul.addr %s23, 3
          %s2865 = smul.addr %s2864, 128
          %s2866 = scalar_lea.hbm %s4, %s2865
          %s2868 = sshll.u32 %s2857, 4
          %s2869 = int_to_ptr.vmem [resolvable:$true] %s2868
          %2871 = dma.vmem_to_hbm [thread:$0]  %s2869, 384, %s2866, %s2854
        $region56: #{tpu_custom_call.1} parent=35 // pred_fallthru
          _
      $region36: #{tpu_custom_call.1} parent=5 // pred_fallthru
        _
      %p2872 = scmp.le.s32.totalorder 2, %s18
      // Predicated region
      $region57: #{tpu_custom_call.1} parent=5 // pred_check
        %p2873 = pneg %p2872
      $region58: #{tpu_custom_call.1} parent=5 // pred_check_branch
        %2875 = sbr.rel (%p2873) target = $region60
      $region59: #{tpu_custom_call.1} parent=5 // pred_region
        %s2876 = ssub.s32 %s18, 2
        // Predicated region
        $region61: #{tpu_custom_call.1} parent=59 // pred_check
          %p2877 = pneg %p136
        $region62: #{tpu_custom_call.1} parent=59 // pred_check_branch
          %2879 = sbr.rel (%p2877) target = $region64
        $region63: #{tpu_custom_call.1} parent=59 // pred_region
          %s2880 = sand.u32 %s121, 1
          %s2881 = scalar_lea.sflag [#allocation5], %s2880
          %s2882 = sand.u32 %s121, 1
          %s2883 = smul.addr %s2882, 24
          %s2884 = scalar_lea.vmem [#allocation11], %s2883
          %2885 = dma.done %s2881, 384
        $region64: #{tpu_custom_call.1} parent=59 // pred_fallthru
          _
      $region60: #{tpu_custom_call.1} parent=5 // pred_fallthru
        _
    $region6: #{tpu_custom_call.1} parent=1 // loop_footer
      %s22 = sadd.s32 1, %s18
    $region7: #{tpu_custom_call.1} parent=1 // loop_footer_branch
      %17 = sbr.rel target = $region3
    $region8: #{tpu_custom_call.1} parent=1 // loop_exit
      _
    %2886 = vsyncpa [#allocation4], 1
    %s2887 = scalar_lea.sflag [#allocation4], 1
    %2888 = vsyncpa %s2887, 1
    %2889 = vsyncpa [#allocation7], 1
    %2890 = vsyncpa [#allocation10], 1
    %2891 = vsyncpa [#allocation5], 1
    %s2892 = scalar_lea.sflag [#allocation5], 1
    %2893 = vsyncpa %s2892, 1

</llo_original>
